<compile_context>
chip_gen: v5e
topology: v5e:2x2
jax: 0.10.0
libtpu: 0.0.40
codegen_flags: <defaults>
</compile_context>

<pallas_src>
from functools import partial

import numpy as np

import jax
import jax.numpy as jnp
from jax.experimental import pallas as pl
from jax.experimental.pallas import tpu as pltpu


def afm_kernel(embL_ref, embR_ref, part1_ref, par_ref, out_ref, *, num_att):
    """One batch tile.

    embL/embR: (D, P, TB)  left/right field embeddings for each of the P pairs
    part1:     (1, TB)     precomputed linear term (+ global bias)
    par:       SMEM 1-D    [wa (D*(A+1)) | att_b (A) | proj_w (A) | proj_b]
                            where wa = [att_w | p]  (p fused as extra column)
    out:       (1, TB)     sigmoid logits, lane-dense
    """
    D, P, TB = embL_ref.shape
    A = num_att
    A1 = A + 1
    off_attb = D * A1
    off_projw = off_attb + A
    off_projb = off_projw + A

    # z[a][p, :] = sum_d wa[d, a] * embL[d, p, :] * embR[d, p, :]
    # (a < A: attention pre-activations; a == A: interaction @ p, fused)
    # D*(A+1) scalar-broadcast MACs on lane-dense (P, TB) vregs (VPU only).
    prod_d = embL_ref[0] * embR_ref[0]                       # (P, TB)
    z = [par_ref[a] * prod_d for a in range(A1)]
    for d in range(1, D):
        prod_d = embL_ref[d] * embR_ref[d]
        for a in range(A1):
            z[a] = z[a] + par_ref[d * A1 + a] * prod_d

    # Attention MLP: score_p = proj_b + sum_a proj_w[a] * relu(z_a + att_b[a])
    scores = None
    for a in range(A):
        h_a = jnp.maximum(z[a] + par_ref[off_attb + a], 0.0)
        t = par_ref[off_projw + a] * h_a
        scores = t if scores is None else scores + t
    scores = scores + par_ref[off_projb]                     # (P, TB)
    ip = z[A]                                                # inter_p @ p

    # Softmax over the P pair rows (sublane axis) fused with the weighted sum.
    m = jnp.max(scores, axis=0, keepdims=True)               # (1, TB)
    e = jnp.exp(scores - m)                                  # EUP
    denom = jnp.sum(e, axis=0, keepdims=True)                # (1, TB)
    numer = jnp.sum(e * ip, axis=0, keepdims=True)           # (1, TB)
    pooled = numer / denom                                   # one exact divide
    # TODO(synk): attention dropout is identity in eval mode; omitted.

    out_ref[...] = jax.nn.sigmoid(part1_ref[...] + pooled)   # (1, TB) lane-dense


def afm_forward(x, params, field_dims, block_batch=512):
    """Glue: embedding gathers + layout prep in JAX, hot path in Pallas."""
    field_dims = tuple(int(f) for f in field_dims)
    offsets = jnp.asarray(
        np.concatenate([[0], np.cumsum(field_dims)[:-1]]), dtype=jnp.int32)
    idx = x + offsets[None, :]                                # (B, F)

    B, F = x.shape
    assert F >= 2, "AFM needs at least two fields (softmax over pairs)."
    emb_tbl = params["embedding"].astype(jnp.float32)
    D = emb_tbl.shape[1]
    A = params["att_w"].shape[1]
    A1 = A + 1

    # TODO(synk): this XLA gather makes one HBM round trip before the kernel;
    # with tiny tables an in-kernel resident-table gather would remove it.
    emb = emb_tbl[idx]                                        # (B, F, D)

    # part1 = sum_f w_f + bias, precomputed and lane-dense (1, B).
    part1 = (jnp.sum(params["fc"].astype(jnp.float32)[idx, 0], axis=1)
             + params["bias"].astype(jnp.float32)[0, 0])      # (B,)

    # Upper-triangular pair lists (only real pairs -> no softmax mask needed).
    iidx = np.array([i for i in range(F) for j in range(i + 1, F)], np.int32)
    jidx = np.array([j for i in range(F) for j in range(i + 1, F)], np.int32)
    P = len(iidx)

    # Batch-on-lane layout: (D, P, B).
    embL = jnp.transpose(emb[:, iidx, :], (2, 1, 0))          # (D, P, B)
    embR = jnp.transpose(emb[:, jidx, :], (2, 1, 0))          # (D, P, B)

    # Batch tile: multiple of 128 so every block is lane-dense.
    TB = int(block_batch)
    assert TB % 128 == 0
    Bp = ((B + TB - 1) // TB) * TB
    if Bp != B:
        pad = Bp - B
        embL = jnp.pad(embL, ((0, 0), (0, 0), (0, pad)))
        embR = jnp.pad(embR, ((0, 0), (0, 0), (0, pad)))
        part1 = jnp.pad(part1, ((0, pad),))
    part1 = part1.reshape(1, Bp)

    # Pack all tiny resident operands into one SMEM vector:
    #   [ wa = [att_w | p] flattened row-major (D*(A+1)) | att_b | proj_w | proj_b ]
    wa = jnp.concatenate(
        [params["att_w"], params["p"]], axis=1).astype(jnp.float32)   # (D, A+1)
    par = jnp.concatenate([
        wa.reshape(-1),
        params["att_b"].reshape(-1).astype(jnp.float32),
        params["proj_w"].reshape(-1).astype(jnp.float32),
        params["proj_b"].reshape(-1).astype(jnp.float32),
    ])                                                                # (D*A1+2A+1,)

    out = pl.pallas_call(
        partial(afm_kernel, num_att=A),
        out_shape=jax.ShapeDtypeStruct((1, Bp), jnp.float32),
        grid=(Bp // TB,),
        in_specs=[
            pl.BlockSpec((D, P, TB), lambda i: (0, 0, i)),    # left pair embeddings
            pl.BlockSpec((D, P, TB), lambda i: (0, 0, i)),    # right pair embeddings
            pl.BlockSpec((1, TB), lambda i: (0, i)),          # precomputed part1
            pl.BlockSpec(memory_space=pltpu.MemorySpace.SMEM),  # packed constants
        ],
        out_specs=pl.BlockSpec((1, TB), lambda i: (0, i)),    # lane-dense output
        compiler_params=pltpu.CompilerParams(
            dimension_semantics=("parallel",),
            vmem_limit_bytes=32 * 1024 * 1024),
    )(embL, embR, part1, par)
    return out[0, :B]


def afm_reference(x, params, field_dims):
    """Pure-JAX reference mirroring the PyTorch forward."""
    field_dims = tuple(int(f) for f in field_dims)
    offsets = jnp.asarray(
        np.concatenate([[0], np.cumsum(field_dims)[:-1]]), dtype=jnp.int32)
    idx = x + offsets[None, :]
    emb = params["embedding"][idx]                                # (B, F, D)
    part1 = (jnp.sum(params["fc"][idx, 0], axis=1, keepdims=True)
             + params["bias"][0, 0])

    F = x.shape[1]
    pairs = [emb[:, i, :] * emb[:, j, :]
             for i in range(F) for j in range(i + 1, F)]
    inter = jnp.stack(pairs, axis=1)                              # (B, P, D)

    hidden = jax.nn.relu(inter @ params["att_w"] + params["att_b"][0])
    scores = hidden @ params["proj_w"] + params["proj_b"][0]      # (B, P, 1)
    a = jax.nn.softmax(scores, axis=1)
    inter_sum = jnp.sum(a * inter, axis=1)                        # (B, D)
    y = part1 + inter_sum @ params["p"]
    return jax.nn.sigmoid(y)[:, 0]


def init_params(key, field_dims, embed_dim, attention_size):
    total = int(sum(field_dims))
    k = jax.random.split(key, 6)
    return {
        "embedding": jax.random.normal(k[0], (total, embed_dim), jnp.float32) * 0.1,
        "fc":        jax.random.normal(k[1], (total, 1), jnp.float32) * 0.1,
        "bias":      jnp.zeros((1, 1), jnp.float32),
        "att_w":     jax.random.normal(k[2], (embed_dim, attention_size), jnp.float32) * 0.2,
        "att_b":     jax.random.normal(k[3], (1, attention_size), jnp.float32) * 0.1,
        "proj_w":    jax.random.normal(k[4], (attention_size, 1), jnp.float32) * 0.2,
        "proj_b":    jnp.zeros((1, 1), jnp.float32),
        "p":         jax.random.normal(k[5], (embed_dim, 1), jnp.float32) * 0.2,
    }


if __name__ == "__main__":
    field_dims = (7, 11, 13, 17)    # 4 fields -> 6 pairwise interactions
    embed_dim = 16                  # output_dim in the PyTorch module
    attention_size = 8
    batch = 1000                    # pads to 1024 -> 2 grid tiles of 512

    key = jax.random.PRNGKey(0)
    pkey, xkey = jax.random.split(key)
    params = init_params(pkey, field_dims, embed_dim, attention_size)

    # one categorical index per field, within each field's cardinality
    cols = []
    xkeys = jax.random.split(xkey, len(field_dims))
    for kk, fd in zip(xkeys, field_dims):
        cols.append(jax.random.randint(kk, (batch,), 0, fd, dtype=jnp.int32))
    x = jnp.stack(cols, axis=1)     # (B, F) int32

    out = jax.block_until_ready(afm_forward(x, params, field_dims))
    ref = jax.block_until_ready(afm_reference(x, params, field_dims))

    assert out.shape == (batch,)
    assert jnp.allclose(out, ref, atol=1e-5, rtol=1e-5), (
        float(jnp.max(jnp.abs(out - ref))))
    print("KERNEL_OK")
</pallas_src>

<mosaic_0001>
module attributes {stable_mosaic.version = 11 : i64} {
  func.func @afm_kernel(%arg0: i32, %arg1: memref<16x6x512xf32, #tpu.memory_space<vmem>>, %arg2: memref<16x6x512xf32, #tpu.memory_space<vmem>>, %arg3: memref<1x512xf32, #tpu.memory_space<vmem>>, %arg4: memref<161xf32, #tpu.memory_space<smem>>, %arg5: memref<1x512xf32, #tpu.memory_space<vmem>>) attributes {dimension_semantics = [#tpu.dimension_semantics<parallel>], iteration_bounds = array<i64: 2>, scalar_prefetch = 0 : i64, scratch_operands = 0 : i64, tpu.core_type = #tpu.core_type<tc>, window_params = [{transform_indices = @transform_0, window_bounds = array<i64: 16, 6, 512>}, {transform_indices = @transform_1, window_bounds = array<i64: 16, 6, 512>}, {transform_indices = @transform_2, window_bounds = array<i64: 1, 512>}, {transform_indices = @transform_3, window_bounds = array<i64: 161>}, {transform_indices = @transform_4, window_bounds = array<i64: 1, 512>}]} {
    %c0 = arith.constant 0 : index
    %c0_0 = arith.constant 0 : index
    %c0_1 = arith.constant 0 : index
    %0 = vector.load %arg1[%c0, %c0_0, %c0_1] : memref<16x6x512xf32, #tpu.memory_space<vmem>>, vector<1x6x512xf32>
    %1 = vector.shape_cast %0 : vector<1x6x512xf32> to vector<6x512xf32>
    %c0_2 = arith.constant 0 : index
    %c0_3 = arith.constant 0 : index
    %c0_4 = arith.constant 0 : index
    %2 = vector.load %arg2[%c0_2, %c0_3, %c0_4] : memref<16x6x512xf32, #tpu.memory_space<vmem>>, vector<1x6x512xf32>
    %3 = vector.shape_cast %2 : vector<1x6x512xf32> to vector<6x512xf32>
    %4 = arith.mulf %1, %3 : vector<6x512xf32>
    %c0_5 = arith.constant 0 : index
    %5 = memref.load %arg4[%c0_5] : memref<161xf32, #tpu.memory_space<smem>>
    %6 = vector.broadcast %5 : f32 to vector<6x512xf32>
    %7 = arith.mulf %6, %4 : vector<6x512xf32>
    %c1 = arith.constant 1 : index
    %8 = memref.load %arg4[%c1] : memref<161xf32, #tpu.memory_space<smem>>
    %9 = vector.broadcast %8 : f32 to vector<6x512xf32>
    %10 = arith.mulf %9, %4 : vector<6x512xf32>
    %c2 = arith.constant 2 : index
    %11 = memref.load %arg4[%c2] : memref<161xf32, #tpu.memory_space<smem>>
    %12 = vector.broadcast %11 : f32 to vector<6x512xf32>
    %13 = arith.mulf %12, %4 : vector<6x512xf32>
    %c3 = arith.constant 3 : index
    %14 = memref.load %arg4[%c3] : memref<161xf32, #tpu.memory_space<smem>>
    %15 = vector.broadcast %14 : f32 to vector<6x512xf32>
    %16 = arith.mulf %15, %4 : vector<6x512xf32>
    %c4 = arith.constant 4 : index
    %17 = memref.load %arg4[%c4] : memref<161xf32, #tpu.memory_space<smem>>
    %18 = vector.broadcast %17 : f32 to vector<6x512xf32>
    %19 = arith.mulf %18, %4 : vector<6x512xf32>
    %c5 = arith.constant 5 : index
    %20 = memref.load %arg4[%c5] : memref<161xf32, #tpu.memory_space<smem>>
    %21 = vector.broadcast %20 : f32 to vector<6x512xf32>
    %22 = arith.mulf %21, %4 : vector<6x512xf32>
    %c6 = arith.constant 6 : index
    %23 = memref.load %arg4[%c6] : memref<161xf32, #tpu.memory_space<smem>>
    %24 = vector.broadcast %23 : f32 to vector<6x512xf32>
    %25 = arith.mulf %24, %4 : vector<6x512xf32>
    %c7 = arith.constant 7 : index
    %26 = memref.load %arg4[%c7] : memref<161xf32, #tpu.memory_space<smem>>
    %27 = vector.broadcast %26 : f32 to vector<6x512xf32>
    %28 = arith.mulf %27, %4 : vector<6x512xf32>
    %c8 = arith.constant 8 : index
    %29 = memref.load %arg4[%c8] : memref<161xf32, #tpu.memory_space<smem>>
    %30 = vector.broadcast %29 : f32 to vector<6x512xf32>
    %31 = arith.mulf %30, %4 : vector<6x512xf32>
    %c1_6 = arith.constant 1 : index
    %c0_7 = arith.constant 0 : index
    %c0_8 = arith.constant 0 : index
    %32 = vector.load %arg1[%c1_6, %c0_7, %c0_8] : memref<16x6x512xf32, #tpu.memory_space<vmem>>, vector<1x6x512xf32>
    %33 = vector.shape_cast %32 : vector<1x6x512xf32> to vector<6x512xf32>
    %c1_9 = arith.constant 1 : index
    %c0_10 = arith.constant 0 : index
    %c0_11 = arith.constant 0 : index
    %34 = vector.load %arg2[%c1_9, %c0_10, %c0_11] : memref<16x6x512xf32, #tpu.memory_space<vmem>>, vector<1x6x512xf32>
    %35 = vector.shape_cast %34 : vector<1x6x512xf32> to vector<6x512xf32>
    %36 = arith.mulf %33, %35 : vector<6x512xf32>
    %c9 = arith.constant 9 : index
    %37 = memref.load %arg4[%c9] : memref<161xf32, #tpu.memory_space<smem>>
    %38 = vector.broadcast %37 : f32 to vector<6x512xf32>
    %39 = arith.mulf %38, %36 : vector<6x512xf32>
    %40 = arith.addf %7, %39 : vector<6x512xf32>
    %c10 = arith.constant 10 : index
    %41 = memref.load %arg4[%c10] : memref<161xf32, #tpu.memory_space<smem>>
    %42 = vector.broadcast %41 : f32 to vector<6x512xf32>
    %43 = arith.mulf %42, %36 : vector<6x512xf32>
    %44 = arith.addf %10, %43 : vector<6x512xf32>
    %c11 = arith.constant 11 : index
    %45 = memref.load %arg4[%c11] : memref<161xf32, #tpu.memory_space<smem>>
    %46 = vector.broadcast %45 : f32 to vector<6x512xf32>
    %47 = arith.mulf %46, %36 : vector<6x512xf32>
    %48 = arith.addf %13, %47 : vector<6x512xf32>
    %c12 = arith.constant 12 : index
    %49 = memref.load %arg4[%c12] : memref<161xf32, #tpu.memory_space<smem>>
    %50 = vector.broadcast %49 : f32 to vector<6x512xf32>
    %51 = arith.mulf %50, %36 : vector<6x512xf32>
    %52 = arith.addf %16, %51 : vector<6x512xf32>
    %c13 = arith.constant 13 : index
    %53 = memref.load %arg4[%c13] : memref<161xf32, #tpu.memory_space<smem>>
    %54 = vector.broadcast %53 : f32 to vector<6x512xf32>
    %55 = arith.mulf %54, %36 : vector<6x512xf32>
    %56 = arith.addf %19, %55 : vector<6x512xf32>
    %c14 = arith.constant 14 : index
    %57 = memref.load %arg4[%c14] : memref<161xf32, #tpu.memory_space<smem>>
    %58 = vector.broadcast %57 : f32 to vector<6x512xf32>
    %59 = arith.mulf %58, %36 : vector<6x512xf32>
    %60 = arith.addf %22, %59 : vector<6x512xf32>
    %c15 = arith.constant 15 : index
    %61 = memref.load %arg4[%c15] : memref<161xf32, #tpu.memory_space<smem>>
    %62 = vector.broadcast %61 : f32 to vector<6x512xf32>
    %63 = arith.mulf %62, %36 : vector<6x512xf32>
    %64 = arith.addf %25, %63 : vector<6x512xf32>
    %c16 = arith.constant 16 : index
    %65 = memref.load %arg4[%c16] : memref<161xf32, #tpu.memory_space<smem>>
    %66 = vector.broadcast %65 : f32 to vector<6x512xf32>
    %67 = arith.mulf %66, %36 : vector<6x512xf32>
    %68 = arith.addf %28, %67 : vector<6x512xf32>
    %c17 = arith.constant 17 : index
    %69 = memref.load %arg4[%c17] : memref<161xf32, #tpu.memory_space<smem>>
    %70 = vector.broadcast %69 : f32 to vector<6x512xf32>
    %71 = arith.mulf %70, %36 : vector<6x512xf32>
    %72 = arith.addf %31, %71 : vector<6x512xf32>
    %c2_12 = arith.constant 2 : index
    %c0_13 = arith.constant 0 : index
    %c0_14 = arith.constant 0 : index
    %73 = vector.load %arg1[%c2_12, %c0_13, %c0_14] : memref<16x6x512xf32, #tpu.memory_space<vmem>>, vector<1x6x512xf32>
    %74 = vector.shape_cast %73 : vector<1x6x512xf32> to vector<6x512xf32>
    %c2_15 = arith.constant 2 : index
    %c0_16 = arith.constant 0 : index
    %c0_17 = arith.constant 0 : index
    %75 = vector.load %arg2[%c2_15, %c0_16, %c0_17] : memref<16x6x512xf32, #tpu.memory_space<vmem>>, vector<1x6x512xf32>
    %76 = vector.shape_cast %75 : vector<1x6x512xf32> to vector<6x512xf32>
    %77 = arith.mulf %74, %76 : vector<6x512xf32>
    %c18 = arith.constant 18 : index
    %78 = memref.load %arg4[%c18] : memref<161xf32, #tpu.memory_space<smem>>
    %79 = vector.broadcast %78 : f32 to vector<6x512xf32>
    %80 = arith.mulf %79, %77 : vector<6x512xf32>
    %81 = arith.addf %40, %80 : vector<6x512xf32>
    %c19 = arith.constant 19 : index
    %82 = memref.load %arg4[%c19] : memref<161xf32, #tpu.memory_space<smem>>
    %83 = vector.broadcast %82 : f32 to vector<6x512xf32>
    %84 = arith.mulf %83, %77 : vector<6x512xf32>
    %85 = arith.addf %44, %84 : vector<6x512xf32>
    %c20 = arith.constant 20 : index
    %86 = memref.load %arg4[%c20] : memref<161xf32, #tpu.memory_space<smem>>
    %87 = vector.broadcast %86 : f32 to vector<6x512xf32>
    %88 = arith.mulf %87, %77 : vector<6x512xf32>
    %89 = arith.addf %48, %88 : vector<6x512xf32>
    %c21 = arith.constant 21 : index
    %90 = memref.load %arg4[%c21] : memref<161xf32, #tpu.memory_space<smem>>
    %91 = vector.broadcast %90 : f32 to vector<6x512xf32>
    %92 = arith.mulf %91, %77 : vector<6x512xf32>
    %93 = arith.addf %52, %92 : vector<6x512xf32>
    %c22 = arith.constant 22 : index
    %94 = memref.load %arg4[%c22] : memref<161xf32, #tpu.memory_space<smem>>
    %95 = vector.broadcast %94 : f32 to vector<6x512xf32>
    %96 = arith.mulf %95, %77 : vector<6x512xf32>
    %97 = arith.addf %56, %96 : vector<6x512xf32>
    %c23 = arith.constant 23 : index
    %98 = memref.load %arg4[%c23] : memref<161xf32, #tpu.memory_space<smem>>
    %99 = vector.broadcast %98 : f32 to vector<6x512xf32>
    %100 = arith.mulf %99, %77 : vector<6x512xf32>
    %101 = arith.addf %60, %100 : vector<6x512xf32>
    %c24 = arith.constant 24 : index
    %102 = memref.load %arg4[%c24] : memref<161xf32, #tpu.memory_space<smem>>
    %103 = vector.broadcast %102 : f32 to vector<6x512xf32>
    %104 = arith.mulf %103, %77 : vector<6x512xf32>
    %105 = arith.addf %64, %104 : vector<6x512xf32>
    %c25 = arith.constant 25 : index
    %106 = memref.load %arg4[%c25] : memref<161xf32, #tpu.memory_space<smem>>
    %107 = vector.broadcast %106 : f32 to vector<6x512xf32>
    %108 = arith.mulf %107, %77 : vector<6x512xf32>
    %109 = arith.addf %68, %108 : vector<6x512xf32>
    %c26 = arith.constant 26 : index
    %110 = memref.load %arg4[%c26] : memref<161xf32, #tpu.memory_space<smem>>
    %111 = vector.broadcast %110 : f32 to vector<6x512xf32>
    %112 = arith.mulf %111, %77 : vector<6x512xf32>
    %113 = arith.addf %72, %112 : vector<6x512xf32>
    %c3_18 = arith.constant 3 : index
    %c0_19 = arith.constant 0 : index
    %c0_20 = arith.constant 0 : index
    %114 = vector.load %arg1[%c3_18, %c0_19, %c0_20] : memref<16x6x512xf32, #tpu.memory_space<vmem>>, vector<1x6x512xf32>
    %115 = vector.shape_cast %114 : vector<1x6x512xf32> to vector<6x512xf32>
    %c3_21 = arith.constant 3 : index
    %c0_22 = arith.constant 0 : index
    %c0_23 = arith.constant 0 : index
    %116 = vector.load %arg2[%c3_21, %c0_22, %c0_23] : memref<16x6x512xf32, #tpu.memory_space<vmem>>, vector<1x6x512xf32>
    %117 = vector.shape_cast %116 : vector<1x6x512xf32> to vector<6x512xf32>
    %118 = arith.mulf %115, %117 : vector<6x512xf32>
    %c27 = arith.constant 27 : index
    %119 = memref.load %arg4[%c27] : memref<161xf32, #tpu.memory_space<smem>>
    %120 = vector.broadcast %119 : f32 to vector<6x512xf32>
    %121 = arith.mulf %120, %118 : vector<6x512xf32>
    %122 = arith.addf %81, %121 : vector<6x512xf32>
    %c28 = arith.constant 28 : index
    %123 = memref.load %arg4[%c28] : memref<161xf32, #tpu.memory_space<smem>>
    %124 = vector.broadcast %123 : f32 to vector<6x512xf32>
    %125 = arith.mulf %124, %118 : vector<6x512xf32>
    %126 = arith.addf %85, %125 : vector<6x512xf32>
    %c29 = arith.constant 29 : index
    %127 = memref.load %arg4[%c29] : memref<161xf32, #tpu.memory_space<smem>>
    %128 = vector.broadcast %127 : f32 to vector<6x512xf32>
    %129 = arith.mulf %128, %118 : vector<6x512xf32>
    %130 = arith.addf %89, %129 : vector<6x512xf32>
    %c30 = arith.constant 30 : index
    %131 = memref.load %arg4[%c30] : memref<161xf32, #tpu.memory_space<smem>>
    %132 = vector.broadcast %131 : f32 to vector<6x512xf32>
    %133 = arith.mulf %132, %118 : vector<6x512xf32>
    %134 = arith.addf %93, %133 : vector<6x512xf32>
    %c31 = arith.constant 31 : index
    %135 = memref.load %arg4[%c31] : memref<161xf32, #tpu.memory_space<smem>>
    %136 = vector.broadcast %135 : f32 to vector<6x512xf32>
    %137 = arith.mulf %136, %118 : vector<6x512xf32>
    %138 = arith.addf %97, %137 : vector<6x512xf32>
    %c32 = arith.constant 32 : index
    %139 = memref.load %arg4[%c32] : memref<161xf32, #tpu.memory_space<smem>>
    %140 = vector.broadcast %139 : f32 to vector<6x512xf32>
    %141 = arith.mulf %140, %118 : vector<6x512xf32>
    %142 = arith.addf %101, %141 : vector<6x512xf32>
    %c33 = arith.constant 33 : index
    %143 = memref.load %arg4[%c33] : memref<161xf32, #tpu.memory_space<smem>>
    %144 = vector.broadcast %143 : f32 to vector<6x512xf32>
    %145 = arith.mulf %144, %118 : vector<6x512xf32>
    %146 = arith.addf %105, %145 : vector<6x512xf32>
    %c34 = arith.constant 34 : index
    %147 = memref.load %arg4[%c34] : memref<161xf32, #tpu.memory_space<smem>>
    %148 = vector.broadcast %147 : f32 to vector<6x512xf32>
    %149 = arith.mulf %148, %118 : vector<6x512xf32>
    %150 = arith.addf %109, %149 : vector<6x512xf32>
    %c35 = arith.constant 35 : index
    %151 = memref.load %arg4[%c35] : memref<161xf32, #tpu.memory_space<smem>>
    %152 = vector.broadcast %151 : f32 to vector<6x512xf32>
    %153 = arith.mulf %152, %118 : vector<6x512xf32>
    %154 = arith.addf %113, %153 : vector<6x512xf32>
    %c4_24 = arith.constant 4 : index
    %c0_25 = arith.constant 0 : index
    %c0_26 = arith.constant 0 : index
    %155 = vector.load %arg1[%c4_24, %c0_25, %c0_26] : memref<16x6x512xf32, #tpu.memory_space<vmem>>, vector<1x6x512xf32>
    %156 = vector.shape_cast %155 : vector<1x6x512xf32> to vector<6x512xf32>
    %c4_27 = arith.constant 4 : index
    %c0_28 = arith.constant 0 : index
    %c0_29 = arith.constant 0 : index
    %157 = vector.load %arg2[%c4_27, %c0_28, %c0_29] : memref<16x6x512xf32, #tpu.memory_space<vmem>>, vector<1x6x512xf32>
    %158 = vector.shape_cast %157 : vector<1x6x512xf32> to vector<6x512xf32>
    %159 = arith.mulf %156, %158 : vector<6x512xf32>
    %c36 = arith.constant 36 : index
    %160 = memref.load %arg4[%c36] : memref<161xf32, #tpu.memory_space<smem>>
    %161 = vector.broadcast %160 : f32 to vector<6x512xf32>
    %162 = arith.mulf %161, %159 : vector<6x512xf32>
    %163 = arith.addf %122, %162 : vector<6x512xf32>
    %c37 = arith.constant 37 : index
    %164 = memref.load %arg4[%c37] : memref<161xf32, #tpu.memory_space<smem>>
    %165 = vector.broadcast %164 : f32 to vector<6x512xf32>
    %166 = arith.mulf %165, %159 : vector<6x512xf32>
    %167 = arith.addf %126, %166 : vector<6x512xf32>
    %c38 = arith.constant 38 : index
    %168 = memref.load %arg4[%c38] : memref<161xf32, #tpu.memory_space<smem>>
    %169 = vector.broadcast %168 : f32 to vector<6x512xf32>
    %170 = arith.mulf %169, %159 : vector<6x512xf32>
    %171 = arith.addf %130, %170 : vector<6x512xf32>
    %c39 = arith.constant 39 : index
    %172 = memref.load %arg4[%c39] : memref<161xf32, #tpu.memory_space<smem>>
    %173 = vector.broadcast %172 : f32 to vector<6x512xf32>
    %174 = arith.mulf %173, %159 : vector<6x512xf32>
    %175 = arith.addf %134, %174 : vector<6x512xf32>
    %c40 = arith.constant 40 : index
    %176 = memref.load %arg4[%c40] : memref<161xf32, #tpu.memory_space<smem>>
    %177 = vector.broadcast %176 : f32 to vector<6x512xf32>
    %178 = arith.mulf %177, %159 : vector<6x512xf32>
    %179 = arith.addf %138, %178 : vector<6x512xf32>
    %c41 = arith.constant 41 : index
    %180 = memref.load %arg4[%c41] : memref<161xf32, #tpu.memory_space<smem>>
    %181 = vector.broadcast %180 : f32 to vector<6x512xf32>
    %182 = arith.mulf %181, %159 : vector<6x512xf32>
    %183 = arith.addf %142, %182 : vector<6x512xf32>
    %c42 = arith.constant 42 : index
    %184 = memref.load %arg4[%c42] : memref<161xf32, #tpu.memory_space<smem>>
    %185 = vector.broadcast %184 : f32 to vector<6x512xf32>
    %186 = arith.mulf %185, %159 : vector<6x512xf32>
    %187 = arith.addf %146, %186 : vector<6x512xf32>
    %c43 = arith.constant 43 : index
    %188 = memref.load %arg4[%c43] : memref<161xf32, #tpu.memory_space<smem>>
    %189 = vector.broadcast %188 : f32 to vector<6x512xf32>
    %190 = arith.mulf %189, %159 : vector<6x512xf32>
    %191 = arith.addf %150, %190 : vector<6x512xf32>
    %c44 = arith.constant 44 : index
    %192 = memref.load %arg4[%c44] : memref<161xf32, #tpu.memory_space<smem>>
    %193 = vector.broadcast %192 : f32 to vector<6x512xf32>
    %194 = arith.mulf %193, %159 : vector<6x512xf32>
    %195 = arith.addf %154, %194 : vector<6x512xf32>
    %c5_30 = arith.constant 5 : index
    %c0_31 = arith.constant 0 : index
    %c0_32 = arith.constant 0 : index
    %196 = vector.load %arg1[%c5_30, %c0_31, %c0_32] : memref<16x6x512xf32, #tpu.memory_space<vmem>>, vector<1x6x512xf32>
    %197 = vector.shape_cast %196 : vector<1x6x512xf32> to vector<6x512xf32>
    %c5_33 = arith.constant 5 : index
    %c0_34 = arith.constant 0 : index
    %c0_35 = arith.constant 0 : index
    %198 = vector.load %arg2[%c5_33, %c0_34, %c0_35] : memref<16x6x512xf32, #tpu.memory_space<vmem>>, vector<1x6x512xf32>
    %199 = vector.shape_cast %198 : vector<1x6x512xf32> to vector<6x512xf32>
    %200 = arith.mulf %197, %199 : vector<6x512xf32>
    %c45 = arith.constant 45 : index
    %201 = memref.load %arg4[%c45] : memref<161xf32, #tpu.memory_space<smem>>
    %202 = vector.broadcast %201 : f32 to vector<6x512xf32>
    %203 = arith.mulf %202, %200 : vector<6x512xf32>
    %204 = arith.addf %163, %203 : vector<6x512xf32>
    %c46 = arith.constant 46 : index
    %205 = memref.load %arg4[%c46] : memref<161xf32, #tpu.memory_space<smem>>
    %206 = vector.broadcast %205 : f32 to vector<6x512xf32>
    %207 = arith.mulf %206, %200 : vector<6x512xf32>
    %208 = arith.addf %167, %207 : vector<6x512xf32>
    %c47 = arith.constant 47 : index
    %209 = memref.load %arg4[%c47] : memref<161xf32, #tpu.memory_space<smem>>
    %210 = vector.broadcast %209 : f32 to vector<6x512xf32>
    %211 = arith.mulf %210, %200 : vector<6x512xf32>
    %212 = arith.addf %171, %211 : vector<6x512xf32>
    %c48 = arith.constant 48 : index
    %213 = memref.load %arg4[%c48] : memref<161xf32, #tpu.memory_space<smem>>
    %214 = vector.broadcast %213 : f32 to vector<6x512xf32>
    %215 = arith.mulf %214, %200 : vector<6x512xf32>
    %216 = arith.addf %175, %215 : vector<6x512xf32>
    %c49 = arith.constant 49 : index
    %217 = memref.load %arg4[%c49] : memref<161xf32, #tpu.memory_space<smem>>
    %218 = vector.broadcast %217 : f32 to vector<6x512xf32>
    %219 = arith.mulf %218, %200 : vector<6x512xf32>
    %220 = arith.addf %179, %219 : vector<6x512xf32>
    %c50 = arith.constant 50 : index
    %221 = memref.load %arg4[%c50] : memref<161xf32, #tpu.memory_space<smem>>
    %222 = vector.broadcast %221 : f32 to vector<6x512xf32>
    %223 = arith.mulf %222, %200 : vector<6x512xf32>
    %224 = arith.addf %183, %223 : vector<6x512xf32>
    %c51 = arith.constant 51 : index
    %225 = memref.load %arg4[%c51] : memref<161xf32, #tpu.memory_space<smem>>
    %226 = vector.broadcast %225 : f32 to vector<6x512xf32>
    %227 = arith.mulf %226, %200 : vector<6x512xf32>
    %228 = arith.addf %187, %227 : vector<6x512xf32>
    %c52 = arith.constant 52 : index
    %229 = memref.load %arg4[%c52] : memref<161xf32, #tpu.memory_space<smem>>
    %230 = vector.broadcast %229 : f32 to vector<6x512xf32>
    %231 = arith.mulf %230, %200 : vector<6x512xf32>
    %232 = arith.addf %191, %231 : vector<6x512xf32>
    %c53 = arith.constant 53 : index
    %233 = memref.load %arg4[%c53] : memref<161xf32, #tpu.memory_space<smem>>
    %234 = vector.broadcast %233 : f32 to vector<6x512xf32>
    %235 = arith.mulf %234, %200 : vector<6x512xf32>
    %236 = arith.addf %195, %235 : vector<6x512xf32>
    %c6_36 = arith.constant 6 : index
    %c0_37 = arith.constant 0 : index
    %c0_38 = arith.constant 0 : index
    %237 = vector.load %arg1[%c6_36, %c0_37, %c0_38] : memref<16x6x512xf32, #tpu.memory_space<vmem>>, vector<1x6x512xf32>
    %238 = vector.shape_cast %237 : vector<1x6x512xf32> to vector<6x512xf32>
    %c6_39 = arith.constant 6 : index
    %c0_40 = arith.constant 0 : index
    %c0_41 = arith.constant 0 : index
    %239 = vector.load %arg2[%c6_39, %c0_40, %c0_41] : memref<16x6x512xf32, #tpu.memory_space<vmem>>, vector<1x6x512xf32>
    %240 = vector.shape_cast %239 : vector<1x6x512xf32> to vector<6x512xf32>
    %241 = arith.mulf %238, %240 : vector<6x512xf32>
    %c54 = arith.constant 54 : index
    %242 = memref.load %arg4[%c54] : memref<161xf32, #tpu.memory_space<smem>>
    %243 = vector.broadcast %242 : f32 to vector<6x512xf32>
    %244 = arith.mulf %243, %241 : vector<6x512xf32>
    %245 = arith.addf %204, %244 : vector<6x512xf32>
    %c55 = arith.constant 55 : index
    %246 = memref.load %arg4[%c55] : memref<161xf32, #tpu.memory_space<smem>>
    %247 = vector.broadcast %246 : f32 to vector<6x512xf32>
    %248 = arith.mulf %247, %241 : vector<6x512xf32>
    %249 = arith.addf %208, %248 : vector<6x512xf32>
    %c56 = arith.constant 56 : index
    %250 = memref.load %arg4[%c56] : memref<161xf32, #tpu.memory_space<smem>>
    %251 = vector.broadcast %250 : f32 to vector<6x512xf32>
    %252 = arith.mulf %251, %241 : vector<6x512xf32>
    %253 = arith.addf %212, %252 : vector<6x512xf32>
    %c57 = arith.constant 57 : index
    %254 = memref.load %arg4[%c57] : memref<161xf32, #tpu.memory_space<smem>>
    %255 = vector.broadcast %254 : f32 to vector<6x512xf32>
    %256 = arith.mulf %255, %241 : vector<6x512xf32>
    %257 = arith.addf %216, %256 : vector<6x512xf32>
    %c58 = arith.constant 58 : index
    %258 = memref.load %arg4[%c58] : memref<161xf32, #tpu.memory_space<smem>>
    %259 = vector.broadcast %258 : f32 to vector<6x512xf32>
    %260 = arith.mulf %259, %241 : vector<6x512xf32>
    %261 = arith.addf %220, %260 : vector<6x512xf32>
    %c59 = arith.constant 59 : index
    %262 = memref.load %arg4[%c59] : memref<161xf32, #tpu.memory_space<smem>>
    %263 = vector.broadcast %262 : f32 to vector<6x512xf32>
    %264 = arith.mulf %263, %241 : vector<6x512xf32>
    %265 = arith.addf %224, %264 : vector<6x512xf32>
    %c60 = arith.constant 60 : index
    %266 = memref.load %arg4[%c60] : memref<161xf32, #tpu.memory_space<smem>>
    %267 = vector.broadcast %266 : f32 to vector<6x512xf32>
    %268 = arith.mulf %267, %241 : vector<6x512xf32>
    %269 = arith.addf %228, %268 : vector<6x512xf32>
    %c61 = arith.constant 61 : index
    %270 = memref.load %arg4[%c61] : memref<161xf32, #tpu.memory_space<smem>>
    %271 = vector.broadcast %270 : f32 to vector<6x512xf32>
    %272 = arith.mulf %271, %241 : vector<6x512xf32>
    %273 = arith.addf %232, %272 : vector<6x512xf32>
    %c62 = arith.constant 62 : index
    %274 = memref.load %arg4[%c62] : memref<161xf32, #tpu.memory_space<smem>>
    %275 = vector.broadcast %274 : f32 to vector<6x512xf32>
    %276 = arith.mulf %275, %241 : vector<6x512xf32>
    %277 = arith.addf %236, %276 : vector<6x512xf32>
    %c7_42 = arith.constant 7 : index
    %c0_43 = arith.constant 0 : index
    %c0_44 = arith.constant 0 : index
    %278 = vector.load %arg1[%c7_42, %c0_43, %c0_44] : memref<16x6x512xf32, #tpu.memory_space<vmem>>, vector<1x6x512xf32>
    %279 = vector.shape_cast %278 : vector<1x6x512xf32> to vector<6x512xf32>
    %c7_45 = arith.constant 7 : index
    %c0_46 = arith.constant 0 : index
    %c0_47 = arith.constant 0 : index
    %280 = vector.load %arg2[%c7_45, %c0_46, %c0_47] : memref<16x6x512xf32, #tpu.memory_space<vmem>>, vector<1x6x512xf32>
    %281 = vector.shape_cast %280 : vector<1x6x512xf32> to vector<6x512xf32>
    %282 = arith.mulf %279, %281 : vector<6x512xf32>
    %c63 = arith.constant 63 : index
    %283 = memref.load %arg4[%c63] : memref<161xf32, #tpu.memory_space<smem>>
    %284 = vector.broadcast %283 : f32 to vector<6x512xf32>
    %285 = arith.mulf %284, %282 : vector<6x512xf32>
    %286 = arith.addf %245, %285 : vector<6x512xf32>
    %c64 = arith.constant 64 : index
    %287 = memref.load %arg4[%c64] : memref<161xf32, #tpu.memory_space<smem>>
    %288 = vector.broadcast %287 : f32 to vector<6x512xf32>
    %289 = arith.mulf %288, %282 : vector<6x512xf32>
    %290 = arith.addf %249, %289 : vector<6x512xf32>
    %c65 = arith.constant 65 : index
    %291 = memref.load %arg4[%c65] : memref<161xf32, #tpu.memory_space<smem>>
    %292 = vector.broadcast %291 : f32 to vector<6x512xf32>
    %293 = arith.mulf %292, %282 : vector<6x512xf32>
    %294 = arith.addf %253, %293 : vector<6x512xf32>
    %c66 = arith.constant 66 : index
    %295 = memref.load %arg4[%c66] : memref<161xf32, #tpu.memory_space<smem>>
    %296 = vector.broadcast %295 : f32 to vector<6x512xf32>
    %297 = arith.mulf %296, %282 : vector<6x512xf32>
    %298 = arith.addf %257, %297 : vector<6x512xf32>
    %c67 = arith.constant 67 : index
    %299 = memref.load %arg4[%c67] : memref<161xf32, #tpu.memory_space<smem>>
    %300 = vector.broadcast %299 : f32 to vector<6x512xf32>
    %301 = arith.mulf %300, %282 : vector<6x512xf32>
    %302 = arith.addf %261, %301 : vector<6x512xf32>
    %c68 = arith.constant 68 : index
    %303 = memref.load %arg4[%c68] : memref<161xf32, #tpu.memory_space<smem>>
    %304 = vector.broadcast %303 : f32 to vector<6x512xf32>
    %305 = arith.mulf %304, %282 : vector<6x512xf32>
    %306 = arith.addf %265, %305 : vector<6x512xf32>
    %c69 = arith.constant 69 : index
    %307 = memref.load %arg4[%c69] : memref<161xf32, #tpu.memory_space<smem>>
    %308 = vector.broadcast %307 : f32 to vector<6x512xf32>
    %309 = arith.mulf %308, %282 : vector<6x512xf32>
    %310 = arith.addf %269, %309 : vector<6x512xf32>
    %c70 = arith.constant 70 : index
    %311 = memref.load %arg4[%c70] : memref<161xf32, #tpu.memory_space<smem>>
    %312 = vector.broadcast %311 : f32 to vector<6x512xf32>
    %313 = arith.mulf %312, %282 : vector<6x512xf32>
    %314 = arith.addf %273, %313 : vector<6x512xf32>
    %c71 = arith.constant 71 : index
    %315 = memref.load %arg4[%c71] : memref<161xf32, #tpu.memory_space<smem>>
    %316 = vector.broadcast %315 : f32 to vector<6x512xf32>
    %317 = arith.mulf %316, %282 : vector<6x512xf32>
    %318 = arith.addf %277, %317 : vector<6x512xf32>
    %c8_48 = arith.constant 8 : index
    %c0_49 = arith.constant 0 : index
    %c0_50 = arith.constant 0 : index
    %319 = vector.load %arg1[%c8_48, %c0_49, %c0_50] : memref<16x6x512xf32, #tpu.memory_space<vmem>>, vector<1x6x512xf32>
    %320 = vector.shape_cast %319 : vector<1x6x512xf32> to vector<6x512xf32>
    %c8_51 = arith.constant 8 : index
    %c0_52 = arith.constant 0 : index
    %c0_53 = arith.constant 0 : index
    %321 = vector.load %arg2[%c8_51, %c0_52, %c0_53] : memref<16x6x512xf32, #tpu.memory_space<vmem>>, vector<1x6x512xf32>
    %322 = vector.shape_cast %321 : vector<1x6x512xf32> to vector<6x512xf32>
    %323 = arith.mulf %320, %322 : vector<6x512xf32>
    %c72 = arith.constant 72 : index
    %324 = memref.load %arg4[%c72] : memref<161xf32, #tpu.memory_space<smem>>
    %325 = vector.broadcast %324 : f32 to vector<6x512xf32>
    %326 = arith.mulf %325, %323 : vector<6x512xf32>
    %327 = arith.addf %286, %326 : vector<6x512xf32>
    %c73 = arith.constant 73 : index
    %328 = memref.load %arg4[%c73] : memref<161xf32, #tpu.memory_space<smem>>
    %329 = vector.broadcast %328 : f32 to vector<6x512xf32>
    %330 = arith.mulf %329, %323 : vector<6x512xf32>
    %331 = arith.addf %290, %330 : vector<6x512xf32>
    %c74 = arith.constant 74 : index
    %332 = memref.load %arg4[%c74] : memref<161xf32, #tpu.memory_space<smem>>
    %333 = vector.broadcast %332 : f32 to vector<6x512xf32>
    %334 = arith.mulf %333, %323 : vector<6x512xf32>
    %335 = arith.addf %294, %334 : vector<6x512xf32>
    %c75 = arith.constant 75 : index
    %336 = memref.load %arg4[%c75] : memref<161xf32, #tpu.memory_space<smem>>
    %337 = vector.broadcast %336 : f32 to vector<6x512xf32>
    %338 = arith.mulf %337, %323 : vector<6x512xf32>
    %339 = arith.addf %298, %338 : vector<6x512xf32>
    %c76 = arith.constant 76 : index
    %340 = memref.load %arg4[%c76] : memref<161xf32, #tpu.memory_space<smem>>
    %341 = vector.broadcast %340 : f32 to vector<6x512xf32>
    %342 = arith.mulf %341, %323 : vector<6x512xf32>
    %343 = arith.addf %302, %342 : vector<6x512xf32>
    %c77 = arith.constant 77 : index
    %344 = memref.load %arg4[%c77] : memref<161xf32, #tpu.memory_space<smem>>
    %345 = vector.broadcast %344 : f32 to vector<6x512xf32>
    %346 = arith.mulf %345, %323 : vector<6x512xf32>
    %347 = arith.addf %306, %346 : vector<6x512xf32>
    %c78 = arith.constant 78 : index
    %348 = memref.load %arg4[%c78] : memref<161xf32, #tpu.memory_space<smem>>
    %349 = vector.broadcast %348 : f32 to vector<6x512xf32>
    %350 = arith.mulf %349, %323 : vector<6x512xf32>
    %351 = arith.addf %310, %350 : vector<6x512xf32>
    %c79 = arith.constant 79 : index
    %352 = memref.load %arg4[%c79] : memref<161xf32, #tpu.memory_space<smem>>
    %353 = vector.broadcast %352 : f32 to vector<6x512xf32>
    %354 = arith.mulf %353, %323 : vector<6x512xf32>
    %355 = arith.addf %314, %354 : vector<6x512xf32>
    %c80 = arith.constant 80 : index
    %356 = memref.load %arg4[%c80] : memref<161xf32, #tpu.memory_space<smem>>
    %357 = vector.broadcast %356 : f32 to vector<6x512xf32>
    %358 = arith.mulf %357, %323 : vector<6x512xf32>
    %359 = arith.addf %318, %358 : vector<6x512xf32>
    %c9_54 = arith.constant 9 : index
    %c0_55 = arith.constant 0 : index
    %c0_56 = arith.constant 0 : index
    %360 = vector.load %arg1[%c9_54, %c0_55, %c0_56] : memref<16x6x512xf32, #tpu.memory_space<vmem>>, vector<1x6x512xf32>
    %361 = vector.shape_cast %360 : vector<1x6x512xf32> to vector<6x512xf32>
    %c9_57 = arith.constant 9 : index
    %c0_58 = arith.constant 0 : index
    %c0_59 = arith.constant 0 : index
    %362 = vector.load %arg2[%c9_57, %c0_58, %c0_59] : memref<16x6x512xf32, #tpu.memory_space<vmem>>, vector<1x6x512xf32>
    %363 = vector.shape_cast %362 : vector<1x6x512xf32> to vector<6x512xf32>
    %364 = arith.mulf %361, %363 : vector<6x512xf32>
    %c81 = arith.constant 81 : index
    %365 = memref.load %arg4[%c81] : memref<161xf32, #tpu.memory_space<smem>>
    %366 = vector.broadcast %365 : f32 to vector<6x512xf32>
    %367 = arith.mulf %366, %364 : vector<6x512xf32>
    %368 = arith.addf %327, %367 : vector<6x512xf32>
    %c82 = arith.constant 82 : index
    %369 = memref.load %arg4[%c82] : memref<161xf32, #tpu.memory_space<smem>>
    %370 = vector.broadcast %369 : f32 to vector<6x512xf32>
    %371 = arith.mulf %370, %364 : vector<6x512xf32>
    %372 = arith.addf %331, %371 : vector<6x512xf32>
    %c83 = arith.constant 83 : index
    %373 = memref.load %arg4[%c83] : memref<161xf32, #tpu.memory_space<smem>>
    %374 = vector.broadcast %373 : f32 to vector<6x512xf32>
    %375 = arith.mulf %374, %364 : vector<6x512xf32>
    %376 = arith.addf %335, %375 : vector<6x512xf32>
    %c84 = arith.constant 84 : index
    %377 = memref.load %arg4[%c84] : memref<161xf32, #tpu.memory_space<smem>>
    %378 = vector.broadcast %377 : f32 to vector<6x512xf32>
    %379 = arith.mulf %378, %364 : vector<6x512xf32>
    %380 = arith.addf %339, %379 : vector<6x512xf32>
    %c85 = arith.constant 85 : index
    %381 = memref.load %arg4[%c85] : memref<161xf32, #tpu.memory_space<smem>>
    %382 = vector.broadcast %381 : f32 to vector<6x512xf32>
    %383 = arith.mulf %382, %364 : vector<6x512xf32>
    %384 = arith.addf %343, %383 : vector<6x512xf32>
    %c86 = arith.constant 86 : index
    %385 = memref.load %arg4[%c86] : memref<161xf32, #tpu.memory_space<smem>>
    %386 = vector.broadcast %385 : f32 to vector<6x512xf32>
    %387 = arith.mulf %386, %364 : vector<6x512xf32>
    %388 = arith.addf %347, %387 : vector<6x512xf32>
    %c87 = arith.constant 87 : index
    %389 = memref.load %arg4[%c87] : memref<161xf32, #tpu.memory_space<smem>>
    %390 = vector.broadcast %389 : f32 to vector<6x512xf32>
    %391 = arith.mulf %390, %364 : vector<6x512xf32>
    %392 = arith.addf %351, %391 : vector<6x512xf32>
    %c88 = arith.constant 88 : index
    %393 = memref.load %arg4[%c88] : memref<161xf32, #tpu.memory_space<smem>>
    %394 = vector.broadcast %393 : f32 to vector<6x512xf32>
    %395 = arith.mulf %394, %364 : vector<6x512xf32>
    %396 = arith.addf %355, %395 : vector<6x512xf32>
    %c89 = arith.constant 89 : index
    %397 = memref.load %arg4[%c89] : memref<161xf32, #tpu.memory_space<smem>>
    %398 = vector.broadcast %397 : f32 to vector<6x512xf32>
    %399 = arith.mulf %398, %364 : vector<6x512xf32>
    %400 = arith.addf %359, %399 : vector<6x512xf32>
    %c10_60 = arith.constant 10 : index
    %c0_61 = arith.constant 0 : index
    %c0_62 = arith.constant 0 : index
    %401 = vector.load %arg1[%c10_60, %c0_61, %c0_62] : memref<16x6x512xf32, #tpu.memory_space<vmem>>, vector<1x6x512xf32>
    %402 = vector.shape_cast %401 : vector<1x6x512xf32> to vector<6x512xf32>
    %c10_63 = arith.constant 10 : index
    %c0_64 = arith.constant 0 : index
    %c0_65 = arith.constant 0 : index
    %403 = vector.load %arg2[%c10_63, %c0_64, %c0_65] : memref<16x6x512xf32, #tpu.memory_space<vmem>>, vector<1x6x512xf32>
    %404 = vector.shape_cast %403 : vector<1x6x512xf32> to vector<6x512xf32>
    %405 = arith.mulf %402, %404 : vector<6x512xf32>
    %c90 = arith.constant 90 : index
    %406 = memref.load %arg4[%c90] : memref<161xf32, #tpu.memory_space<smem>>
    %407 = vector.broadcast %406 : f32 to vector<6x512xf32>
    %408 = arith.mulf %407, %405 : vector<6x512xf32>
    %409 = arith.addf %368, %408 : vector<6x512xf32>
    %c91 = arith.constant 91 : index
    %410 = memref.load %arg4[%c91] : memref<161xf32, #tpu.memory_space<smem>>
    %411 = vector.broadcast %410 : f32 to vector<6x512xf32>
    %412 = arith.mulf %411, %405 : vector<6x512xf32>
    %413 = arith.addf %372, %412 : vector<6x512xf32>
    %c92 = arith.constant 92 : index
    %414 = memref.load %arg4[%c92] : memref<161xf32, #tpu.memory_space<smem>>
    %415 = vector.broadcast %414 : f32 to vector<6x512xf32>
    %416 = arith.mulf %415, %405 : vector<6x512xf32>
    %417 = arith.addf %376, %416 : vector<6x512xf32>
    %c93 = arith.constant 93 : index
    %418 = memref.load %arg4[%c93] : memref<161xf32, #tpu.memory_space<smem>>
    %419 = vector.broadcast %418 : f32 to vector<6x512xf32>
    %420 = arith.mulf %419, %405 : vector<6x512xf32>
    %421 = arith.addf %380, %420 : vector<6x512xf32>
    %c94 = arith.constant 94 : index
    %422 = memref.load %arg4[%c94] : memref<161xf32, #tpu.memory_space<smem>>
    %423 = vector.broadcast %422 : f32 to vector<6x512xf32>
    %424 = arith.mulf %423, %405 : vector<6x512xf32>
    %425 = arith.addf %384, %424 : vector<6x512xf32>
    %c95 = arith.constant 95 : index
    %426 = memref.load %arg4[%c95] : memref<161xf32, #tpu.memory_space<smem>>
    %427 = vector.broadcast %426 : f32 to vector<6x512xf32>
    %428 = arith.mulf %427, %405 : vector<6x512xf32>
    %429 = arith.addf %388, %428 : vector<6x512xf32>
    %c96 = arith.constant 96 : index
    %430 = memref.load %arg4[%c96] : memref<161xf32, #tpu.memory_space<smem>>
    %431 = vector.broadcast %430 : f32 to vector<6x512xf32>
    %432 = arith.mulf %431, %405 : vector<6x512xf32>
    %433 = arith.addf %392, %432 : vector<6x512xf32>
    %c97 = arith.constant 97 : index
    %434 = memref.load %arg4[%c97] : memref<161xf32, #tpu.memory_space<smem>>
    %435 = vector.broadcast %434 : f32 to vector<6x512xf32>
    %436 = arith.mulf %435, %405 : vector<6x512xf32>
    %437 = arith.addf %396, %436 : vector<6x512xf32>
    %c98 = arith.constant 98 : index
    %438 = memref.load %arg4[%c98] : memref<161xf32, #tpu.memory_space<smem>>
    %439 = vector.broadcast %438 : f32 to vector<6x512xf32>
    %440 = arith.mulf %439, %405 : vector<6x512xf32>
    %441 = arith.addf %400, %440 : vector<6x512xf32>
    %c11_66 = arith.constant 11 : index
    %c0_67 = arith.constant 0 : index
    %c0_68 = arith.constant 0 : index
    %442 = vector.load %arg1[%c11_66, %c0_67, %c0_68] : memref<16x6x512xf32, #tpu.memory_space<vmem>>, vector<1x6x512xf32>
    %443 = vector.shape_cast %442 : vector<1x6x512xf32> to vector<6x512xf32>
    %c11_69 = arith.constant 11 : index
    %c0_70 = arith.constant 0 : index
    %c0_71 = arith.constant 0 : index
    %444 = vector.load %arg2[%c11_69, %c0_70, %c0_71] : memref<16x6x512xf32, #tpu.memory_space<vmem>>, vector<1x6x512xf32>
    %445 = vector.shape_cast %444 : vector<1x6x512xf32> to vector<6x512xf32>
    %446 = arith.mulf %443, %445 : vector<6x512xf32>
    %c99 = arith.constant 99 : index
    %447 = memref.load %arg4[%c99] : memref<161xf32, #tpu.memory_space<smem>>
    %448 = vector.broadcast %447 : f32 to vector<6x512xf32>
    %449 = arith.mulf %448, %446 : vector<6x512xf32>
    %450 = arith.addf %409, %449 : vector<6x512xf32>
    %c100 = arith.constant 100 : index
    %451 = memref.load %arg4[%c100] : memref<161xf32, #tpu.memory_space<smem>>
    %452 = vector.broadcast %451 : f32 to vector<6x512xf32>
    %453 = arith.mulf %452, %446 : vector<6x512xf32>
    %454 = arith.addf %413, %453 : vector<6x512xf32>
    %c101 = arith.constant 101 : index
    %455 = memref.load %arg4[%c101] : memref<161xf32, #tpu.memory_space<smem>>
    %456 = vector.broadcast %455 : f32 to vector<6x512xf32>
    %457 = arith.mulf %456, %446 : vector<6x512xf32>
    %458 = arith.addf %417, %457 : vector<6x512xf32>
    %c102 = arith.constant 102 : index
    %459 = memref.load %arg4[%c102] : memref<161xf32, #tpu.memory_space<smem>>
    %460 = vector.broadcast %459 : f32 to vector<6x512xf32>
    %461 = arith.mulf %460, %446 : vector<6x512xf32>
    %462 = arith.addf %421, %461 : vector<6x512xf32>
    %c103 = arith.constant 103 : index
    %463 = memref.load %arg4[%c103] : memref<161xf32, #tpu.memory_space<smem>>
    %464 = vector.broadcast %463 : f32 to vector<6x512xf32>
    %465 = arith.mulf %464, %446 : vector<6x512xf32>
    %466 = arith.addf %425, %465 : vector<6x512xf32>
    %c104 = arith.constant 104 : index
    %467 = memref.load %arg4[%c104] : memref<161xf32, #tpu.memory_space<smem>>
    %468 = vector.broadcast %467 : f32 to vector<6x512xf32>
    %469 = arith.mulf %468, %446 : vector<6x512xf32>
    %470 = arith.addf %429, %469 : vector<6x512xf32>
    %c105 = arith.constant 105 : index
    %471 = memref.load %arg4[%c105] : memref<161xf32, #tpu.memory_space<smem>>
    %472 = vector.broadcast %471 : f32 to vector<6x512xf32>
    %473 = arith.mulf %472, %446 : vector<6x512xf32>
    %474 = arith.addf %433, %473 : vector<6x512xf32>
    %c106 = arith.constant 106 : index
    %475 = memref.load %arg4[%c106] : memref<161xf32, #tpu.memory_space<smem>>
    %476 = vector.broadcast %475 : f32 to vector<6x512xf32>
    %477 = arith.mulf %476, %446 : vector<6x512xf32>
    %478 = arith.addf %437, %477 : vector<6x512xf32>
    %c107 = arith.constant 107 : index
    %479 = memref.load %arg4[%c107] : memref<161xf32, #tpu.memory_space<smem>>
    %480 = vector.broadcast %479 : f32 to vector<6x512xf32>
    %481 = arith.mulf %480, %446 : vector<6x512xf32>
    %482 = arith.addf %441, %481 : vector<6x512xf32>
    %c12_72 = arith.constant 12 : index
    %c0_73 = arith.constant 0 : index
    %c0_74 = arith.constant 0 : index
    %483 = vector.load %arg1[%c12_72, %c0_73, %c0_74] : memref<16x6x512xf32, #tpu.memory_space<vmem>>, vector<1x6x512xf32>
    %484 = vector.shape_cast %483 : vector<1x6x512xf32> to vector<6x512xf32>
    %c12_75 = arith.constant 12 : index
    %c0_76 = arith.constant 0 : index
    %c0_77 = arith.constant 0 : index
    %485 = vector.load %arg2[%c12_75, %c0_76, %c0_77] : memref<16x6x512xf32, #tpu.memory_space<vmem>>, vector<1x6x512xf32>
    %486 = vector.shape_cast %485 : vector<1x6x512xf32> to vector<6x512xf32>
    %487 = arith.mulf %484, %486 : vector<6x512xf32>
    %c108 = arith.constant 108 : index
    %488 = memref.load %arg4[%c108] : memref<161xf32, #tpu.memory_space<smem>>
    %489 = vector.broadcast %488 : f32 to vector<6x512xf32>
    %490 = arith.mulf %489, %487 : vector<6x512xf32>
    %491 = arith.addf %450, %490 : vector<6x512xf32>
    %c109 = arith.constant 109 : index
    %492 = memref.load %arg4[%c109] : memref<161xf32, #tpu.memory_space<smem>>
    %493 = vector.broadcast %492 : f32 to vector<6x512xf32>
    %494 = arith.mulf %493, %487 : vector<6x512xf32>
    %495 = arith.addf %454, %494 : vector<6x512xf32>
    %c110 = arith.constant 110 : index
    %496 = memref.load %arg4[%c110] : memref<161xf32, #tpu.memory_space<smem>>
    %497 = vector.broadcast %496 : f32 to vector<6x512xf32>
    %498 = arith.mulf %497, %487 : vector<6x512xf32>
    %499 = arith.addf %458, %498 : vector<6x512xf32>
    %c111 = arith.constant 111 : index
    %500 = memref.load %arg4[%c111] : memref<161xf32, #tpu.memory_space<smem>>
    %501 = vector.broadcast %500 : f32 to vector<6x512xf32>
    %502 = arith.mulf %501, %487 : vector<6x512xf32>
    %503 = arith.addf %462, %502 : vector<6x512xf32>
    %c112 = arith.constant 112 : index
    %504 = memref.load %arg4[%c112] : memref<161xf32, #tpu.memory_space<smem>>
    %505 = vector.broadcast %504 : f32 to vector<6x512xf32>
    %506 = arith.mulf %505, %487 : vector<6x512xf32>
    %507 = arith.addf %466, %506 : vector<6x512xf32>
    %c113 = arith.constant 113 : index
    %508 = memref.load %arg4[%c113] : memref<161xf32, #tpu.memory_space<smem>>
    %509 = vector.broadcast %508 : f32 to vector<6x512xf32>
    %510 = arith.mulf %509, %487 : vector<6x512xf32>
    %511 = arith.addf %470, %510 : vector<6x512xf32>
    %c114 = arith.constant 114 : index
    %512 = memref.load %arg4[%c114] : memref<161xf32, #tpu.memory_space<smem>>
    %513 = vector.broadcast %512 : f32 to vector<6x512xf32>
    %514 = arith.mulf %513, %487 : vector<6x512xf32>
    %515 = arith.addf %474, %514 : vector<6x512xf32>
    %c115 = arith.constant 115 : index
    %516 = memref.load %arg4[%c115] : memref<161xf32, #tpu.memory_space<smem>>
    %517 = vector.broadcast %516 : f32 to vector<6x512xf32>
    %518 = arith.mulf %517, %487 : vector<6x512xf32>
    %519 = arith.addf %478, %518 : vector<6x512xf32>
    %c116 = arith.constant 116 : index
    %520 = memref.load %arg4[%c116] : memref<161xf32, #tpu.memory_space<smem>>
    %521 = vector.broadcast %520 : f32 to vector<6x512xf32>
    %522 = arith.mulf %521, %487 : vector<6x512xf32>
    %523 = arith.addf %482, %522 : vector<6x512xf32>
    %c13_78 = arith.constant 13 : index
    %c0_79 = arith.constant 0 : index
    %c0_80 = arith.constant 0 : index
    %524 = vector.load %arg1[%c13_78, %c0_79, %c0_80] : memref<16x6x512xf32, #tpu.memory_space<vmem>>, vector<1x6x512xf32>
    %525 = vector.shape_cast %524 : vector<1x6x512xf32> to vector<6x512xf32>
    %c13_81 = arith.constant 13 : index
    %c0_82 = arith.constant 0 : index
    %c0_83 = arith.constant 0 : index
    %526 = vector.load %arg2[%c13_81, %c0_82, %c0_83] : memref<16x6x512xf32, #tpu.memory_space<vmem>>, vector<1x6x512xf32>
    %527 = vector.shape_cast %526 : vector<1x6x512xf32> to vector<6x512xf32>
    %528 = arith.mulf %525, %527 : vector<6x512xf32>
    %c117 = arith.constant 117 : index
    %529 = memref.load %arg4[%c117] : memref<161xf32, #tpu.memory_space<smem>>
    %530 = vector.broadcast %529 : f32 to vector<6x512xf32>
    %531 = arith.mulf %530, %528 : vector<6x512xf32>
    %532 = arith.addf %491, %531 : vector<6x512xf32>
    %c118 = arith.constant 118 : index
    %533 = memref.load %arg4[%c118] : memref<161xf32, #tpu.memory_space<smem>>
    %534 = vector.broadcast %533 : f32 to vector<6x512xf32>
    %535 = arith.mulf %534, %528 : vector<6x512xf32>
    %536 = arith.addf %495, %535 : vector<6x512xf32>
    %c119 = arith.constant 119 : index
    %537 = memref.load %arg4[%c119] : memref<161xf32, #tpu.memory_space<smem>>
    %538 = vector.broadcast %537 : f32 to vector<6x512xf32>
    %539 = arith.mulf %538, %528 : vector<6x512xf32>
    %540 = arith.addf %499, %539 : vector<6x512xf32>
    %c120 = arith.constant 120 : index
    %541 = memref.load %arg4[%c120] : memref<161xf32, #tpu.memory_space<smem>>
    %542 = vector.broadcast %541 : f32 to vector<6x512xf32>
    %543 = arith.mulf %542, %528 : vector<6x512xf32>
    %544 = arith.addf %503, %543 : vector<6x512xf32>
    %c121 = arith.constant 121 : index
    %545 = memref.load %arg4[%c121] : memref<161xf32, #tpu.memory_space<smem>>
    %546 = vector.broadcast %545 : f32 to vector<6x512xf32>
    %547 = arith.mulf %546, %528 : vector<6x512xf32>
    %548 = arith.addf %507, %547 : vector<6x512xf32>
    %c122 = arith.constant 122 : index
    %549 = memref.load %arg4[%c122] : memref<161xf32, #tpu.memory_space<smem>>
    %550 = vector.broadcast %549 : f32 to vector<6x512xf32>
    %551 = arith.mulf %550, %528 : vector<6x512xf32>
    %552 = arith.addf %511, %551 : vector<6x512xf32>
    %c123 = arith.constant 123 : index
    %553 = memref.load %arg4[%c123] : memref<161xf32, #tpu.memory_space<smem>>
    %554 = vector.broadcast %553 : f32 to vector<6x512xf32>
    %555 = arith.mulf %554, %528 : vector<6x512xf32>
    %556 = arith.addf %515, %555 : vector<6x512xf32>
    %c124 = arith.constant 124 : index
    %557 = memref.load %arg4[%c124] : memref<161xf32, #tpu.memory_space<smem>>
    %558 = vector.broadcast %557 : f32 to vector<6x512xf32>
    %559 = arith.mulf %558, %528 : vector<6x512xf32>
    %560 = arith.addf %519, %559 : vector<6x512xf32>
    %c125 = arith.constant 125 : index
    %561 = memref.load %arg4[%c125] : memref<161xf32, #tpu.memory_space<smem>>
    %562 = vector.broadcast %561 : f32 to vector<6x512xf32>
    %563 = arith.mulf %562, %528 : vector<6x512xf32>
    %564 = arith.addf %523, %563 : vector<6x512xf32>
    %c14_84 = arith.constant 14 : index
    %c0_85 = arith.constant 0 : index
    %c0_86 = arith.constant 0 : index
    %565 = vector.load %arg1[%c14_84, %c0_85, %c0_86] : memref<16x6x512xf32, #tpu.memory_space<vmem>>, vector<1x6x512xf32>
    %566 = vector.shape_cast %565 : vector<1x6x512xf32> to vector<6x512xf32>
    %c14_87 = arith.constant 14 : index
    %c0_88 = arith.constant 0 : index
    %c0_89 = arith.constant 0 : index
    %567 = vector.load %arg2[%c14_87, %c0_88, %c0_89] : memref<16x6x512xf32, #tpu.memory_space<vmem>>, vector<1x6x512xf32>
    %568 = vector.shape_cast %567 : vector<1x6x512xf32> to vector<6x512xf32>
    %569 = arith.mulf %566, %568 : vector<6x512xf32>
    %c126 = arith.constant 126 : index
    %570 = memref.load %arg4[%c126] : memref<161xf32, #tpu.memory_space<smem>>
    %571 = vector.broadcast %570 : f32 to vector<6x512xf32>
    %572 = arith.mulf %571, %569 : vector<6x512xf32>
    %573 = arith.addf %532, %572 : vector<6x512xf32>
    %c127 = arith.constant 127 : index
    %574 = memref.load %arg4[%c127] : memref<161xf32, #tpu.memory_space<smem>>
    %575 = vector.broadcast %574 : f32 to vector<6x512xf32>
    %576 = arith.mulf %575, %569 : vector<6x512xf32>
    %577 = arith.addf %536, %576 : vector<6x512xf32>
    %c128 = arith.constant 128 : index
    %578 = memref.load %arg4[%c128] : memref<161xf32, #tpu.memory_space<smem>>
    %579 = vector.broadcast %578 : f32 to vector<6x512xf32>
    %580 = arith.mulf %579, %569 : vector<6x512xf32>
    %581 = arith.addf %540, %580 : vector<6x512xf32>
    %c129 = arith.constant 129 : index
    %582 = memref.load %arg4[%c129] : memref<161xf32, #tpu.memory_space<smem>>
    %583 = vector.broadcast %582 : f32 to vector<6x512xf32>
    %584 = arith.mulf %583, %569 : vector<6x512xf32>
    %585 = arith.addf %544, %584 : vector<6x512xf32>
    %c130 = arith.constant 130 : index
    %586 = memref.load %arg4[%c130] : memref<161xf32, #tpu.memory_space<smem>>
    %587 = vector.broadcast %586 : f32 to vector<6x512xf32>
    %588 = arith.mulf %587, %569 : vector<6x512xf32>
    %589 = arith.addf %548, %588 : vector<6x512xf32>
    %c131 = arith.constant 131 : index
    %590 = memref.load %arg4[%c131] : memref<161xf32, #tpu.memory_space<smem>>
    %591 = vector.broadcast %590 : f32 to vector<6x512xf32>
    %592 = arith.mulf %591, %569 : vector<6x512xf32>
    %593 = arith.addf %552, %592 : vector<6x512xf32>
    %c132 = arith.constant 132 : index
    %594 = memref.load %arg4[%c132] : memref<161xf32, #tpu.memory_space<smem>>
    %595 = vector.broadcast %594 : f32 to vector<6x512xf32>
    %596 = arith.mulf %595, %569 : vector<6x512xf32>
    %597 = arith.addf %556, %596 : vector<6x512xf32>
    %c133 = arith.constant 133 : index
    %598 = memref.load %arg4[%c133] : memref<161xf32, #tpu.memory_space<smem>>
    %599 = vector.broadcast %598 : f32 to vector<6x512xf32>
    %600 = arith.mulf %599, %569 : vector<6x512xf32>
    %601 = arith.addf %560, %600 : vector<6x512xf32>
    %c134 = arith.constant 134 : index
    %602 = memref.load %arg4[%c134] : memref<161xf32, #tpu.memory_space<smem>>
    %603 = vector.broadcast %602 : f32 to vector<6x512xf32>
    %604 = arith.mulf %603, %569 : vector<6x512xf32>
    %605 = arith.addf %564, %604 : vector<6x512xf32>
    %c15_90 = arith.constant 15 : index
    %c0_91 = arith.constant 0 : index
    %c0_92 = arith.constant 0 : index
    %606 = vector.load %arg1[%c15_90, %c0_91, %c0_92] : memref<16x6x512xf32, #tpu.memory_space<vmem>>, vector<1x6x512xf32>
    %607 = vector.shape_cast %606 : vector<1x6x512xf32> to vector<6x512xf32>
    %c15_93 = arith.constant 15 : index
    %c0_94 = arith.constant 0 : index
    %c0_95 = arith.constant 0 : index
    %608 = vector.load %arg2[%c15_93, %c0_94, %c0_95] : memref<16x6x512xf32, #tpu.memory_space<vmem>>, vector<1x6x512xf32>
    %609 = vector.shape_cast %608 : vector<1x6x512xf32> to vector<6x512xf32>
    %610 = arith.mulf %607, %609 : vector<6x512xf32>
    %c135 = arith.constant 135 : index
    %611 = memref.load %arg4[%c135] : memref<161xf32, #tpu.memory_space<smem>>
    %612 = vector.broadcast %611 : f32 to vector<6x512xf32>
    %613 = arith.mulf %612, %610 : vector<6x512xf32>
    %614 = arith.addf %573, %613 : vector<6x512xf32>
    %c136 = arith.constant 136 : index
    %615 = memref.load %arg4[%c136] : memref<161xf32, #tpu.memory_space<smem>>
    %616 = vector.broadcast %615 : f32 to vector<6x512xf32>
    %617 = arith.mulf %616, %610 : vector<6x512xf32>
    %618 = arith.addf %577, %617 : vector<6x512xf32>
    %c137 = arith.constant 137 : index
    %619 = memref.load %arg4[%c137] : memref<161xf32, #tpu.memory_space<smem>>
    %620 = vector.broadcast %619 : f32 to vector<6x512xf32>
    %621 = arith.mulf %620, %610 : vector<6x512xf32>
    %622 = arith.addf %581, %621 : vector<6x512xf32>
    %c138 = arith.constant 138 : index
    %623 = memref.load %arg4[%c138] : memref<161xf32, #tpu.memory_space<smem>>
    %624 = vector.broadcast %623 : f32 to vector<6x512xf32>
    %625 = arith.mulf %624, %610 : vector<6x512xf32>
    %626 = arith.addf %585, %625 : vector<6x512xf32>
    %c139 = arith.constant 139 : index
    %627 = memref.load %arg4[%c139] : memref<161xf32, #tpu.memory_space<smem>>
    %628 = vector.broadcast %627 : f32 to vector<6x512xf32>
    %629 = arith.mulf %628, %610 : vector<6x512xf32>
    %630 = arith.addf %589, %629 : vector<6x512xf32>
    %c140 = arith.constant 140 : index
    %631 = memref.load %arg4[%c140] : memref<161xf32, #tpu.memory_space<smem>>
    %632 = vector.broadcast %631 : f32 to vector<6x512xf32>
    %633 = arith.mulf %632, %610 : vector<6x512xf32>
    %634 = arith.addf %593, %633 : vector<6x512xf32>
    %c141 = arith.constant 141 : index
    %635 = memref.load %arg4[%c141] : memref<161xf32, #tpu.memory_space<smem>>
    %636 = vector.broadcast %635 : f32 to vector<6x512xf32>
    %637 = arith.mulf %636, %610 : vector<6x512xf32>
    %638 = arith.addf %597, %637 : vector<6x512xf32>
    %c142 = arith.constant 142 : index
    %639 = memref.load %arg4[%c142] : memref<161xf32, #tpu.memory_space<smem>>
    %640 = vector.broadcast %639 : f32 to vector<6x512xf32>
    %641 = arith.mulf %640, %610 : vector<6x512xf32>
    %642 = arith.addf %601, %641 : vector<6x512xf32>
    %c143 = arith.constant 143 : index
    %643 = memref.load %arg4[%c143] : memref<161xf32, #tpu.memory_space<smem>>
    %644 = vector.broadcast %643 : f32 to vector<6x512xf32>
    %645 = arith.mulf %644, %610 : vector<6x512xf32>
    %646 = arith.addf %605, %645 : vector<6x512xf32>
    %c144 = arith.constant 144 : index
    %647 = memref.load %arg4[%c144] : memref<161xf32, #tpu.memory_space<smem>>
    %648 = vector.broadcast %647 : f32 to vector<6x512xf32>
    %649 = arith.addf %614, %648 : vector<6x512xf32>
    %cst = arith.constant 0.000000e+00 : f32
    %650 = vector.broadcast %cst : f32 to vector<6x512xf32>
    %651 = arith.maximumf %649, %650 : vector<6x512xf32>
    %c152 = arith.constant 152 : index
    %652 = memref.load %arg4[%c152] : memref<161xf32, #tpu.memory_space<smem>>
    %653 = vector.broadcast %652 : f32 to vector<6x512xf32>
    %654 = arith.mulf %653, %651 : vector<6x512xf32>
    %c145 = arith.constant 145 : index
    %655 = memref.load %arg4[%c145] : memref<161xf32, #tpu.memory_space<smem>>
    %656 = vector.broadcast %655 : f32 to vector<6x512xf32>
    %657 = arith.addf %618, %656 : vector<6x512xf32>
    %cst_96 = arith.constant 0.000000e+00 : f32
    %658 = vector.broadcast %cst_96 : f32 to vector<6x512xf32>
    %659 = arith.maximumf %657, %658 : vector<6x512xf32>
    %c153 = arith.constant 153 : index
    %660 = memref.load %arg4[%c153] : memref<161xf32, #tpu.memory_space<smem>>
    %661 = vector.broadcast %660 : f32 to vector<6x512xf32>
    %662 = arith.mulf %661, %659 : vector<6x512xf32>
    %663 = arith.addf %654, %662 : vector<6x512xf32>
    %c146 = arith.constant 146 : index
    %664 = memref.load %arg4[%c146] : memref<161xf32, #tpu.memory_space<smem>>
    %665 = vector.broadcast %664 : f32 to vector<6x512xf32>
    %666 = arith.addf %622, %665 : vector<6x512xf32>
    %cst_97 = arith.constant 0.000000e+00 : f32
    %667 = vector.broadcast %cst_97 : f32 to vector<6x512xf32>
    %668 = arith.maximumf %666, %667 : vector<6x512xf32>
    %c154 = arith.constant 154 : index
    %669 = memref.load %arg4[%c154] : memref<161xf32, #tpu.memory_space<smem>>
    %670 = vector.broadcast %669 : f32 to vector<6x512xf32>
    %671 = arith.mulf %670, %668 : vector<6x512xf32>
    %672 = arith.addf %663, %671 : vector<6x512xf32>
    %c147 = arith.constant 147 : index
    %673 = memref.load %arg4[%c147] : memref<161xf32, #tpu.memory_space<smem>>
    %674 = vector.broadcast %673 : f32 to vector<6x512xf32>
    %675 = arith.addf %626, %674 : vector<6x512xf32>
    %cst_98 = arith.constant 0.000000e+00 : f32
    %676 = vector.broadcast %cst_98 : f32 to vector<6x512xf32>
    %677 = arith.maximumf %675, %676 : vector<6x512xf32>
    %c155 = arith.constant 155 : index
    %678 = memref.load %arg4[%c155] : memref<161xf32, #tpu.memory_space<smem>>
    %679 = vector.broadcast %678 : f32 to vector<6x512xf32>
    %680 = arith.mulf %679, %677 : vector<6x512xf32>
    %681 = arith.addf %672, %680 : vector<6x512xf32>
    %c148 = arith.constant 148 : index
    %682 = memref.load %arg4[%c148] : memref<161xf32, #tpu.memory_space<smem>>
    %683 = vector.broadcast %682 : f32 to vector<6x512xf32>
    %684 = arith.addf %630, %683 : vector<6x512xf32>
    %cst_99 = arith.constant 0.000000e+00 : f32
    %685 = vector.broadcast %cst_99 : f32 to vector<6x512xf32>
    %686 = arith.maximumf %684, %685 : vector<6x512xf32>
    %c156 = arith.constant 156 : index
    %687 = memref.load %arg4[%c156] : memref<161xf32, #tpu.memory_space<smem>>
    %688 = vector.broadcast %687 : f32 to vector<6x512xf32>
    %689 = arith.mulf %688, %686 : vector<6x512xf32>
    %690 = arith.addf %681, %689 : vector<6x512xf32>
    %c149 = arith.constant 149 : index
    %691 = memref.load %arg4[%c149] : memref<161xf32, #tpu.memory_space<smem>>
    %692 = vector.broadcast %691 : f32 to vector<6x512xf32>
    %693 = arith.addf %634, %692 : vector<6x512xf32>
    %cst_100 = arith.constant 0.000000e+00 : f32
    %694 = vector.broadcast %cst_100 : f32 to vector<6x512xf32>
    %695 = arith.maximumf %693, %694 : vector<6x512xf32>
    %c157 = arith.constant 157 : index
    %696 = memref.load %arg4[%c157] : memref<161xf32, #tpu.memory_space<smem>>
    %697 = vector.broadcast %696 : f32 to vector<6x512xf32>
    %698 = arith.mulf %697, %695 : vector<6x512xf32>
    %699 = arith.addf %690, %698 : vector<6x512xf32>
    %c150 = arith.constant 150 : index
    %700 = memref.load %arg4[%c150] : memref<161xf32, #tpu.memory_space<smem>>
    %701 = vector.broadcast %700 : f32 to vector<6x512xf32>
    %702 = arith.addf %638, %701 : vector<6x512xf32>
    %cst_101 = arith.constant 0.000000e+00 : f32
    %703 = vector.broadcast %cst_101 : f32 to vector<6x512xf32>
    %704 = arith.maximumf %702, %703 : vector<6x512xf32>
    %c158 = arith.constant 158 : index
    %705 = memref.load %arg4[%c158] : memref<161xf32, #tpu.memory_space<smem>>
    %706 = vector.broadcast %705 : f32 to vector<6x512xf32>
    %707 = arith.mulf %706, %704 : vector<6x512xf32>
    %708 = arith.addf %699, %707 : vector<6x512xf32>
    %c151 = arith.constant 151 : index
    %709 = memref.load %arg4[%c151] : memref<161xf32, #tpu.memory_space<smem>>
    %710 = vector.broadcast %709 : f32 to vector<6x512xf32>
    %711 = arith.addf %642, %710 : vector<6x512xf32>
    %cst_102 = arith.constant 0.000000e+00 : f32
    %712 = vector.broadcast %cst_102 : f32 to vector<6x512xf32>
    %713 = arith.maximumf %711, %712 : vector<6x512xf32>
    %c159 = arith.constant 159 : index
    %714 = memref.load %arg4[%c159] : memref<161xf32, #tpu.memory_space<smem>>
    %715 = vector.broadcast %714 : f32 to vector<6x512xf32>
    %716 = arith.mulf %715, %713 : vector<6x512xf32>
    %717 = arith.addf %708, %716 : vector<6x512xf32>
    %c160 = arith.constant 160 : index
    %718 = memref.load %arg4[%c160] : memref<161xf32, #tpu.memory_space<smem>>
    %719 = vector.broadcast %718 : f32 to vector<6x512xf32>
    %720 = arith.addf %717, %719 : vector<6x512xf32>
    %cst_103 = arith.constant dense<0xFF800000> : vector<512xf32>
    %721 = vector.multi_reduction <maximumf>, %720, %cst_103 [0] : vector<6x512xf32> to vector<512xf32>
    %722 = vector.shape_cast %721 : vector<512xf32> to vector<1x512xf32>
    %723 = vector.broadcast %722 : vector<1x512xf32> to vector<6x512xf32>
    %724 = arith.subf %720, %723 : vector<6x512xf32>
    %725 = math.exp %724 : vector<6x512xf32>
    %cst_104 = arith.constant dense<0.000000e+00> : vector<512xf32>
    %726 = vector.multi_reduction <add>, %725, %cst_104 [0] : vector<6x512xf32> to vector<512xf32>
    %727 = vector.shape_cast %726 : vector<512xf32> to vector<1x512xf32>
    %728 = arith.mulf %725, %646 : vector<6x512xf32>
    %cst_105 = arith.constant dense<0.000000e+00> : vector<512xf32>
    %729 = vector.multi_reduction <add>, %728, %cst_105 [0] : vector<6x512xf32> to vector<512xf32>
    %730 = vector.shape_cast %729 : vector<512xf32> to vector<1x512xf32>
    %731 = arith.divf %730, %727 : vector<1x512xf32>
    %c0_106 = arith.constant 0 : index
    %c0_107 = arith.constant 0 : index
    %732 = vector.load %arg3[%c0_106, %c0_107] : memref<1x512xf32, #tpu.memory_space<vmem>>, vector<1x512xf32>
    %733 = arith.addf %732, %731 : vector<1x512xf32>
    %734 = arith.negf %733 : vector<1x512xf32>
    %735 = math.exp %734 : vector<1x512xf32>
    %cst_108 = arith.constant 1.000000e+00 : f32
    %736 = vector.broadcast %cst_108 : f32 to vector<1x512xf32>
    %737 = arith.addf %736, %735 : vector<1x512xf32>
    %738 = arith.divf %736, %737 : vector<1x512xf32>
    %c0_109 = arith.constant 0 : index
    %c0_110 = arith.constant 0 : index
    %739 = vector.load %arg5[%c0_109, %c0_110] : memref<1x512xf32, #tpu.memory_space<vmem>>, vector<1x512xf32>
    tpu.vector_store %arg5[%c0_109, %c0_110], %738 {strides = array<i32>} : memref<1x512xf32, #tpu.memory_space<vmem>>, vector<1x512xf32>,
    return
  }
  func.func @transform_0(%arg0: i32) -> (i32, i32, i32) {
    %c0_i32 = arith.constant 0 : i32
    %c0_i32_0 = arith.constant 0 : i32
    %c0_i32_1 = arith.constant 0 : i32
    return %c0_i32, %c0_i32_0, %arg0 : i32, i32, i32
  }
  func.func @transform_1(%arg0: i32) -> (i32, i32, i32) {
    %c0_i32 = arith.constant 0 : i32
    %c0_i32_0 = arith.constant 0 : i32
    %c0_i32_1 = arith.constant 0 : i32
    return %c0_i32, %c0_i32_0, %arg0 : i32, i32, i32
  }
  func.func @transform_2(%arg0: i32) -> (i32, i32) {
    %c0_i32 = arith.constant 0 : i32
    %c0_i32_0 = arith.constant 0 : i32
    return %c0_i32, %arg0 : i32, i32
  }
  func.func @transform_3(%arg0: i32) -> i32 {
    %c0_i32 = arith.constant 0 : i32
    %c0_i32_0 = arith.constant 0 : i32
    return %c0_i32 : i32
  }
  func.func @transform_4(%arg0: i32) -> (i32, i32) {
    %c0_i32 = arith.constant 0 : i32
    %c0_i32_0 = arith.constant 0 : i32
    return %c0_i32, %arg0 : i32, i32
  }
}

</mosaic_0001>

<llo_original>
// kernel: tpu_custom_call.1
$region0: #{tpu_custom_call.1}
  #allocation0 [shape = 'u32[]', space=smem, size = 0x4, offset = 0x4, fixed_abs, tag = 'smem constant byte address 0x4 - core index']
  #allocation1 [shape = 'u32[72,128]{1,0:T(1,128)}', space=vmem, size = 0x9000, scoped, tag = 'internal scratch']
  %s0 = inlined_call_operand.vmem [shape: f32[16,6,1024], index: 0, kind: input, shape index: {}]
  %s1 = inlined_call_operand.vmem [shape: f32[16,6,1024], index: 1, kind: input, shape index: {}]
  %s2 = inlined_call_operand.vmem [shape: f32[1,1024], index: 2, kind: input, shape index: {}]
  %s3 = inlined_call_operand.vmem [shape: f32[161], index: 3, kind: input, shape index: {}]
  %s4 = inlined_call_operand.hbm [shape: f32[1,1024], index: 4, kind: output, shape index: {}]
  %s5 = sld [smem:[#allocation0]]
  $region99: #{tpu_custom_call.1} parent=0
    _
  %s7 = ssub.s32 1, %s5
  %s8 = scalar_select 0, %s7, %s5
  $region1: #{tpu_custom_call.1} parent=0
    #allocation2 [shape = 'u8[524288]{0}', space=vmem, size = 0x80000, scoped, tag = 'input window, operand 0']
    #allocation3 [shape = 'u8[524288]{0}', space=vmem, size = 0x80000, scoped, tag = 'input window, operand 1']
    #allocation4 [shape = 'u8[1024]{0}', space=smem, size = 0x400, scoped, tag = 'input window, operand 3, single buffered']
    #allocation5 [shape = 's32[2]{0}', space=sflag, size = 0x8, scoped, tag = 'scoped memory for tpu_custom_call.1']
    #allocation6 [shape = 's32[2]{0}', space=sflag, size = 0x8, scoped, tag = 'scoped memory for tpu_custom_call.1']
    #allocation7 [shape = 'u8[4096]{0}', space=vmem, size = 0x1000, scoped, tag = 'output window, operand 0']
    %9 = vsyncpa [#allocation6], 0
    %10 = vsyncpa [#allocation5], 0
    %s11 = scalar_lea.sflag [#allocation5], 1
    %12 = vsyncpa %s11, 0
    loop: start=0, step=1, limit=4
    $region2: #{tpu_custom_call.1} parent=1 // loop_pre_header
      _
    $region3: #{tpu_custom_call.1} parent=1 // loop_header
      %s14 = sphi 0, %s18
      %p15 = scmp.ge.s32.totalorder %s14, 4
      %s24 = sphi 0, %s26
      %s27 = sphi 0, %s24
      %s28 = sphi 0, %s27
      %s44 = sphi 0, %s28
      %s50 = sphi 0, %s52
      %s53 = sphi 0, %s50
      %s54 = sphi 0, %s53
      %s70 = sphi 0, %s54
      %s76 = sphi 0, %s78
      %s79 = sphi 0, %s76
      %s80 = sphi 0, %s79
      %s96 = sphi 0, %s80
      %s100 = sphi 0, %s100
      %s102 = sphi 0, %s100
      %s103 = sphi 0, %s102
      %s117 = sphi 0, %s103
      %s123 = sphi 0, %s125
      %s126 = sphi 0, %s123
      %s127 = sphi 0, %s126
      %s143 = sphi 0, %s127
    $region4: #{tpu_custom_call.1} parent=1 // loop_header_branch
      %17 = sbr.rel (%p15) target = $region8
    $region5: #{tpu_custom_call.1} parent=1 // loop_body
      %s19 = ssub.s32 %s14, 1
      %s20 = ssub.s32 %s14, 2
      %s21 = sadd.s32 %s14, 1
      %s22 = ssub.s32 %s14, %s21
      %p23 = scmp.eq.s32.totalorder %s22, 0
      %s25 = sadd.s32 %s24, 1
      %s26 = scalar_select %p23, %s24, %s25
      %p29 = pneg %p23
      %p30 = scmp.eq.s32.totalorder %s14, 1
      %p31 = por %p29, %p30
      %p32 = scmp.ne.s32.totalorder %s24, %s27
      %p33 = scmp.eq.s32.totalorder %s14, 0
      %p34 = por %p32, %p33
      %p35 = scmp.ne.s32.totalorder %s24, %s27
      %p36 = scmp.eq.s32.totalorder %s19, 1
      %p37 = por %p35, %p36
      %p38 = scmp.ne.s32.totalorder %s27, %s28
      %p39 = scmp.eq.s32.totalorder %s19, 0
      %p40 = por %p38, %p39
      %p41 = scmp.ne.s32.totalorder %s27, %s28
      %p42 = scmp.eq.s32.totalorder %s20, 1
      %p43 = por %p41, %p42
      %p45 = scmp.ne.s32.totalorder %s28, %s44
      %p46 = scmp.eq.s32.totalorder %s20, 0
      %p47 = por %p45, %p46
      %s48 = ssub.s32 %s14, %s21
      %p49 = scmp.eq.s32.totalorder %s48, 0
      %s51 = sadd.s32 %s50, 1
      %s52 = scalar_select %p49, %s50, %s51
      %p55 = pneg %p49
      %p56 = scmp.eq.s32.totalorder %s14, 1
      %p57 = por %p55, %p56
      %p58 = scmp.ne.s32.totalorder %s50, %s53
      %p59 = scmp.eq.s32.totalorder %s14, 0
      %p60 = por %p58, %p59
      %p61 = scmp.ne.s32.totalorder %s50, %s53
      %p62 = scmp.eq.s32.totalorder %s19, 1
      %p63 = por %p61, %p62
      %p64 = scmp.ne.s32.totalorder %s53, %s54
      %p65 = scmp.eq.s32.totalorder %s19, 0
      %p66 = por %p64, %p65
      %p67 = scmp.ne.s32.totalorder %s53, %s54
      %p68 = scmp.eq.s32.totalorder %s20, 1
      %p69 = por %p67, %p68
      %p71 = scmp.ne.s32.totalorder %s54, %s70
      %p72 = scmp.eq.s32.totalorder %s20, 0
      %p73 = por %p71, %p72
      %s74 = ssub.s32 %s14, %s21
      %p75 = scmp.eq.s32.totalorder %s74, 0
      %s77 = sadd.s32 %s76, 1
      %s78 = scalar_select %p75, %s76, %s77
      %p81 = pneg %p75
      %p82 = scmp.eq.s32.totalorder %s14, 1
      %p83 = por %p81, %p82
      %p84 = scmp.ne.s32.totalorder %s76, %s79
      %p85 = scmp.eq.s32.totalorder %s14, 0
      %p86 = por %p84, %p85
      %p87 = scmp.ne.s32.totalorder %s76, %s79
      %p88 = scmp.eq.s32.totalorder %s19, 1
      %p89 = por %p87, %p88
      %p90 = scmp.ne.s32.totalorder %s79, %s80
      %p91 = scmp.eq.s32.totalorder %s19, 0
      %p92 = por %p90, %p91
      %p93 = scmp.ne.s32.totalorder %s79, %s80
      %p94 = scmp.eq.s32.totalorder %s20, 1
      %p95 = por %p93, %p94
      %p97 = scmp.ne.s32.totalorder %s80, %s96
      %p98 = scmp.eq.s32.totalorder %s20, 0
      %p99 = por %p97, %p98
      %s101 = sadd.s32 %s100, 1
      %p104 = scmp.eq.s32.totalorder %s14, 1
      %p105 = scmp.ne.s32.totalorder %s100, %s102
      %p106 = scmp.eq.s32.totalorder %s14, 0
      %p107 = por %p105, %p106
      %p108 = scmp.ne.s32.totalorder %s100, %s102
      %p109 = scmp.eq.s32.totalorder %s19, 1
      %p110 = por %p108, %p109
      %p111 = scmp.ne.s32.totalorder %s102, %s103
      %p112 = scmp.eq.s32.totalorder %s19, 0
      %p113 = por %p111, %p112
      %p114 = scmp.ne.s32.totalorder %s102, %s103
      %p115 = scmp.eq.s32.totalorder %s20, 1
      %p116 = por %p114, %p115
      %p118 = scmp.ne.s32.totalorder %s103, %s117
      %p119 = scmp.eq.s32.totalorder %s20, 0
      %p120 = por %p118, %p119
      %s121 = ssub.s32 %s14, %s21
      %p122 = scmp.eq.s32.totalorder %s121, 0
      %s124 = sadd.s32 %s123, 1
      %s125 = scalar_select %p122, %s123, %s124
      %p128 = pneg %p122
      %p129 = scmp.eq.s32.totalorder %s14, 1
      %p130 = por %p128, %p129
      %p131 = scmp.ne.s32.totalorder %s123, %s126
      %p132 = scmp.eq.s32.totalorder %s14, 0
      %p133 = por %p131, %p132
      %p134 = scmp.ne.s32.totalorder %s123, %s126
      %p135 = scmp.eq.s32.totalorder %s19, 1
      %p136 = por %p134, %p135
      %p137 = scmp.ne.s32.totalorder %s126, %s127
      %p138 = scmp.eq.s32.totalorder %s19, 0
      %p139 = por %p137, %p138
      %p140 = scmp.ne.s32.totalorder %s126, %s127
      %p141 = scmp.eq.s32.totalorder %s20, 1
      %p142 = por %p140, %p141
      %p144 = scmp.ne.s32.totalorder %s127, %s143
      %p145 = scmp.eq.s32.totalorder %s20, 0
      %p146 = por %p144, %p145
      %p147 = scmp.le.s32.totalorder 1, %s14
      %p148 = scmp.lt.s32.totalorder %s14, 3
      %p149 = pnand %p147, %p148
      %p150 = pneg %p149
      // Predicated region
      $region9: #{tpu_custom_call.1} parent=5 // pred_check
        _
      $region10: #{tpu_custom_call.1} parent=5 // pred_check_branch
        %152 = sbr.rel (%p149) target = $region12
      $region11: #{tpu_custom_call.1} parent=5 // pred_region
        %s153 = ssub.s32 %s14, 1
        // Predicated region
        $region13: #{tpu_custom_call.1} parent=11 // pred_check
          %p154 = pneg %p113
        $region14: #{tpu_custom_call.1} parent=11 // pred_check_branch
          %156 = sbr.rel (%p154) target = $region16
        $region15: #{tpu_custom_call.1} parent=11 // pred_region
          %158 = vsyncadd [#allocation6], 0
          %s160 = sshll.u32 %s3, 4
          %s161 = int_to_ptr.vmem [resolvable:$true] %s160
          %163 = dma.vmem_to_smem %s161, 32, [#allocation4], [#allocation6]
        $region16: #{tpu_custom_call.1} parent=11 // pred_fallthru
          _
      $region12: #{tpu_custom_call.1} parent=5 // pred_fallthru
        _
      %p164 = scmp.lt.s32.totalorder %s14, 2
      // Predicated region
      $region17: #{tpu_custom_call.1} parent=5 // pred_check
        %p165 = pneg %p164
      $region18: #{tpu_custom_call.1} parent=5 // pred_check_branch
        %167 = sbr.rel (%p165) target = $region20
      $region19: #{tpu_custom_call.1} parent=5 // pred_region
        // Predicated region
        $region21: #{tpu_custom_call.1} parent=19 // pred_check
          %p168 = pneg %p34
        $region22: #{tpu_custom_call.1} parent=19 // pred_check_branch
          %170 = sbr.rel (%p168) target = $region24
        $region23: #{tpu_custom_call.1} parent=19 // pred_region
          %s171 = sand.u32 %s24, 1
          %s172 = sand.u32 %s24, 1
          %s173 = smul.addr %s172, 512
          %s174 = scalar_lea.vmem [#allocation2], %s173
          %s175 = smul.u32 4, %s14
          %s176 = smul.addr %s175, 8
          %s177 = scalar_lea.vmem %s0, %s176
          // Predicated region
          $region25: #{tpu_custom_call.1} parent=23 // pred_check
            _
          $region26: #{tpu_custom_call.1} parent=23 // pred_check_branch
            %179 = sbr.rel (0) target = $region28
          $region27: #{tpu_custom_call.1} parent=23 // pred_region
            // Predicated region
            $region29: #{tpu_custom_call.1} parent=27 // pred_check
              _
            $region30: #{tpu_custom_call.1} parent=27 // pred_check_branch
              %181 = sbr.rel (0) target = $region32
            $region31: #{tpu_custom_call.1} parent=27 // pred_region
              loop: start=0, step=1, limit=1
              $region33: #{tpu_custom_call.1} parent=31 // loop_pre_header
                _
              $region34: #{tpu_custom_call.1} parent=31 // loop_header
                %s183 = sphi 0, %s187
                %p184 = scmp.ge.s32.totalorder %s183, 1
                %s188 = sphi %s177, %s177
                %s189 = sphi %s174, %s174
              $region35: #{tpu_custom_call.1} parent=31 // loop_header_branch
                %186 = sbr.rel (%p184) target = $region39
              $region36: #{tpu_custom_call.1} parent=31 // loop_body
                %v190 = vld [vmem:[%s188] sm:$0xff]
                %191 = vst [vmem:[%s189] sm:$0xff] %v190
                %v192 = vld [vmem:[%s188 + $0x8] sm:$0xff]
                %193 = vst [vmem:[%s189 + $0x8] sm:$0xff] %v192
                %v194 = vld [vmem:[%s188 + $0x10] sm:$0xff]
                %195 = vst [vmem:[%s189 + $0x10] sm:$0xff] %v194
                %v196 = vld [vmem:[%s188 + $0x18] sm:$0xff]
                %197 = vst [vmem:[%s189 + $0x18] sm:$0xff] %v196
                %v198 = vld [vmem:[%s188 + $0x40] sm:$0xff]
                %199 = vst [vmem:[%s189 + $0x20] sm:$0xff] %v198
                %v200 = vld [vmem:[%s188 + $0x48] sm:$0xff]
                %201 = vst [vmem:[%s189 + $0x28] sm:$0xff] %v200
                %v202 = vld [vmem:[%s188 + $0x50] sm:$0xff]
                %203 = vst [vmem:[%s189 + $0x30] sm:$0xff] %v202
                %v204 = vld [vmem:[%s188 + $0x58] sm:$0xff]
                %205 = vst [vmem:[%s189 + $0x38] sm:$0xff] %v204
                %v206 = vld [vmem:[%s188 + $0x80] sm:$0xff]
                %207 = vst [vmem:[%s189 + $0x40] sm:$0xff] %v206
                %v208 = vld [vmem:[%s188 + $0x88] sm:$0xff]
                %209 = vst [vmem:[%s189 + $0x48] sm:$0xff] %v208
                %v210 = vld [vmem:[%s188 + $0x90] sm:$0xff]
                %211 = vst [vmem:[%s189 + $0x50] sm:$0xff] %v210
                %v212 = vld [vmem:[%s188 + $0x98] sm:$0xff]
                %213 = vst [vmem:[%s189 + $0x58] sm:$0xff] %v212
                %v214 = vld [vmem:[%s188 + $0xc0] sm:$0xff]
                %215 = vst [vmem:[%s189 + $0x60] sm:$0xff] %v214
                %v216 = vld [vmem:[%s188 + $0xc8] sm:$0xff]
                %217 = vst [vmem:[%s189 + $0x68] sm:$0xff] %v216
                %v218 = vld [vmem:[%s188 + $0xd0] sm:$0xff]
                %219 = vst [vmem:[%s189 + $0x70] sm:$0xff] %v218
                %v220 = vld [vmem:[%s188 + $0xd8] sm:$0xff]
                %221 = vst [vmem:[%s189 + $0x78] sm:$0xff] %v220
                %v222 = vld [vmem:[%s188 + $0x100] sm:$0xff]
                %223 = vst [vmem:[%s189 + $0x80] sm:$0xff] %v222
                %v224 = vld [vmem:[%s188 + $0x108] sm:$0xff]
                %225 = vst [vmem:[%s189 + $0x88] sm:$0xff] %v224
                %v226 = vld [vmem:[%s188 + $0x110] sm:$0xff]
                %227 = vst [vmem:[%s189 + $0x90] sm:$0xff] %v226
                %v228 = vld [vmem:[%s188 + $0x118] sm:$0xff]
                %229 = vst [vmem:[%s189 + $0x98] sm:$0xff] %v228
                %v230 = vld [vmem:[%s188 + $0x140] sm:$0xff]
                %231 = vst [vmem:[%s189 + $0xa0] sm:$0xff] %v230
                %v232 = vld [vmem:[%s188 + $0x148] sm:$0xff]
                %233 = vst [vmem:[%s189 + $0xa8] sm:$0xff] %v232
                %v234 = vld [vmem:[%s188 + $0x150] sm:$0xff]
                %235 = vst [vmem:[%s189 + $0xb0] sm:$0xff] %v234
                %v236 = vld [vmem:[%s188 + $0x158] sm:$0xff]
                %237 = vst [vmem:[%s189 + $0xb8] sm:$0xff] %v236
                %v238 = vld [vmem:[%s188 + $0x180] sm:$0xff]
                %239 = vst [vmem:[%s189 + $0xc0] sm:$0xff] %v238
                %v240 = vld [vmem:[%s188 + $0x188] sm:$0xff]
                %241 = vst [vmem:[%s189 + $0xc8] sm:$0xff] %v240
                %v242 = vld [vmem:[%s188 + $0x190] sm:$0xff]
                %243 = vst [vmem:[%s189 + $0xd0] sm:$0xff] %v242
                %v244 = vld [vmem:[%s188 + $0x198] sm:$0xff]
                %245 = vst [vmem:[%s189 + $0xd8] sm:$0xff] %v244
                %v246 = vld [vmem:[%s188 + $0x1c0] sm:$0xff]
                %247 = vst [vmem:[%s189 + $0xe0] sm:$0xff] %v246
                %v248 = vld [vmem:[%s188 + $0x1c8] sm:$0xff]
                %249 = vst [vmem:[%s189 + $0xe8] sm:$0xff] %v248
                %v250 = vld [vmem:[%s188 + $0x1d0] sm:$0xff]
                %251 = vst [vmem:[%s189 + $0xf0] sm:$0xff] %v250
                %v252 = vld [vmem:[%s188 + $0x1d8] sm:$0xff]
                %253 = vst [vmem:[%s189 + $0xf8] sm:$0xff] %v252
                %v254 = vld [vmem:[%s188 + $0x200] sm:$0xff]
                %255 = vst [vmem:[%s189 + $0x100] sm:$0xff] %v254
                %v256 = vld [vmem:[%s188 + $0x208] sm:$0xff]
                %257 = vst [vmem:[%s189 + $0x108] sm:$0xff] %v256
                %v258 = vld [vmem:[%s188 + $0x210] sm:$0xff]
                %259 = vst [vmem:[%s189 + $0x110] sm:$0xff] %v258
                %v260 = vld [vmem:[%s188 + $0x218] sm:$0xff]
                %261 = vst [vmem:[%s189 + $0x118] sm:$0xff] %v260
                %v262 = vld [vmem:[%s188 + $0x240] sm:$0xff]
                %263 = vst [vmem:[%s189 + $0x120] sm:$0xff] %v262
                %v264 = vld [vmem:[%s188 + $0x248] sm:$0xff]
                %265 = vst [vmem:[%s189 + $0x128] sm:$0xff] %v264
                %v266 = vld [vmem:[%s188 + $0x250] sm:$0xff]
                %267 = vst [vmem:[%s189 + $0x130] sm:$0xff] %v266
                %v268 = vld [vmem:[%s188 + $0x258] sm:$0xff]
                %269 = vst [vmem:[%s189 + $0x138] sm:$0xff] %v268
                %v270 = vld [vmem:[%s188 + $0x280] sm:$0xff]
                %271 = vst [vmem:[%s189 + $0x140] sm:$0xff] %v270
                %v272 = vld [vmem:[%s188 + $0x288] sm:$0xff]
                %273 = vst [vmem:[%s189 + $0x148] sm:$0xff] %v272
                %v274 = vld [vmem:[%s188 + $0x290] sm:$0xff]
                %275 = vst [vmem:[%s189 + $0x150] sm:$0xff] %v274
                %v276 = vld [vmem:[%s188 + $0x298] sm:$0xff]
                %277 = vst [vmem:[%s189 + $0x158] sm:$0xff] %v276
                %v278 = vld [vmem:[%s188 + $0x2c0] sm:$0xff]
                %279 = vst [vmem:[%s189 + $0x160] sm:$0xff] %v278
                %v280 = vld [vmem:[%s188 + $0x2c8] sm:$0xff]
                %281 = vst [vmem:[%s189 + $0x168] sm:$0xff] %v280
                %v282 = vld [vmem:[%s188 + $0x2d0] sm:$0xff]
                %283 = vst [vmem:[%s189 + $0x170] sm:$0xff] %v282
                %v284 = vld [vmem:[%s188 + $0x2d8] sm:$0xff]
                %285 = vst [vmem:[%s189 + $0x178] sm:$0xff] %v284
                %v286 = vld [vmem:[%s188 + $0x300] sm:$0xff]
                %287 = vst [vmem:[%s189 + $0x180] sm:$0xff] %v286
                %v288 = vld [vmem:[%s188 + $0x308] sm:$0xff]
                %289 = vst [vmem:[%s189 + $0x188] sm:$0xff] %v288
                %v290 = vld [vmem:[%s188 + $0x310] sm:$0xff]
                %291 = vst [vmem:[%s189 + $0x190] sm:$0xff] %v290
                %v292 = vld [vmem:[%s188 + $0x318] sm:$0xff]
                %293 = vst [vmem:[%s189 + $0x198] sm:$0xff] %v292
                %v294 = vld [vmem:[%s188 + $0x340] sm:$0xff]
                %295 = vst [vmem:[%s189 + $0x1a0] sm:$0xff] %v294
                %v296 = vld [vmem:[%s188 + $0x348] sm:$0xff]
                %297 = vst [vmem:[%s189 + $0x1a8] sm:$0xff] %v296
                %v298 = vld [vmem:[%s188 + $0x350] sm:$0xff]
                %299 = vst [vmem:[%s189 + $0x1b0] sm:$0xff] %v298
                %v300 = vld [vmem:[%s188 + $0x358] sm:$0xff]
                %301 = vst [vmem:[%s189 + $0x1b8] sm:$0xff] %v300
                %v302 = vld [vmem:[%s188 + $0x380] sm:$0xff]
                %303 = vst [vmem:[%s189 + $0x1c0] sm:$0xff] %v302
                %v304 = vld [vmem:[%s188 + $0x388] sm:$0xff]
                %305 = vst [vmem:[%s189 + $0x1c8] sm:$0xff] %v304
                %v306 = vld [vmem:[%s188 + $0x390] sm:$0xff]
                %307 = vst [vmem:[%s189 + $0x1d0] sm:$0xff] %v306
                %v308 = vld [vmem:[%s188 + $0x398] sm:$0xff]
                %309 = vst [vmem:[%s189 + $0x1d8] sm:$0xff] %v308
                %v310 = vld [vmem:[%s188 + $0x3c0] sm:$0xff]
                %311 = vst [vmem:[%s189 + $0x1e0] sm:$0xff] %v310
                %v312 = vld [vmem:[%s188 + $0x3c8] sm:$0xff]
                %313 = vst [vmem:[%s189 + $0x1e8] sm:$0xff] %v312
                %v314 = vld [vmem:[%s188 + $0x3d0] sm:$0xff]
                %315 = vst [vmem:[%s189 + $0x1f0] sm:$0xff] %v314
                %v316 = vld [vmem:[%s188 + $0x3d8] sm:$0xff]
                %317 = vst [vmem:[%s189 + $0x1f8] sm:$0xff] %v316
              $region37: #{tpu_custom_call.1} parent=31 // loop_footer
                %s187 = sadd.s32 1, %s183
              $region38: #{tpu_custom_call.1} parent=31 // loop_footer_branch
                %182 = sbr.rel target = $region34
              $region39: #{tpu_custom_call.1} parent=31 // loop_exit
                _
            $region32: #{tpu_custom_call.1} parent=27 // pred_fallthru
              _
            // Predicated region
            $region40: #{tpu_custom_call.1} parent=27 // pred_check
              _
            $region41: #{tpu_custom_call.1} parent=27 // pred_check_branch
              %319 = sbr.rel target = $region43
            $region42: #{tpu_custom_call.1} parent=27 // pred_region
              _
            $region43: #{tpu_custom_call.1} parent=27 // pred_fallthru
              _
          $region28: #{tpu_custom_call.1} parent=23 // pred_fallthru
            _
          %320 = vnop
        $region24: #{tpu_custom_call.1} parent=19 // pred_fallthru
          _
        // Predicated region
        $region44: #{tpu_custom_call.1} parent=19 // pred_check
          %p321 = pneg %p60
        $region45: #{tpu_custom_call.1} parent=19 // pred_check_branch
          %323 = sbr.rel (%p321) target = $region47
        $region46: #{tpu_custom_call.1} parent=19 // pred_region
          %s324 = sand.u32 %s50, 1
          %s325 = sand.u32 %s50, 1
          %s326 = smul.addr %s325, 512
          %s327 = scalar_lea.vmem [#allocation3], %s326
          %s328 = smul.u32 4, %s14
          %s329 = smul.addr %s328, 8
          %s330 = scalar_lea.vmem %s1, %s329
          // Predicated region
          $region48: #{tpu_custom_call.1} parent=46 // pred_check
            _
          $region49: #{tpu_custom_call.1} parent=46 // pred_check_branch
            %332 = sbr.rel (0) target = $region51
          $region50: #{tpu_custom_call.1} parent=46 // pred_region
            // Predicated region
            $region52: #{tpu_custom_call.1} parent=50 // pred_check
              _
            $region53: #{tpu_custom_call.1} parent=50 // pred_check_branch
              %334 = sbr.rel (0) target = $region55
            $region54: #{tpu_custom_call.1} parent=50 // pred_region
              loop: start=0, step=1, limit=1
              $region56: #{tpu_custom_call.1} parent=54 // loop_pre_header
                _
              $region57: #{tpu_custom_call.1} parent=54 // loop_header
                %s336 = sphi 0, %s340
                %p337 = scmp.ge.s32.totalorder %s336, 1
                %s341 = sphi %s330, %s330
                %s342 = sphi %s327, %s327
              $region58: #{tpu_custom_call.1} parent=54 // loop_header_branch
                %339 = sbr.rel (%p337) target = $region62
              $region59: #{tpu_custom_call.1} parent=54 // loop_body
                %v343 = vld [vmem:[%s341] sm:$0xff]
                %344 = vst [vmem:[%s342] sm:$0xff] %v343
                %v345 = vld [vmem:[%s341 + $0x8] sm:$0xff]
                %346 = vst [vmem:[%s342 + $0x8] sm:$0xff] %v345
                %v347 = vld [vmem:[%s341 + $0x10] sm:$0xff]
                %348 = vst [vmem:[%s342 + $0x10] sm:$0xff] %v347
                %v349 = vld [vmem:[%s341 + $0x18] sm:$0xff]
                %350 = vst [vmem:[%s342 + $0x18] sm:$0xff] %v349
                %v351 = vld [vmem:[%s341 + $0x40] sm:$0xff]
                %352 = vst [vmem:[%s342 + $0x20] sm:$0xff] %v351
                %v353 = vld [vmem:[%s341 + $0x48] sm:$0xff]
                %354 = vst [vmem:[%s342 + $0x28] sm:$0xff] %v353
                %v355 = vld [vmem:[%s341 + $0x50] sm:$0xff]
                %356 = vst [vmem:[%s342 + $0x30] sm:$0xff] %v355
                %v357 = vld [vmem:[%s341 + $0x58] sm:$0xff]
                %358 = vst [vmem:[%s342 + $0x38] sm:$0xff] %v357
                %v359 = vld [vmem:[%s341 + $0x80] sm:$0xff]
                %360 = vst [vmem:[%s342 + $0x40] sm:$0xff] %v359
                %v361 = vld [vmem:[%s341 + $0x88] sm:$0xff]
                %362 = vst [vmem:[%s342 + $0x48] sm:$0xff] %v361
                %v363 = vld [vmem:[%s341 + $0x90] sm:$0xff]
                %364 = vst [vmem:[%s342 + $0x50] sm:$0xff] %v363
                %v365 = vld [vmem:[%s341 + $0x98] sm:$0xff]
                %366 = vst [vmem:[%s342 + $0x58] sm:$0xff] %v365
                %v367 = vld [vmem:[%s341 + $0xc0] sm:$0xff]
                %368 = vst [vmem:[%s342 + $0x60] sm:$0xff] %v367
                %v369 = vld [vmem:[%s341 + $0xc8] sm:$0xff]
                %370 = vst [vmem:[%s342 + $0x68] sm:$0xff] %v369
                %v371 = vld [vmem:[%s341 + $0xd0] sm:$0xff]
                %372 = vst [vmem:[%s342 + $0x70] sm:$0xff] %v371
                %v373 = vld [vmem:[%s341 + $0xd8] sm:$0xff]
                %374 = vst [vmem:[%s342 + $0x78] sm:$0xff] %v373
                %v375 = vld [vmem:[%s341 + $0x100] sm:$0xff]
                %376 = vst [vmem:[%s342 + $0x80] sm:$0xff] %v375
                %v377 = vld [vmem:[%s341 + $0x108] sm:$0xff]
                %378 = vst [vmem:[%s342 + $0x88] sm:$0xff] %v377
                %v379 = vld [vmem:[%s341 + $0x110] sm:$0xff]
                %380 = vst [vmem:[%s342 + $0x90] sm:$0xff] %v379
                %v381 = vld [vmem:[%s341 + $0x118] sm:$0xff]
                %382 = vst [vmem:[%s342 + $0x98] sm:$0xff] %v381
                %v383 = vld [vmem:[%s341 + $0x140] sm:$0xff]
                %384 = vst [vmem:[%s342 + $0xa0] sm:$0xff] %v383
                %v385 = vld [vmem:[%s341 + $0x148] sm:$0xff]
                %386 = vst [vmem:[%s342 + $0xa8] sm:$0xff] %v385
                %v387 = vld [vmem:[%s341 + $0x150] sm:$0xff]
                %388 = vst [vmem:[%s342 + $0xb0] sm:$0xff] %v387
                %v389 = vld [vmem:[%s341 + $0x158] sm:$0xff]
                %390 = vst [vmem:[%s342 + $0xb8] sm:$0xff] %v389
                %v391 = vld [vmem:[%s341 + $0x180] sm:$0xff]
                %392 = vst [vmem:[%s342 + $0xc0] sm:$0xff] %v391
                %v393 = vld [vmem:[%s341 + $0x188] sm:$0xff]
                %394 = vst [vmem:[%s342 + $0xc8] sm:$0xff] %v393
                %v395 = vld [vmem:[%s341 + $0x190] sm:$0xff]
                %396 = vst [vmem:[%s342 + $0xd0] sm:$0xff] %v395
                %v397 = vld [vmem:[%s341 + $0x198] sm:$0xff]
                %398 = vst [vmem:[%s342 + $0xd8] sm:$0xff] %v397
                %v399 = vld [vmem:[%s341 + $0x1c0] sm:$0xff]
                %400 = vst [vmem:[%s342 + $0xe0] sm:$0xff] %v399
                %v401 = vld [vmem:[%s341 + $0x1c8] sm:$0xff]
                %402 = vst [vmem:[%s342 + $0xe8] sm:$0xff] %v401
                %v403 = vld [vmem:[%s341 + $0x1d0] sm:$0xff]
                %404 = vst [vmem:[%s342 + $0xf0] sm:$0xff] %v403
                %v405 = vld [vmem:[%s341 + $0x1d8] sm:$0xff]
                %406 = vst [vmem:[%s342 + $0xf8] sm:$0xff] %v405
                %v407 = vld [vmem:[%s341 + $0x200] sm:$0xff]
                %408 = vst [vmem:[%s342 + $0x100] sm:$0xff] %v407
                %v409 = vld [vmem:[%s341 + $0x208] sm:$0xff]
                %410 = vst [vmem:[%s342 + $0x108] sm:$0xff] %v409
                %v411 = vld [vmem:[%s341 + $0x210] sm:$0xff]
                %412 = vst [vmem:[%s342 + $0x110] sm:$0xff] %v411
                %v413 = vld [vmem:[%s341 + $0x218] sm:$0xff]
                %414 = vst [vmem:[%s342 + $0x118] sm:$0xff] %v413
                %v415 = vld [vmem:[%s341 + $0x240] sm:$0xff]
                %416 = vst [vmem:[%s342 + $0x120] sm:$0xff] %v415
                %v417 = vld [vmem:[%s341 + $0x248] sm:$0xff]
                %418 = vst [vmem:[%s342 + $0x128] sm:$0xff] %v417
                %v419 = vld [vmem:[%s341 + $0x250] sm:$0xff]
                %420 = vst [vmem:[%s342 + $0x130] sm:$0xff] %v419
                %v421 = vld [vmem:[%s341 + $0x258] sm:$0xff]
                %422 = vst [vmem:[%s342 + $0x138] sm:$0xff] %v421
                %v423 = vld [vmem:[%s341 + $0x280] sm:$0xff]
                %424 = vst [vmem:[%s342 + $0x140] sm:$0xff] %v423
                %v425 = vld [vmem:[%s341 + $0x288] sm:$0xff]
                %426 = vst [vmem:[%s342 + $0x148] sm:$0xff] %v425
                %v427 = vld [vmem:[%s341 + $0x290] sm:$0xff]
                %428 = vst [vmem:[%s342 + $0x150] sm:$0xff] %v427
                %v429 = vld [vmem:[%s341 + $0x298] sm:$0xff]
                %430 = vst [vmem:[%s342 + $0x158] sm:$0xff] %v429
                %v431 = vld [vmem:[%s341 + $0x2c0] sm:$0xff]
                %432 = vst [vmem:[%s342 + $0x160] sm:$0xff] %v431
                %v433 = vld [vmem:[%s341 + $0x2c8] sm:$0xff]
                %434 = vst [vmem:[%s342 + $0x168] sm:$0xff] %v433
                %v435 = vld [vmem:[%s341 + $0x2d0] sm:$0xff]
                %436 = vst [vmem:[%s342 + $0x170] sm:$0xff] %v435
                %v437 = vld [vmem:[%s341 + $0x2d8] sm:$0xff]
                %438 = vst [vmem:[%s342 + $0x178] sm:$0xff] %v437
                %v439 = vld [vmem:[%s341 + $0x300] sm:$0xff]
                %440 = vst [vmem:[%s342 + $0x180] sm:$0xff] %v439
                %v441 = vld [vmem:[%s341 + $0x308] sm:$0xff]
                %442 = vst [vmem:[%s342 + $0x188] sm:$0xff] %v441
                %v443 = vld [vmem:[%s341 + $0x310] sm:$0xff]
                %444 = vst [vmem:[%s342 + $0x190] sm:$0xff] %v443
                %v445 = vld [vmem:[%s341 + $0x318] sm:$0xff]
                %446 = vst [vmem:[%s342 + $0x198] sm:$0xff] %v445
                %v447 = vld [vmem:[%s341 + $0x340] sm:$0xff]
                %448 = vst [vmem:[%s342 + $0x1a0] sm:$0xff] %v447
                %v449 = vld [vmem:[%s341 + $0x348] sm:$0xff]
                %450 = vst [vmem:[%s342 + $0x1a8] sm:$0xff] %v449
                %v451 = vld [vmem:[%s341 + $0x350] sm:$0xff]
                %452 = vst [vmem:[%s342 + $0x1b0] sm:$0xff] %v451
                %v453 = vld [vmem:[%s341 + $0x358] sm:$0xff]
                %454 = vst [vmem:[%s342 + $0x1b8] sm:$0xff] %v453
                %v455 = vld [vmem:[%s341 + $0x380] sm:$0xff]
                %456 = vst [vmem:[%s342 + $0x1c0] sm:$0xff] %v455
                %v457 = vld [vmem:[%s341 + $0x388] sm:$0xff]
                %458 = vst [vmem:[%s342 + $0x1c8] sm:$0xff] %v457
                %v459 = vld [vmem:[%s341 + $0x390] sm:$0xff]
                %460 = vst [vmem:[%s342 + $0x1d0] sm:$0xff] %v459
                %v461 = vld [vmem:[%s341 + $0x398] sm:$0xff]
                %462 = vst [vmem:[%s342 + $0x1d8] sm:$0xff] %v461
                %v463 = vld [vmem:[%s341 + $0x3c0] sm:$0xff]
                %464 = vst [vmem:[%s342 + $0x1e0] sm:$0xff] %v463
                %v465 = vld [vmem:[%s341 + $0x3c8] sm:$0xff]
                %466 = vst [vmem:[%s342 + $0x1e8] sm:$0xff] %v465
                %v467 = vld [vmem:[%s341 + $0x3d0] sm:$0xff]
                %468 = vst [vmem:[%s342 + $0x1f0] sm:$0xff] %v467
                %v469 = vld [vmem:[%s341 + $0x3d8] sm:$0xff]
                %470 = vst [vmem:[%s342 + $0x1f8] sm:$0xff] %v469
              $region60: #{tpu_custom_call.1} parent=54 // loop_footer
                %s340 = sadd.s32 1, %s336
              $region61: #{tpu_custom_call.1} parent=54 // loop_footer_branch
                %335 = sbr.rel target = $region57
              $region62: #{tpu_custom_call.1} parent=54 // loop_exit
                _
            $region55: #{tpu_custom_call.1} parent=50 // pred_fallthru
              _
            // Predicated region
            $region63: #{tpu_custom_call.1} parent=50 // pred_check
              _
            $region64: #{tpu_custom_call.1} parent=50 // pred_check_branch
              %472 = sbr.rel target = $region66
            $region65: #{tpu_custom_call.1} parent=50 // pred_region
              _
            $region66: #{tpu_custom_call.1} parent=50 // pred_fallthru
              _
          $region51: #{tpu_custom_call.1} parent=46 // pred_fallthru
            _
          %473 = vnop
        $region47: #{tpu_custom_call.1} parent=19 // pred_fallthru
          _
        // Predicated region
        $region67: #{tpu_custom_call.1} parent=19 // pred_check
          %p474 = pneg %p86
        $region68: #{tpu_custom_call.1} parent=19 // pred_check_branch
          %476 = sbr.rel (%p474) target = $region70
        $region69: #{tpu_custom_call.1} parent=19 // pred_region
          %s477 = smul.u32 4, %s14
          %p478 = scmp.lt.s32.totalorder %s477, 7
          %s479 = scalar_select %p478, %s477, 7
          %s480 = scalar_lea.vmem %s2, %s479
          %s481 = smul.u32 4, %s14
        $region70: #{tpu_custom_call.1} parent=19 // pred_fallthru
          _
      $region20: #{tpu_custom_call.1} parent=5 // pred_fallthru
        _
      %p482 = scmp.le.s32.totalorder 1, %s14
      %p483 = scmp.lt.s32.totalorder %s14, 3
      %p484 = pnand %p482, %p483
      %p485 = pneg %p484
      // Predicated region
      $region71: #{tpu_custom_call.1} parent=5 // pred_check
        _
      $region72: #{tpu_custom_call.1} parent=5 // pred_check_branch
        %487 = sbr.rel (%p484) target = $region74
      $region73: #{tpu_custom_call.1} parent=5 // pred_region
        %s488 = ssub.s32 %s14, 1
        %s489 = sand.u32 %s27, 1
        %s490 = sand.u32 %s27, 1
        %s491 = smul.addr %s490, 512
        %s492 = scalar_lea.vmem [#allocation2], %s491
        // Predicated region
        $region75: #{tpu_custom_call.1} parent=73 // pred_check
          %p493 = pneg %p40
        $region76: #{tpu_custom_call.1} parent=73 // pred_check_branch
          %495 = sbr.rel (%p493) target = $region78
        $region77: #{tpu_custom_call.1} parent=73 // pred_region
          _
        $region78: #{tpu_custom_call.1} parent=73 // pred_fallthru
          _
        %s496 = sand.u32 %s53, 1
        %s497 = sand.u32 %s53, 1
        %s498 = smul.addr %s497, 512
        %s499 = scalar_lea.vmem [#allocation3], %s498
        // Predicated region
        $region79: #{tpu_custom_call.1} parent=73 // pred_check
          %p500 = pneg %p66
        $region80: #{tpu_custom_call.1} parent=73 // pred_check_branch
          %502 = sbr.rel (%p500) target = $region82
        $region81: #{tpu_custom_call.1} parent=73 // pred_region
          _
        $region82: #{tpu_custom_call.1} parent=73 // pred_fallthru
          _
        // Predicated region
        $region83: #{tpu_custom_call.1} parent=73 // pred_check
          %p503 = pneg %p113
        $region84: #{tpu_custom_call.1} parent=73 // pred_check_branch
          %505 = sbr.rel (%p503) target = $region86
        $region85: #{tpu_custom_call.1} parent=73 // pred_region
          %507 = dma.done [#allocation6], 32
        $region86: #{tpu_custom_call.1} parent=73 // pred_fallthru
          _
        %508 = sfence
        %s509 = sand.u32 %s27, 1
        %s510 = sand.u32 %s27, 1
        %s511 = smul.addr %s510, 512
        %s512 = scalar_lea.vmem [#allocation2], %s511
        %p513 = pneg %p40
        %p514 = pneg %p37
        %s515 = sand.u32 %s53, 1
        %s516 = sand.u32 %s53, 1
        %s517 = smul.addr %s516, 512
        %s518 = scalar_lea.vmem [#allocation3], %s517
        %p519 = pneg %p66
        %p520 = pneg %p63
        %s521 = smul.u32 4, %s19
        %p522 = scmp.lt.s32.totalorder %s521, 7
        %s523 = scalar_select %p522, %s521, 7
        %s524 = scalar_lea.vmem %s2, %s523
        %p525 = pneg %p92
        %p526 = pneg %p89
        %p527 = pneg %p113
        %p528 = pneg %p110
        %p529 = pneg %p139
        %p530 = pneg %p136
        %s531 = sand.u32 %s126, 1
        %s532 = scalar_lea.sflag [#allocation5], %s531
        %s533 = sand.u32 %s126, 1
        %s534 = smul.addr %s533, 4
        %s535 = scalar_lea.vmem [#allocation7], %s534
        %s536 = smul.u32 4, %s19
        %s537 = smul.u32 4, %s19
        %s538 = smul.u32 4, %s19
        %p539 = scmp.lt.s32.totalorder %s538, 7
        %s540 = scalar_select %p539, %s538, 7
        %s541 = scalar_lea.vmem %s2, %s540
        %s542 = smul.u32 4, %s19
        %s543 = smul.u32 4, %s19
        %v544 = vld [vmem:[%s492] sm:$0x3f]
        %v545 = vld [vmem:[%s492 + $0x8] sm:$0x3f]
        %v546 = vld [vmem:[%s492 + $0x10] sm:$0x3f]
        %v547 = vld [vmem:[%s492 + $0x18] sm:$0x3f]
        %v548 = vld [vmem:[%s499] sm:$0x3f]
        %v549 = vld [vmem:[%s499 + $0x8] sm:$0x3f]
        %v550 = vld [vmem:[%s499 + $0x10] sm:$0x3f]
        %v551 = vld [vmem:[%s499 + $0x18] sm:$0x3f]
        %v552 = vmul.f32 %v544, %v548
        %v553 = vmul.f32 %v545, %v549
        %v554 = vmul.f32 %v546, %v550
        %v555 = vmul.f32 %v547, %v551
        %s556 = sld [smem:[#allocation4]]
        %v557 = vstv %s556
        %v558 = vmul.f32 %v557, %v552
        %v559 = vmul.f32 %v557, %v553
        %v560 = vmul.f32 %v557, %v554
        %v561 = vmul.f32 %v557, %v555
        %s562 = sld [smem:[#allocation4 + $0x1]]
        %v563 = vstv %s562
        %v564 = vmul.f32 %v563, %v552
        %v565 = vmul.f32 %v563, %v553
        %v566 = vmul.f32 %v563, %v554
        %v567 = vmul.f32 %v563, %v555
        %s568 = sld [smem:[#allocation4 + $0x2]]
        %v569 = vstv %s568
        %v570 = vmul.f32 %v569, %v552
        %v571 = vmul.f32 %v569, %v553
        %v572 = vmul.f32 %v569, %v554
        %v573 = vmul.f32 %v569, %v555
        %s574 = sld [smem:[#allocation4 + $0x3]]
        %v575 = vstv %s574
        %v576 = vmul.f32 %v575, %v552
        %v577 = vmul.f32 %v575, %v553
        %v578 = vmul.f32 %v575, %v554
        %v579 = vmul.f32 %v575, %v555
        %s580 = sld [smem:[#allocation4 + $0x4]]
        %v581 = vstv %s580
        %v582 = vmul.f32 %v581, %v552
        %v583 = vmul.f32 %v581, %v553
        %v584 = vmul.f32 %v581, %v554
        %v585 = vmul.f32 %v581, %v555
        %s586 = sld [smem:[#allocation4 + $0x5]]
        %v587 = vstv %s586
        %v588 = vmul.f32 %v587, %v552
        %v589 = vmul.f32 %v587, %v553
        %v590 = vmul.f32 %v587, %v554
        %v591 = vmul.f32 %v587, %v555
        %s592 = sld [smem:[#allocation4 + $0x6]]
        %v593 = vstv %s592
        %v594 = vmul.f32 %v593, %v552
        %v595 = vmul.f32 %v593, %v553
        %v596 = vmul.f32 %v593, %v554
        %v597 = vmul.f32 %v593, %v555
        %s598 = sld [smem:[#allocation4 + $0x7]]
        %v599 = vstv %s598
        %v600 = vmul.f32 %v599, %v552
        %v601 = vmul.f32 %v599, %v553
        %v602 = vmul.f32 %v599, %v554
        %v603 = vmul.f32 %v599, %v555
        %s604 = sld [smem:[#allocation4 + $0x8]]
        %v605 = vstv %s604
        %v606 = vmul.f32 %v605, %v552
        %v607 = vmul.f32 %v605, %v553
        %v608 = vmul.f32 %v605, %v554
        %v609 = vmul.f32 %v605, %v555
        %s610 = scalar_lea.vmem %s492, 32 [#allocation2]
        %v611 = vld [vmem:[%s610] sm:$0x3f]
        %v612 = vld [vmem:[%s610 + $0x8] sm:$0x3f]
        %v613 = vld [vmem:[%s610 + $0x10] sm:$0x3f]
        %v614 = vld [vmem:[%s610 + $0x18] sm:$0x3f]
        %s615 = scalar_lea.vmem %s499, 32 [#allocation3]
        %v616 = vld [vmem:[%s615] sm:$0x3f]
        %v617 = vld [vmem:[%s615 + $0x8] sm:$0x3f]
        %v618 = vld [vmem:[%s615 + $0x10] sm:$0x3f]
        %v619 = vld [vmem:[%s615 + $0x18] sm:$0x3f]
        %v620 = vmul.f32 %v611, %v616
        %v621 = vmul.f32 %v612, %v617
        %v622 = vmul.f32 %v613, %v618
        %v623 = vmul.f32 %v614, %v619
        %s624 = sld [smem:[#allocation4 + $0x9]]
        %v625 = vstv %s624
        %v626 = vmul.f32 %v625, %v620
        %v627 = vmul.f32 %v625, %v621
        %v628 = vmul.f32 %v625, %v622
        %v629 = vmul.f32 %v625, %v623
        %v630 = vadd.f32 %v558, %v626
        %v631 = vadd.f32 %v559, %v627
        %v632 = vadd.f32 %v560, %v628
        %v633 = vadd.f32 %v561, %v629
        %s634 = sld [smem:[#allocation4 + $0xa]]
        %v635 = vstv %s634
        %v636 = vmul.f32 %v635, %v620
        %v637 = vmul.f32 %v635, %v621
        %v638 = vmul.f32 %v635, %v622
        %v639 = vmul.f32 %v635, %v623
        %v640 = vadd.f32 %v564, %v636
        %v641 = vadd.f32 %v565, %v637
        %v642 = vadd.f32 %v566, %v638
        %v643 = vadd.f32 %v567, %v639
        %s644 = sld [smem:[#allocation4 + $0xb]]
        %v645 = vstv %s644
        %v646 = vmul.f32 %v645, %v620
        %v647 = vmul.f32 %v645, %v621
        %v648 = vmul.f32 %v645, %v622
        %v649 = vmul.f32 %v645, %v623
        %v650 = vadd.f32 %v570, %v646
        %v651 = vadd.f32 %v571, %v647
        %v652 = vadd.f32 %v572, %v648
        %v653 = vadd.f32 %v573, %v649
        %s654 = sld [smem:[#allocation4 + $0xc]]
        %v655 = vstv %s654
        %v656 = vmul.f32 %v655, %v620
        %v657 = vmul.f32 %v655, %v621
        %v658 = vmul.f32 %v655, %v622
        %v659 = vmul.f32 %v655, %v623
        %v660 = vadd.f32 %v576, %v656
        %v661 = vadd.f32 %v577, %v657
        %v662 = vadd.f32 %v578, %v658
        %v663 = vadd.f32 %v579, %v659
        %s664 = sld [smem:[#allocation4 + $0xd]]
        %v665 = vstv %s664
        %v666 = vmul.f32 %v665, %v620
        %v667 = vmul.f32 %v665, %v621
        %v668 = vmul.f32 %v665, %v622
        %v669 = vmul.f32 %v665, %v623
        %v670 = vadd.f32 %v582, %v666
        %v671 = vadd.f32 %v583, %v667
        %v672 = vadd.f32 %v584, %v668
        %v673 = vadd.f32 %v585, %v669
        %s674 = sld [smem:[#allocation4 + $0xe]]
        %v675 = vstv %s674
        %v676 = vmul.f32 %v675, %v620
        %v677 = vmul.f32 %v675, %v621
        %v678 = vmul.f32 %v675, %v622
        %v679 = vmul.f32 %v675, %v623
        %v680 = vadd.f32 %v588, %v676
        %v681 = vadd.f32 %v589, %v677
        %v682 = vadd.f32 %v590, %v678
        %v683 = vadd.f32 %v591, %v679
        %s684 = sld [smem:[#allocation4 + $0xf]]
        %v685 = vstv %s684
        %v686 = vmul.f32 %v685, %v620
        %v687 = vmul.f32 %v685, %v621
        %v688 = vmul.f32 %v685, %v622
        %v689 = vmul.f32 %v685, %v623
        %v690 = vadd.f32 %v594, %v686
        %v691 = vadd.f32 %v595, %v687
        %v692 = vadd.f32 %v596, %v688
        %v693 = vadd.f32 %v597, %v689
        %s694 = sld [smem:[#allocation4 + $0x10]]
        %v695 = vstv %s694
        %v696 = vmul.f32 %v695, %v620
        %v697 = vmul.f32 %v695, %v621
        %v698 = vmul.f32 %v695, %v622
        %v699 = vmul.f32 %v695, %v623
        %v700 = vadd.f32 %v600, %v696
        %v701 = vadd.f32 %v601, %v697
        %v702 = vadd.f32 %v602, %v698
        %v703 = vadd.f32 %v603, %v699
        %s704 = sld [smem:[#allocation4 + $0x11]]
        %v705 = vstv %s704
        %v706 = vmul.f32 %v705, %v620
        %v707 = vmul.f32 %v705, %v621
        %v708 = vmul.f32 %v705, %v622
        %v709 = vmul.f32 %v705, %v623
        %v710 = vadd.f32 %v606, %v706
        %v711 = vadd.f32 %v607, %v707
        %v712 = vadd.f32 %v608, %v708
        %v713 = vadd.f32 %v609, %v709
        %s714 = scalar_lea.vmem %s492, 64 [#allocation2]
        %v715 = vld [vmem:[%s714] sm:$0x3f]
        %v716 = vld [vmem:[%s714 + $0x8] sm:$0x3f]
        %v717 = vld [vmem:[%s714 + $0x10] sm:$0x3f]
        %v718 = vld [vmem:[%s714 + $0x18] sm:$0x3f]
        %s719 = scalar_lea.vmem %s499, 64 [#allocation3]
        %v720 = vld [vmem:[%s719] sm:$0x3f]
        %v721 = vld [vmem:[%s719 + $0x8] sm:$0x3f]
        %v722 = vld [vmem:[%s719 + $0x10] sm:$0x3f]
        %v723 = vld [vmem:[%s719 + $0x18] sm:$0x3f]
        %v724 = vmul.f32 %v715, %v720
        %v725 = vmul.f32 %v716, %v721
        %v726 = vmul.f32 %v717, %v722
        %v727 = vmul.f32 %v718, %v723
        %s728 = sld [smem:[#allocation4 + $0x12]]
        %v729 = vstv %s728
        %v730 = vmul.f32 %v729, %v724
        %v731 = vmul.f32 %v729, %v725
        %v732 = vmul.f32 %v729, %v726
        %v733 = vmul.f32 %v729, %v727
        %v734 = vadd.f32 %v630, %v730
        %v735 = vadd.f32 %v631, %v731
        %v736 = vadd.f32 %v632, %v732
        %v737 = vadd.f32 %v633, %v733
        %s738 = sld [smem:[#allocation4 + $0x13]]
        %v739 = vstv %s738
        %v740 = vmul.f32 %v739, %v724
        %v741 = vmul.f32 %v739, %v725
        %v742 = vmul.f32 %v739, %v726
        %v743 = vmul.f32 %v739, %v727
        %v744 = vadd.f32 %v640, %v740
        %v745 = vadd.f32 %v641, %v741
        %v746 = vadd.f32 %v642, %v742
        %v747 = vadd.f32 %v643, %v743
        %s748 = sld [smem:[#allocation4 + $0x14]]
        %v749 = vstv %s748
        %v750 = vmul.f32 %v749, %v724
        %v751 = vmul.f32 %v749, %v725
        %v752 = vmul.f32 %v749, %v726
        %v753 = vmul.f32 %v749, %v727
        %v754 = vadd.f32 %v650, %v750
        %v755 = vadd.f32 %v651, %v751
        %v756 = vadd.f32 %v652, %v752
        %v757 = vadd.f32 %v653, %v753
        %s758 = sld [smem:[#allocation4 + $0x15]]
        %v759 = vstv %s758
        %v760 = vmul.f32 %v759, %v724
        %v761 = vmul.f32 %v759, %v725
        %v762 = vmul.f32 %v759, %v726
        %v763 = vmul.f32 %v759, %v727
        %v764 = vadd.f32 %v660, %v760
        %v765 = vadd.f32 %v661, %v761
        %v766 = vadd.f32 %v662, %v762
        %v767 = vadd.f32 %v663, %v763
        %s768 = sld [smem:[#allocation4 + $0x16]]
        %v769 = vstv %s768
        %v770 = vmul.f32 %v769, %v724
        %v771 = vmul.f32 %v769, %v725
        %v772 = vmul.f32 %v769, %v726
        %v773 = vmul.f32 %v769, %v727
        %v774 = vadd.f32 %v670, %v770
        %v775 = vadd.f32 %v671, %v771
        %v776 = vadd.f32 %v672, %v772
        %v777 = vadd.f32 %v673, %v773
        %s778 = sld [smem:[#allocation4 + $0x17]]
        %v779 = vstv %s778
        %v780 = vmul.f32 %v779, %v724
        %v781 = vmul.f32 %v779, %v725
        %v782 = vmul.f32 %v779, %v726
        %v783 = vmul.f32 %v779, %v727
        %v784 = vadd.f32 %v680, %v780
        %v785 = vadd.f32 %v681, %v781
        %v786 = vadd.f32 %v682, %v782
        %v787 = vadd.f32 %v683, %v783
        %s788 = sld [smem:[#allocation4 + $0x18]]
        %v789 = vstv %s788
        %v790 = vmul.f32 %v789, %v724
        %v791 = vmul.f32 %v789, %v725
        %v792 = vmul.f32 %v789, %v726
        %v793 = vmul.f32 %v789, %v727
        %v794 = vadd.f32 %v690, %v790
        %v795 = vadd.f32 %v691, %v791
        %v796 = vadd.f32 %v692, %v792
        %v797 = vadd.f32 %v693, %v793
        %s798 = sld [smem:[#allocation4 + $0x19]]
        %v799 = vstv %s798
        %v800 = vmul.f32 %v799, %v724
        %v801 = vmul.f32 %v799, %v725
        %v802 = vmul.f32 %v799, %v726
        %v803 = vmul.f32 %v799, %v727
        %v804 = vadd.f32 %v700, %v800
        %v805 = vadd.f32 %v701, %v801
        %v806 = vadd.f32 %v702, %v802
        %v807 = vadd.f32 %v703, %v803
        %s808 = sld [smem:[#allocation4 + $0x1a]]
        %v809 = vstv %s808
        %v810 = vmul.f32 %v809, %v724
        %v811 = vmul.f32 %v809, %v725
        %v812 = vmul.f32 %v809, %v726
        %v813 = vmul.f32 %v809, %v727
        %v814 = vadd.f32 %v710, %v810
        %v815 = vadd.f32 %v711, %v811
        %v816 = vadd.f32 %v712, %v812
        %v817 = vadd.f32 %v713, %v813
        %s818 = scalar_lea.vmem %s492, 96 [#allocation2]
        %v819 = vld [vmem:[%s818] sm:$0x3f]
        %v820 = vld [vmem:[%s818 + $0x8] sm:$0x3f]
        %v821 = vld [vmem:[%s818 + $0x10] sm:$0x3f]
        %v822 = vld [vmem:[%s818 + $0x18] sm:$0x3f]
        %s823 = scalar_lea.vmem %s499, 96 [#allocation3]
        %v824 = vld [vmem:[%s823] sm:$0x3f]
        %v825 = vld [vmem:[%s823 + $0x8] sm:$0x3f]
        %v826 = vld [vmem:[%s823 + $0x10] sm:$0x3f]
        %v827 = vld [vmem:[%s823 + $0x18] sm:$0x3f]
        %v828 = vmul.f32 %v819, %v824
        %v829 = vmul.f32 %v820, %v825
        %v830 = vmul.f32 %v821, %v826
        %v831 = vmul.f32 %v822, %v827
        %s832 = sld [smem:[#allocation4 + $0x1b]]
        %v833 = vstv %s832
        %v834 = vmul.f32 %v833, %v828
        %v835 = vmul.f32 %v833, %v829
        %v836 = vmul.f32 %v833, %v830
        %v837 = vmul.f32 %v833, %v831
        %v838 = vadd.f32 %v734, %v834
        %v839 = vadd.f32 %v735, %v835
        %v840 = vadd.f32 %v736, %v836
        %v841 = vadd.f32 %v737, %v837
        %s842 = sld [smem:[#allocation4 + $0x1c]]
        %v843 = vstv %s842
        %v844 = vmul.f32 %v843, %v828
        %v845 = vmul.f32 %v843, %v829
        %v846 = vmul.f32 %v843, %v830
        %v847 = vmul.f32 %v843, %v831
        %v848 = vadd.f32 %v744, %v844
        %v849 = vadd.f32 %v745, %v845
        %v850 = vadd.f32 %v746, %v846
        %v851 = vadd.f32 %v747, %v847
        %s852 = sld [smem:[#allocation4 + $0x1d]]
        %v853 = vstv %s852
        %v854 = vmul.f32 %v853, %v828
        %v855 = vmul.f32 %v853, %v829
        %v856 = vmul.f32 %v853, %v830
        %v857 = vmul.f32 %v853, %v831
        %v858 = vadd.f32 %v754, %v854
        %v859 = vadd.f32 %v755, %v855
        %v860 = vadd.f32 %v756, %v856
        %v861 = vadd.f32 %v757, %v857
        %s862 = sld [smem:[#allocation4 + $0x1e]]
        %v863 = vstv %s862
        %v864 = vmul.f32 %v863, %v828
        %v865 = vmul.f32 %v863, %v829
        %v866 = vmul.f32 %v863, %v830
        %v867 = vmul.f32 %v863, %v831
        %v868 = vadd.f32 %v764, %v864
        %v869 = vadd.f32 %v765, %v865
        %v870 = vadd.f32 %v766, %v866
        %v871 = vadd.f32 %v767, %v867
        %s872 = sld [smem:[#allocation4 + $0x1f]]
        %v873 = vstv %s872
        %v874 = vmul.f32 %v873, %v828
        %v875 = vmul.f32 %v873, %v829
        %v876 = vmul.f32 %v873, %v830
        %v877 = vmul.f32 %v873, %v831
        %v878 = vadd.f32 %v774, %v874
        %v879 = vadd.f32 %v775, %v875
        %v880 = vadd.f32 %v776, %v876
        %v881 = vadd.f32 %v777, %v877
        %s882 = sld [smem:[#allocation4 + $0x20]]
        %v883 = vstv %s882
        %v884 = vmul.f32 %v883, %v828
        %v885 = vmul.f32 %v883, %v829
        %v886 = vmul.f32 %v883, %v830
        %v887 = vmul.f32 %v883, %v831
        %v888 = vadd.f32 %v784, %v884
        %v889 = vadd.f32 %v785, %v885
        %v890 = vadd.f32 %v786, %v886
        %v891 = vadd.f32 %v787, %v887
        %s892 = sld [smem:[#allocation4 + $0x21]]
        %v893 = vstv %s892
        %v894 = vmul.f32 %v893, %v828
        %v895 = vmul.f32 %v893, %v829
        %v896 = vmul.f32 %v893, %v830
        %v897 = vmul.f32 %v893, %v831
        %v898 = vadd.f32 %v794, %v894
        %v899 = vadd.f32 %v795, %v895
        %v900 = vadd.f32 %v796, %v896
        %v901 = vadd.f32 %v797, %v897
        %s902 = sld [smem:[#allocation4 + $0x22]]
        %v903 = vstv %s902
        %v904 = vmul.f32 %v903, %v828
        %v905 = vmul.f32 %v903, %v829
        %v906 = vmul.f32 %v903, %v830
        %v907 = vmul.f32 %v903, %v831
        %v908 = vadd.f32 %v804, %v904
        %v909 = vadd.f32 %v805, %v905
        %v910 = vadd.f32 %v806, %v906
        %v911 = vadd.f32 %v807, %v907
        %s912 = sld [smem:[#allocation4 + $0x23]]
        %v913 = vstv %s912
        %v914 = vmul.f32 %v913, %v828
        %v915 = vmul.f32 %v913, %v829
        %v916 = vmul.f32 %v913, %v830
        %v917 = vmul.f32 %v913, %v831
        %v918 = vadd.f32 %v814, %v914
        %v919 = vadd.f32 %v815, %v915
        %v920 = vadd.f32 %v816, %v916
        %v921 = vadd.f32 %v817, %v917
        %s922 = scalar_lea.vmem %s492, 128 [#allocation2]
        %v923 = vld [vmem:[%s922] sm:$0x3f]
        %v924 = vld [vmem:[%s922 + $0x8] sm:$0x3f]
        %v925 = vld [vmem:[%s922 + $0x10] sm:$0x3f]
        %v926 = vld [vmem:[%s922 + $0x18] sm:$0x3f]
        %s927 = scalar_lea.vmem %s499, 128 [#allocation3]
        %v928 = vld [vmem:[%s927] sm:$0x3f]
        %v929 = vld [vmem:[%s927 + $0x8] sm:$0x3f]
        %v930 = vld [vmem:[%s927 + $0x10] sm:$0x3f]
        %v931 = vld [vmem:[%s927 + $0x18] sm:$0x3f]
        %v932 = vmul.f32 %v923, %v928
        %v933 = vmul.f32 %v924, %v929
        %v934 = vmul.f32 %v925, %v930
        %v935 = vmul.f32 %v926, %v931
        %s936 = sld [smem:[#allocation4 + $0x24]]
        %v937 = vstv %s936
        %v938 = vmul.f32 %v937, %v932
        %v939 = vmul.f32 %v937, %v933
        %v940 = vmul.f32 %v937, %v934
        %v941 = vmul.f32 %v937, %v935
        %v942 = vadd.f32 %v838, %v938
        %v943 = vadd.f32 %v839, %v939
        %v944 = vadd.f32 %v840, %v940
        %v945 = vadd.f32 %v841, %v941
        %s946 = sld [smem:[#allocation4 + $0x25]]
        %v947 = vstv %s946
        %v948 = vmul.f32 %v947, %v932
        %v949 = vmul.f32 %v947, %v933
        %v950 = vmul.f32 %v947, %v934
        %v951 = vmul.f32 %v947, %v935
        %v952 = vadd.f32 %v848, %v948
        %v953 = vadd.f32 %v849, %v949
        %v954 = vadd.f32 %v850, %v950
        %v955 = vadd.f32 %v851, %v951
        %s956 = sld [smem:[#allocation4 + $0x26]]
        %v957 = vstv %s956
        %v958 = vmul.f32 %v957, %v932
        %v959 = vmul.f32 %v957, %v933
        %v960 = vmul.f32 %v957, %v934
        %v961 = vmul.f32 %v957, %v935
        %v962 = vadd.f32 %v858, %v958
        %v963 = vadd.f32 %v859, %v959
        %v964 = vadd.f32 %v860, %v960
        %v965 = vadd.f32 %v861, %v961
        %s966 = sld [smem:[#allocation4 + $0x27]]
        %v967 = vstv %s966
        %v968 = vmul.f32 %v967, %v932
        %v969 = vmul.f32 %v967, %v933
        %v970 = vmul.f32 %v967, %v934
        %v971 = vmul.f32 %v967, %v935
        %v972 = vadd.f32 %v868, %v968
        %v973 = vadd.f32 %v869, %v969
        %v974 = vadd.f32 %v870, %v970
        %v975 = vadd.f32 %v871, %v971
        %s976 = sld [smem:[#allocation4 + $0x28]]
        %v977 = vstv %s976
        %v978 = vmul.f32 %v977, %v932
        %v979 = vmul.f32 %v977, %v933
        %v980 = vmul.f32 %v977, %v934
        %v981 = vmul.f32 %v977, %v935
        %v982 = vadd.f32 %v878, %v978
        %v983 = vadd.f32 %v879, %v979
        %v984 = vadd.f32 %v880, %v980
        %v985 = vadd.f32 %v881, %v981
        %s986 = sld [smem:[#allocation4 + $0x29]]
        %v987 = vstv %s986
        %v988 = vmul.f32 %v987, %v932
        %v989 = vmul.f32 %v987, %v933
        %v990 = vmul.f32 %v987, %v934
        %v991 = vmul.f32 %v987, %v935
        %v992 = vadd.f32 %v888, %v988
        %v993 = vadd.f32 %v889, %v989
        %v994 = vadd.f32 %v890, %v990
        %v995 = vadd.f32 %v891, %v991
        %s996 = sld [smem:[#allocation4 + $0x2a]]
        %v997 = vstv %s996
        %v998 = vmul.f32 %v997, %v932
        %v999 = vmul.f32 %v997, %v933
        %v1000 = vmul.f32 %v997, %v934
        %v1001 = vmul.f32 %v997, %v935
        %v1002 = vadd.f32 %v898, %v998
        %v1003 = vadd.f32 %v899, %v999
        %v1004 = vadd.f32 %v900, %v1000
        %v1005 = vadd.f32 %v901, %v1001
        %s1006 = sld [smem:[#allocation4 + $0x2b]]
        %v1007 = vstv %s1006
        %v1008 = vmul.f32 %v1007, %v932
        %v1009 = vmul.f32 %v1007, %v933
        %v1010 = vmul.f32 %v1007, %v934
        %v1011 = vmul.f32 %v1007, %v935
        %v1012 = vadd.f32 %v908, %v1008
        %v1013 = vadd.f32 %v909, %v1009
        %v1014 = vadd.f32 %v910, %v1010
        %v1015 = vadd.f32 %v911, %v1011
        %s1016 = sld [smem:[#allocation4 + $0x2c]]
        %v1017 = vstv %s1016
        %v1018 = vmul.f32 %v1017, %v932
        %v1019 = vmul.f32 %v1017, %v933
        %v1020 = vmul.f32 %v1017, %v934
        %v1021 = vmul.f32 %v1017, %v935
        %v1022 = vadd.f32 %v918, %v1018
        %v1023 = vadd.f32 %v919, %v1019
        %v1024 = vadd.f32 %v920, %v1020
        %v1025 = vadd.f32 %v921, %v1021
        %s1026 = scalar_lea.vmem %s492, 160 [#allocation2]
        %v1027 = vld [vmem:[%s1026] sm:$0x3f]
        %v1028 = vld [vmem:[%s1026 + $0x8] sm:$0x3f]
        %v1029 = vld [vmem:[%s1026 + $0x10] sm:$0x3f]
        %v1030 = vld [vmem:[%s1026 + $0x18] sm:$0x3f]
        %s1031 = scalar_lea.vmem %s499, 160 [#allocation3]
        %v1032 = vld [vmem:[%s1031] sm:$0x3f]
        %v1033 = vld [vmem:[%s1031 + $0x8] sm:$0x3f]
        %v1034 = vld [vmem:[%s1031 + $0x10] sm:$0x3f]
        %v1035 = vld [vmem:[%s1031 + $0x18] sm:$0x3f]
        %v1036 = vmul.f32 %v1027, %v1032
        %v1037 = vmul.f32 %v1028, %v1033
        %v1038 = vmul.f32 %v1029, %v1034
        %v1039 = vmul.f32 %v1030, %v1035
        %s1040 = sld [smem:[#allocation4 + $0x2d]]
        %v1041 = vstv %s1040
        %v1042 = vmul.f32 %v1041, %v1036
        %v1043 = vmul.f32 %v1041, %v1037
        %v1044 = vmul.f32 %v1041, %v1038
        %v1045 = vmul.f32 %v1041, %v1039
        %v1046 = vadd.f32 %v942, %v1042
        %v1047 = vadd.f32 %v943, %v1043
        %v1048 = vadd.f32 %v944, %v1044
        %v1049 = vadd.f32 %v945, %v1045
        %s1050 = sld [smem:[#allocation4 + $0x2e]]
        %v1051 = vstv %s1050
        %v1052 = vmul.f32 %v1051, %v1036
        %v1053 = vmul.f32 %v1051, %v1037
        %v1054 = vmul.f32 %v1051, %v1038
        %v1055 = vmul.f32 %v1051, %v1039
        %v1056 = vadd.f32 %v952, %v1052
        %v1057 = vadd.f32 %v953, %v1053
        %v1058 = vadd.f32 %v954, %v1054
        %v1059 = vadd.f32 %v955, %v1055
        %s1060 = sld [smem:[#allocation4 + $0x2f]]
        %v1061 = vstv %s1060
        %v1062 = vmul.f32 %v1061, %v1036
        %v1063 = vmul.f32 %v1061, %v1037
        %v1064 = vmul.f32 %v1061, %v1038
        %v1065 = vmul.f32 %v1061, %v1039
        %v1066 = vadd.f32 %v962, %v1062
        %v1067 = vadd.f32 %v963, %v1063
        %v1068 = vadd.f32 %v964, %v1064
        %v1069 = vadd.f32 %v965, %v1065
        %s1070 = sld [smem:[#allocation4 + $0x30]]
        %v1071 = vstv %s1070
        %v1072 = vmul.f32 %v1071, %v1036
        %v1073 = vmul.f32 %v1071, %v1037
        %v1074 = vmul.f32 %v1071, %v1038
        %v1075 = vmul.f32 %v1071, %v1039
        %v1076 = vadd.f32 %v972, %v1072
        %v1077 = vadd.f32 %v973, %v1073
        %v1078 = vadd.f32 %v974, %v1074
        %v1079 = vadd.f32 %v975, %v1075
        %s1080 = sld [smem:[#allocation4 + $0x31]]
        %v1081 = vstv %s1080
        %v1082 = vmul.f32 %v1081, %v1036
        %v1083 = vmul.f32 %v1081, %v1037
        %v1084 = vmul.f32 %v1081, %v1038
        %v1085 = vmul.f32 %v1081, %v1039
        %v1086 = vadd.f32 %v982, %v1082
        %v1087 = vadd.f32 %v983, %v1083
        %v1088 = vadd.f32 %v984, %v1084
        %v1089 = vadd.f32 %v985, %v1085
        %s1090 = sld [smem:[#allocation4 + $0x32]]
        %v1091 = vstv %s1090
        %v1092 = vmul.f32 %v1091, %v1036
        %v1093 = vmul.f32 %v1091, %v1037
        %v1094 = vmul.f32 %v1091, %v1038
        %v1095 = vmul.f32 %v1091, %v1039
        %v1096 = vadd.f32 %v992, %v1092
        %v1097 = vadd.f32 %v993, %v1093
        %v1098 = vadd.f32 %v994, %v1094
        %v1099 = vadd.f32 %v995, %v1095
        %s1100 = sld [smem:[#allocation4 + $0x33]]
        %v1101 = vstv %s1100
        %v1102 = vmul.f32 %v1101, %v1036
        %v1103 = vmul.f32 %v1101, %v1037
        %v1104 = vmul.f32 %v1101, %v1038
        %v1105 = vmul.f32 %v1101, %v1039
        %v1106 = vadd.f32 %v1002, %v1102
        %v1107 = vadd.f32 %v1003, %v1103
        %v1108 = vadd.f32 %v1004, %v1104
        %v1109 = vadd.f32 %v1005, %v1105
        %s1110 = sld [smem:[#allocation4 + $0x34]]
        %v1111 = vstv %s1110
        %v1112 = vmul.f32 %v1111, %v1036
        %v1113 = vmul.f32 %v1111, %v1037
        %v1114 = vmul.f32 %v1111, %v1038
        %v1115 = vmul.f32 %v1111, %v1039
        %v1116 = vadd.f32 %v1012, %v1112
        %v1117 = vadd.f32 %v1013, %v1113
        %v1118 = vadd.f32 %v1014, %v1114
        %v1119 = vadd.f32 %v1015, %v1115
        %s1120 = sld [smem:[#allocation4 + $0x35]]
        %v1121 = vstv %s1120
        %v1122 = vmul.f32 %v1121, %v1036
        %v1123 = vmul.f32 %v1121, %v1037
        %v1124 = vmul.f32 %v1121, %v1038
        %v1125 = vmul.f32 %v1121, %v1039
        %v1126 = vadd.f32 %v1022, %v1122
        %v1127 = vadd.f32 %v1023, %v1123
        %v1128 = vadd.f32 %v1024, %v1124
        %v1129 = vadd.f32 %v1025, %v1125
        %s1130 = scalar_lea.vmem %s492, 192 [#allocation2]
        %v1131 = vld [vmem:[%s1130] sm:$0x3f]
        %v1132 = vld [vmem:[%s1130 + $0x8] sm:$0x3f]
        %v1133 = vld [vmem:[%s1130 + $0x10] sm:$0x3f]
        %v1134 = vld [vmem:[%s1130 + $0x18] sm:$0x3f]
        %s1135 = scalar_lea.vmem %s499, 192 [#allocation3]
        %v1136 = vld [vmem:[%s1135] sm:$0x3f]
        %v1137 = vld [vmem:[%s1135 + $0x8] sm:$0x3f]
        %v1138 = vld [vmem:[%s1135 + $0x10] sm:$0x3f]
        %v1139 = vld [vmem:[%s1135 + $0x18] sm:$0x3f]
        %v1140 = vmul.f32 %v1131, %v1136
        %v1141 = vmul.f32 %v1132, %v1137
        %v1142 = vmul.f32 %v1133, %v1138
        %v1143 = vmul.f32 %v1134, %v1139
        %s1144 = sld [smem:[#allocation4 + $0x36]]
        %v1145 = vstv %s1144
        %v1146 = vmul.f32 %v1145, %v1140
        %v1147 = vmul.f32 %v1145, %v1141
        %v1148 = vmul.f32 %v1145, %v1142
        %v1149 = vmul.f32 %v1145, %v1143
        %v1150 = vadd.f32 %v1046, %v1146
        %v1151 = vadd.f32 %v1047, %v1147
        %v1152 = vadd.f32 %v1048, %v1148
        %v1153 = vadd.f32 %v1049, %v1149
        %s1154 = sld [smem:[#allocation4 + $0x37]]
        %v1155 = vstv %s1154
        %v1156 = vmul.f32 %v1155, %v1140
        %v1157 = vmul.f32 %v1155, %v1141
        %v1158 = vmul.f32 %v1155, %v1142
        %v1159 = vmul.f32 %v1155, %v1143
        %v1160 = vadd.f32 %v1056, %v1156
        %v1161 = vadd.f32 %v1057, %v1157
        %v1162 = vadd.f32 %v1058, %v1158
        %v1163 = vadd.f32 %v1059, %v1159
        %s1164 = sld [smem:[#allocation4 + $0x38]]
        %v1165 = vstv %s1164
        %v1166 = vmul.f32 %v1165, %v1140
        %v1167 = vmul.f32 %v1165, %v1141
        %v1168 = vmul.f32 %v1165, %v1142
        %v1169 = vmul.f32 %v1165, %v1143
        %v1170 = vadd.f32 %v1066, %v1166
        %v1171 = vadd.f32 %v1067, %v1167
        %v1172 = vadd.f32 %v1068, %v1168
        %v1173 = vadd.f32 %v1069, %v1169
        %s1174 = sld [smem:[#allocation4 + $0x39]]
        %v1175 = vstv %s1174
        %v1176 = vmul.f32 %v1175, %v1140
        %v1177 = vmul.f32 %v1175, %v1141
        %v1178 = vmul.f32 %v1175, %v1142
        %v1179 = vmul.f32 %v1175, %v1143
        %v1180 = vadd.f32 %v1076, %v1176
        %v1181 = vadd.f32 %v1077, %v1177
        %v1182 = vadd.f32 %v1078, %v1178
        %v1183 = vadd.f32 %v1079, %v1179
        %s1184 = sld [smem:[#allocation4 + $0x3a]]
        %v1185 = vstv %s1184
        %v1186 = vmul.f32 %v1185, %v1140
        %v1187 = vmul.f32 %v1185, %v1141
        %v1188 = vmul.f32 %v1185, %v1142
        %v1189 = vmul.f32 %v1185, %v1143
        %v1190 = vadd.f32 %v1086, %v1186
        %v1191 = vadd.f32 %v1087, %v1187
        %v1192 = vadd.f32 %v1088, %v1188
        %v1193 = vadd.f32 %v1089, %v1189
        %s1194 = sld [smem:[#allocation4 + $0x3b]]
        %v1195 = vstv %s1194
        %v1196 = vmul.f32 %v1195, %v1140
        %v1197 = vmul.f32 %v1195, %v1141
        %v1198 = vmul.f32 %v1195, %v1142
        %v1199 = vmul.f32 %v1195, %v1143
        %v1200 = vadd.f32 %v1096, %v1196
        %v1201 = vadd.f32 %v1097, %v1197
        %v1202 = vadd.f32 %v1098, %v1198
        %v1203 = vadd.f32 %v1099, %v1199
        %s1204 = sld [smem:[#allocation4 + $0x3c]]
        %v1205 = vstv %s1204
        %v1206 = vmul.f32 %v1205, %v1140
        %v1207 = vmul.f32 %v1205, %v1141
        %v1208 = vmul.f32 %v1205, %v1142
        %v1209 = vmul.f32 %v1205, %v1143
        %v1210 = vadd.f32 %v1106, %v1206
        %v1211 = vadd.f32 %v1107, %v1207
        %v1212 = vadd.f32 %v1108, %v1208
        %v1213 = vadd.f32 %v1109, %v1209
        %s1214 = sld [smem:[#allocation4 + $0x3d]]
        %v1215 = vstv %s1214
        %v1216 = vmul.f32 %v1215, %v1140
        %v1217 = vmul.f32 %v1215, %v1141
        %v1218 = vmul.f32 %v1215, %v1142
        %v1219 = vmul.f32 %v1215, %v1143
        %v1220 = vadd.f32 %v1116, %v1216
        %v1221 = vadd.f32 %v1117, %v1217
        %v1222 = vadd.f32 %v1118, %v1218
        %v1223 = vadd.f32 %v1119, %v1219
        %s1224 = sld [smem:[#allocation4 + $0x3e]]
        %v1225 = vstv %s1224
        %v1226 = vmul.f32 %v1225, %v1140
        %v1227 = vmul.f32 %v1225, %v1141
        %v1228 = vmul.f32 %v1225, %v1142
        %v1229 = vmul.f32 %v1225, %v1143
        %v1230 = vadd.f32 %v1126, %v1226
        %v1231 = vadd.f32 %v1127, %v1227
        %v1232 = vadd.f32 %v1128, %v1228
        %v1233 = vadd.f32 %v1129, %v1229
        %s1234 = scalar_lea.vmem %s492, 224 [#allocation2]
        %v1235 = vld [vmem:[%s1234] sm:$0x3f]
        %v1236 = vld [vmem:[%s1234 + $0x8] sm:$0x3f]
        %v1237 = vld [vmem:[%s1234 + $0x10] sm:$0x3f]
        %v1238 = vld [vmem:[%s1234 + $0x18] sm:$0x3f]
        %s1239 = scalar_lea.vmem %s499, 224 [#allocation3]
        %v1240 = vld [vmem:[%s1239] sm:$0x3f]
        %v1241 = vld [vmem:[%s1239 + $0x8] sm:$0x3f]
        %v1242 = vld [vmem:[%s1239 + $0x10] sm:$0x3f]
        %v1243 = vld [vmem:[%s1239 + $0x18] sm:$0x3f]
        %v1244 = vmul.f32 %v1235, %v1240
        %v1245 = vmul.f32 %v1236, %v1241
        %v1246 = vmul.f32 %v1237, %v1242
        %v1247 = vmul.f32 %v1238, %v1243
        %s1248 = sld [smem:[#allocation4 + $0x3f]]
        %v1249 = vstv %s1248
        %v1250 = vmul.f32 %v1249, %v1244
        %v1251 = vmul.f32 %v1249, %v1245
        %v1252 = vmul.f32 %v1249, %v1246
        %v1253 = vmul.f32 %v1249, %v1247
        %v1254 = vadd.f32 %v1150, %v1250
        %v1255 = vadd.f32 %v1151, %v1251
        %v1256 = vadd.f32 %v1152, %v1252
        %v1257 = vadd.f32 %v1153, %v1253
        %s1258 = sld [smem:[#allocation4 + $0x40]]
        %v1259 = vstv %s1258
        %v1260 = vmul.f32 %v1259, %v1244
        %v1261 = vmul.f32 %v1259, %v1245
        %v1262 = vmul.f32 %v1259, %v1246
        %v1263 = vmul.f32 %v1259, %v1247
        %v1264 = vadd.f32 %v1160, %v1260
        %v1265 = vadd.f32 %v1161, %v1261
        %v1266 = vadd.f32 %v1162, %v1262
        %v1267 = vadd.f32 %v1163, %v1263
        %s1268 = sld [smem:[#allocation4 + $0x41]]
        %v1269 = vstv %s1268
        %v1270 = vmul.f32 %v1269, %v1244
        %v1271 = vmul.f32 %v1269, %v1245
        %v1272 = vmul.f32 %v1269, %v1246
        %v1273 = vmul.f32 %v1269, %v1247
        %v1274 = vadd.f32 %v1170, %v1270
        %v1275 = vadd.f32 %v1171, %v1271
        %v1276 = vadd.f32 %v1172, %v1272
        %v1277 = vadd.f32 %v1173, %v1273
        %s1278 = sld [smem:[#allocation4 + $0x42]]
        %v1279 = vstv %s1278
        %v1280 = vmul.f32 %v1279, %v1244
        %v1281 = vmul.f32 %v1279, %v1245
        %v1282 = vmul.f32 %v1279, %v1246
        %v1283 = vmul.f32 %v1279, %v1247
        %v1284 = vadd.f32 %v1180, %v1280
        %v1285 = vadd.f32 %v1181, %v1281
        %v1286 = vadd.f32 %v1182, %v1282
        %v1287 = vadd.f32 %v1183, %v1283
        %s1288 = sld [smem:[#allocation4 + $0x43]]
        %v1289 = vstv %s1288
        %v1290 = vmul.f32 %v1289, %v1244
        %v1291 = vmul.f32 %v1289, %v1245
        %v1292 = vmul.f32 %v1289, %v1246
        %v1293 = vmul.f32 %v1289, %v1247
        %v1294 = vadd.f32 %v1190, %v1290
        %v1295 = vadd.f32 %v1191, %v1291
        %v1296 = vadd.f32 %v1192, %v1292
        %v1297 = vadd.f32 %v1193, %v1293
        %s1298 = sld [smem:[#allocation4 + $0x44]]
        %v1299 = vstv %s1298
        %v1300 = vmul.f32 %v1299, %v1244
        %v1301 = vmul.f32 %v1299, %v1245
        %v1302 = vmul.f32 %v1299, %v1246
        %v1303 = vmul.f32 %v1299, %v1247
        %v1304 = vadd.f32 %v1200, %v1300
        %v1305 = vadd.f32 %v1201, %v1301
        %v1306 = vadd.f32 %v1202, %v1302
        %v1307 = vadd.f32 %v1203, %v1303
        %s1308 = sld [smem:[#allocation4 + $0x45]]
        %v1309 = vstv %s1308
        %v1310 = vmul.f32 %v1309, %v1244
        %v1311 = vmul.f32 %v1309, %v1245
        %v1312 = vmul.f32 %v1309, %v1246
        %v1313 = vmul.f32 %v1309, %v1247
        %v1314 = vadd.f32 %v1210, %v1310
        %v1315 = vadd.f32 %v1211, %v1311
        %v1316 = vadd.f32 %v1212, %v1312
        %v1317 = vadd.f32 %v1213, %v1313
        %s1318 = sld [smem:[#allocation4 + $0x46]]
        %v1319 = vstv %s1318
        %v1320 = vmul.f32 %v1319, %v1244
        %v1321 = vmul.f32 %v1319, %v1245
        %v1322 = vmul.f32 %v1319, %v1246
        %v1323 = vmul.f32 %v1319, %v1247
        %v1324 = vadd.f32 %v1220, %v1320
        %v1325 = vadd.f32 %v1221, %v1321
        %v1326 = vadd.f32 %v1222, %v1322
        %v1327 = vadd.f32 %v1223, %v1323
        %s1328 = sld [smem:[#allocation4 + $0x47]]
        %v1329 = vstv %s1328
        %v1330 = vmul.f32 %v1329, %v1244
        %v1331 = vmul.f32 %v1329, %v1245
        %v1332 = vmul.f32 %v1329, %v1246
        %v1333 = vmul.f32 %v1329, %v1247
        %v1334 = vadd.f32 %v1230, %v1330
        %v1335 = vadd.f32 %v1231, %v1331
        %v1336 = vadd.f32 %v1232, %v1332
        %v1337 = vadd.f32 %v1233, %v1333
        %s1338 = scalar_lea.vmem %s492, 256 [#allocation2]
        %v1339 = vld [vmem:[%s1338] sm:$0x3f]
        %v1340 = vld [vmem:[%s1338 + $0x8] sm:$0x3f]
        %v1341 = vld [vmem:[%s1338 + $0x10] sm:$0x3f]
        %v1342 = vld [vmem:[%s1338 + $0x18] sm:$0x3f]
        %s1343 = scalar_lea.vmem %s499, 256 [#allocation3]
        %v1344 = vld [vmem:[%s1343] sm:$0x3f]
        %v1345 = vld [vmem:[%s1343 + $0x8] sm:$0x3f]
        %v1346 = vld [vmem:[%s1343 + $0x10] sm:$0x3f]
        %v1347 = vld [vmem:[%s1343 + $0x18] sm:$0x3f]
        %v1348 = vmul.f32 %v1339, %v1344
        %v1349 = vmul.f32 %v1340, %v1345
        %v1350 = vmul.f32 %v1341, %v1346
        %v1351 = vmul.f32 %v1342, %v1347
        %s1352 = sld [smem:[#allocation4 + $0x48]]
        %v1353 = vstv %s1352
        %v1354 = vmul.f32 %v1353, %v1348
        %v1355 = vmul.f32 %v1353, %v1349
        %v1356 = vmul.f32 %v1353, %v1350
        %v1357 = vmul.f32 %v1353, %v1351
        %v1358 = vadd.f32 %v1254, %v1354
        %v1359 = vadd.f32 %v1255, %v1355
        %v1360 = vadd.f32 %v1256, %v1356
        %v1361 = vadd.f32 %v1257, %v1357
        %s1362 = sld [smem:[#allocation4 + $0x49]]
        %v1363 = vstv %s1362
        %v1364 = vmul.f32 %v1363, %v1348
        %v1365 = vmul.f32 %v1363, %v1349
        %v1366 = vmul.f32 %v1363, %v1350
        %v1367 = vmul.f32 %v1363, %v1351
        %v1368 = vadd.f32 %v1264, %v1364
        %v1369 = vadd.f32 %v1265, %v1365
        %v1370 = vadd.f32 %v1266, %v1366
        %v1371 = vadd.f32 %v1267, %v1367
        %s1372 = sld [smem:[#allocation4 + $0x4a]]
        %v1373 = vstv %s1372
        %v1374 = vmul.f32 %v1373, %v1348
        %v1375 = vmul.f32 %v1373, %v1349
        %v1376 = vmul.f32 %v1373, %v1350
        %v1377 = vmul.f32 %v1373, %v1351
        %v1378 = vadd.f32 %v1274, %v1374
        %v1379 = vadd.f32 %v1275, %v1375
        %v1380 = vadd.f32 %v1276, %v1376
        %v1381 = vadd.f32 %v1277, %v1377
        %s1382 = sld [smem:[#allocation4 + $0x4b]]
        %v1383 = vstv %s1382
        %v1384 = vmul.f32 %v1383, %v1348
        %v1385 = vmul.f32 %v1383, %v1349
        %v1386 = vmul.f32 %v1383, %v1350
        %v1387 = vmul.f32 %v1383, %v1351
        %v1388 = vadd.f32 %v1284, %v1384
        %v1389 = vadd.f32 %v1285, %v1385
        %v1390 = vadd.f32 %v1286, %v1386
        %v1391 = vadd.f32 %v1287, %v1387
        %s1392 = sld [smem:[#allocation4 + $0x4c]]
        %v1393 = vstv %s1392
        %v1394 = vmul.f32 %v1393, %v1348
        %v1395 = vmul.f32 %v1393, %v1349
        %v1396 = vmul.f32 %v1393, %v1350
        %v1397 = vmul.f32 %v1393, %v1351
        %v1398 = vadd.f32 %v1294, %v1394
        %v1399 = vadd.f32 %v1295, %v1395
        %v1400 = vadd.f32 %v1296, %v1396
        %v1401 = vadd.f32 %v1297, %v1397
        %s1402 = sld [smem:[#allocation4 + $0x4d]]
        %v1403 = vstv %s1402
        %v1404 = vmul.f32 %v1403, %v1348
        %v1405 = vmul.f32 %v1403, %v1349
        %v1406 = vmul.f32 %v1403, %v1350
        %v1407 = vmul.f32 %v1403, %v1351
        %v1408 = vadd.f32 %v1304, %v1404
        %v1409 = vadd.f32 %v1305, %v1405
        %v1410 = vadd.f32 %v1306, %v1406
        %v1411 = vadd.f32 %v1307, %v1407
        %s1412 = sld [smem:[#allocation4 + $0x4e]]
        %v1413 = vstv %s1412
        %v1414 = vmul.f32 %v1413, %v1348
        %v1415 = vmul.f32 %v1413, %v1349
        %v1416 = vmul.f32 %v1413, %v1350
        %v1417 = vmul.f32 %v1413, %v1351
        %v1418 = vadd.f32 %v1314, %v1414
        %v1419 = vadd.f32 %v1315, %v1415
        %v1420 = vadd.f32 %v1316, %v1416
        %v1421 = vadd.f32 %v1317, %v1417
        %s1422 = sld [smem:[#allocation4 + $0x4f]]
        %v1423 = vstv %s1422
        %v1424 = vmul.f32 %v1423, %v1348
        %v1425 = vmul.f32 %v1423, %v1349
        %v1426 = vmul.f32 %v1423, %v1350
        %v1427 = vmul.f32 %v1423, %v1351
        %v1428 = vadd.f32 %v1324, %v1424
        %v1429 = vadd.f32 %v1325, %v1425
        %v1430 = vadd.f32 %v1326, %v1426
        %v1431 = vadd.f32 %v1327, %v1427
        %s1432 = sld [smem:[#allocation4 + $0x50]]
        %v1433 = vstv %s1432
        %v1434 = vmul.f32 %v1433, %v1348
        %v1435 = vmul.f32 %v1433, %v1349
        %v1436 = vmul.f32 %v1433, %v1350
        %v1437 = vmul.f32 %v1433, %v1351
        %v1438 = vadd.f32 %v1334, %v1434
        %v1439 = vadd.f32 %v1335, %v1435
        %v1440 = vadd.f32 %v1336, %v1436
        %v1441 = vadd.f32 %v1337, %v1437
        %s1442 = scalar_lea.vmem %s492, 288 [#allocation2]
        %v1443 = vld [vmem:[%s1442] sm:$0x3f]
        %v1444 = vld [vmem:[%s1442 + $0x8] sm:$0x3f]
        %v1445 = vld [vmem:[%s1442 + $0x10] sm:$0x3f]
        %v1446 = vld [vmem:[%s1442 + $0x18] sm:$0x3f]
        %s1447 = scalar_lea.vmem %s499, 288 [#allocation3]
        %v1448 = vld [vmem:[%s1447] sm:$0x3f]
        %v1449 = vld [vmem:[%s1447 + $0x8] sm:$0x3f]
        %v1450 = vld [vmem:[%s1447 + $0x10] sm:$0x3f]
        %v1451 = vld [vmem:[%s1447 + $0x18] sm:$0x3f]
        %v1452 = vmul.f32 %v1443, %v1448
        %v1453 = vmul.f32 %v1444, %v1449
        %v1454 = vmul.f32 %v1445, %v1450
        %v1455 = vmul.f32 %v1446, %v1451
        %s1456 = sld [smem:[#allocation4 + $0x51]]
        %v1457 = vstv %s1456
        %v1458 = vmul.f32 %v1457, %v1452
        %v1459 = vmul.f32 %v1457, %v1453
        %v1460 = vmul.f32 %v1457, %v1454
        %v1461 = vmul.f32 %v1457, %v1455
        %v1462 = vadd.f32 %v1358, %v1458
        %v1463 = vadd.f32 %v1359, %v1459
        %v1464 = vadd.f32 %v1360, %v1460
        %v1465 = vadd.f32 %v1361, %v1461
        %s1466 = sld [smem:[#allocation4 + $0x52]]
        %v1467 = vstv %s1466
        %v1468 = vmul.f32 %v1467, %v1452
        %v1469 = vmul.f32 %v1467, %v1453
        %v1470 = vmul.f32 %v1467, %v1454
        %v1471 = vmul.f32 %v1467, %v1455
        %v1472 = vadd.f32 %v1368, %v1468
        %v1473 = vadd.f32 %v1369, %v1469
        %v1474 = vadd.f32 %v1370, %v1470
        %v1475 = vadd.f32 %v1371, %v1471
        %s1476 = sld [smem:[#allocation4 + $0x53]]
        %v1477 = vstv %s1476
        %v1478 = vmul.f32 %v1477, %v1452
        %v1479 = vmul.f32 %v1477, %v1453
        %v1480 = vmul.f32 %v1477, %v1454
        %v1481 = vmul.f32 %v1477, %v1455
        %v1482 = vadd.f32 %v1378, %v1478
        %v1483 = vadd.f32 %v1379, %v1479
        %v1484 = vadd.f32 %v1380, %v1480
        %v1485 = vadd.f32 %v1381, %v1481
        %s1486 = sld [smem:[#allocation4 + $0x54]]
        %v1487 = vstv %s1486
        %v1488 = vmul.f32 %v1487, %v1452
        %v1489 = vmul.f32 %v1487, %v1453
        %v1490 = vmul.f32 %v1487, %v1454
        %v1491 = vmul.f32 %v1487, %v1455
        %v1492 = vadd.f32 %v1388, %v1488
        %v1493 = vadd.f32 %v1389, %v1489
        %v1494 = vadd.f32 %v1390, %v1490
        %v1495 = vadd.f32 %v1391, %v1491
        %s1496 = sld [smem:[#allocation4 + $0x55]]
        %v1497 = vstv %s1496
        %v1498 = vmul.f32 %v1497, %v1452
        %v1499 = vmul.f32 %v1497, %v1453
        %v1500 = vmul.f32 %v1497, %v1454
        %v1501 = vmul.f32 %v1497, %v1455
        %v1502 = vadd.f32 %v1398, %v1498
        %v1503 = vadd.f32 %v1399, %v1499
        %v1504 = vadd.f32 %v1400, %v1500
        %v1505 = vadd.f32 %v1401, %v1501
        %s1506 = sld [smem:[#allocation4 + $0x56]]
        %v1507 = vstv %s1506
        %v1508 = vmul.f32 %v1507, %v1452
        %v1509 = vmul.f32 %v1507, %v1453
        %v1510 = vmul.f32 %v1507, %v1454
        %v1511 = vmul.f32 %v1507, %v1455
        %v1512 = vadd.f32 %v1408, %v1508
        %v1513 = vadd.f32 %v1409, %v1509
        %v1514 = vadd.f32 %v1410, %v1510
        %v1515 = vadd.f32 %v1411, %v1511
        %s1516 = sld [smem:[#allocation4 + $0x57]]
        %v1517 = vstv %s1516
        %v1518 = vmul.f32 %v1517, %v1452
        %v1519 = vmul.f32 %v1517, %v1453
        %v1520 = vmul.f32 %v1517, %v1454
        %v1521 = vmul.f32 %v1517, %v1455
        %v1522 = vadd.f32 %v1418, %v1518
        %v1523 = vadd.f32 %v1419, %v1519
        %v1524 = vadd.f32 %v1420, %v1520
        %v1525 = vadd.f32 %v1421, %v1521
        %s1526 = sld [smem:[#allocation4 + $0x58]]
        %v1527 = vstv %s1526
        %v1528 = vmul.f32 %v1527, %v1452
        %v1529 = vmul.f32 %v1527, %v1453
        %v1530 = vmul.f32 %v1527, %v1454
        %v1531 = vmul.f32 %v1527, %v1455
        %v1532 = vadd.f32 %v1428, %v1528
        %v1533 = vadd.f32 %v1429, %v1529
        %v1534 = vadd.f32 %v1430, %v1530
        %v1535 = vadd.f32 %v1431, %v1531
        %s1536 = sld [smem:[#allocation4 + $0x59]]
        %v1537 = vstv %s1536
        %v1538 = vmul.f32 %v1537, %v1452
        %v1539 = vmul.f32 %v1537, %v1453
        %v1540 = vmul.f32 %v1537, %v1454
        %v1541 = vmul.f32 %v1537, %v1455
        %v1542 = vadd.f32 %v1438, %v1538
        %v1543 = vadd.f32 %v1439, %v1539
        %v1544 = vadd.f32 %v1440, %v1540
        %v1545 = vadd.f32 %v1441, %v1541
        %s1546 = scalar_lea.vmem %s492, 320 [#allocation2]
        %v1547 = vld [vmem:[%s1546] sm:$0x3f]
        %v1548 = vld [vmem:[%s1546 + $0x8] sm:$0x3f]
        %v1549 = vld [vmem:[%s1546 + $0x10] sm:$0x3f]
        %v1550 = vld [vmem:[%s1546 + $0x18] sm:$0x3f]
        %s1551 = scalar_lea.vmem %s499, 320 [#allocation3]
        %v1552 = vld [vmem:[%s1551] sm:$0x3f]
        %v1553 = vld [vmem:[%s1551 + $0x8] sm:$0x3f]
        %v1554 = vld [vmem:[%s1551 + $0x10] sm:$0x3f]
        %v1555 = vld [vmem:[%s1551 + $0x18] sm:$0x3f]
        %v1556 = vmul.f32 %v1547, %v1552
        %v1557 = vmul.f32 %v1548, %v1553
        %v1558 = vmul.f32 %v1549, %v1554
        %v1559 = vmul.f32 %v1550, %v1555
        %s1560 = sld [smem:[#allocation4 + $0x5a]]
        %v1561 = vstv %s1560
        %v1562 = vmul.f32 %v1561, %v1556
        %v1563 = vmul.f32 %v1561, %v1557
        %v1564 = vmul.f32 %v1561, %v1558
        %v1565 = vmul.f32 %v1561, %v1559
        %v1566 = vadd.f32 %v1462, %v1562
        %v1567 = vadd.f32 %v1463, %v1563
        %v1568 = vadd.f32 %v1464, %v1564
        %v1569 = vadd.f32 %v1465, %v1565
        %s1570 = sld [smem:[#allocation4 + $0x5b]]
        %v1571 = vstv %s1570
        %v1572 = vmul.f32 %v1571, %v1556
        %v1573 = vmul.f32 %v1571, %v1557
        %v1574 = vmul.f32 %v1571, %v1558
        %v1575 = vmul.f32 %v1571, %v1559
        %v1576 = vadd.f32 %v1472, %v1572
        %v1577 = vadd.f32 %v1473, %v1573
        %v1578 = vadd.f32 %v1474, %v1574
        %v1579 = vadd.f32 %v1475, %v1575
        %s1580 = sld [smem:[#allocation4 + $0x5c]]
        %v1581 = vstv %s1580
        %v1582 = vmul.f32 %v1581, %v1556
        %v1583 = vmul.f32 %v1581, %v1557
        %v1584 = vmul.f32 %v1581, %v1558
        %v1585 = vmul.f32 %v1581, %v1559
        %v1586 = vadd.f32 %v1482, %v1582
        %v1587 = vadd.f32 %v1483, %v1583
        %v1588 = vadd.f32 %v1484, %v1584
        %v1589 = vadd.f32 %v1485, %v1585
        %s1590 = sld [smem:[#allocation4 + $0x5d]]
        %v1591 = vstv %s1590
        %v1592 = vmul.f32 %v1591, %v1556
        %v1593 = vmul.f32 %v1591, %v1557
        %v1594 = vmul.f32 %v1591, %v1558
        %v1595 = vmul.f32 %v1591, %v1559
        %v1596 = vadd.f32 %v1492, %v1592
        %v1597 = vadd.f32 %v1493, %v1593
        %v1598 = vadd.f32 %v1494, %v1594
        %v1599 = vadd.f32 %v1495, %v1595
        %s1600 = sld [smem:[#allocation4 + $0x5e]]
        %v1601 = vstv %s1600
        %v1602 = vmul.f32 %v1601, %v1556
        %v1603 = vmul.f32 %v1601, %v1557
        %v1604 = vmul.f32 %v1601, %v1558
        %v1605 = vmul.f32 %v1601, %v1559
        %v1606 = vadd.f32 %v1502, %v1602
        %v1607 = vadd.f32 %v1503, %v1603
        %v1608 = vadd.f32 %v1504, %v1604
        %v1609 = vadd.f32 %v1505, %v1605
        %s1610 = sld [smem:[#allocation4 + $0x5f]]
        %v1611 = vstv %s1610
        %v1612 = vmul.f32 %v1611, %v1556
        %v1613 = vmul.f32 %v1611, %v1557
        %v1614 = vmul.f32 %v1611, %v1558
        %v1615 = vmul.f32 %v1611, %v1559
        %v1616 = vadd.f32 %v1512, %v1612
        %v1617 = vadd.f32 %v1513, %v1613
        %v1618 = vadd.f32 %v1514, %v1614
        %v1619 = vadd.f32 %v1515, %v1615
        %s1620 = sld [smem:[#allocation4 + $0x60]]
        %v1621 = vstv %s1620
        %v1622 = vmul.f32 %v1621, %v1556
        %v1623 = vmul.f32 %v1621, %v1557
        %v1624 = vmul.f32 %v1621, %v1558
        %v1625 = vmul.f32 %v1621, %v1559
        %v1626 = vadd.f32 %v1522, %v1622
        %v1627 = vadd.f32 %v1523, %v1623
        %v1628 = vadd.f32 %v1524, %v1624
        %v1629 = vadd.f32 %v1525, %v1625
        %s1630 = sld [smem:[#allocation4 + $0x61]]
        %v1631 = vstv %s1630
        %v1632 = vmul.f32 %v1631, %v1556
        %v1633 = vmul.f32 %v1631, %v1557
        %v1634 = vmul.f32 %v1631, %v1558
        %v1635 = vmul.f32 %v1631, %v1559
        %v1636 = vadd.f32 %v1532, %v1632
        %v1637 = vadd.f32 %v1533, %v1633
        %v1638 = vadd.f32 %v1534, %v1634
        %v1639 = vadd.f32 %v1535, %v1635
        %s1640 = sld [smem:[#allocation4 + $0x62]]
        %v1641 = vstv %s1640
        %v1642 = vmul.f32 %v1641, %v1556
        %v1643 = vmul.f32 %v1641, %v1557
        %v1644 = vmul.f32 %v1641, %v1558
        %v1645 = vmul.f32 %v1641, %v1559
        %v1646 = vadd.f32 %v1542, %v1642
        %v1647 = vadd.f32 %v1543, %v1643
        %v1648 = vadd.f32 %v1544, %v1644
        %v1649 = vadd.f32 %v1545, %v1645
        %s1650 = scalar_lea.vmem %s492, 352 [#allocation2]
        %v1651 = vld [vmem:[%s1650] sm:$0x3f]
        %v1652 = vld [vmem:[%s1650 + $0x8] sm:$0x3f]
        %v1653 = vld [vmem:[%s1650 + $0x10] sm:$0x3f]
        %v1654 = vld [vmem:[%s1650 + $0x18] sm:$0x3f]
        %s1655 = scalar_lea.vmem %s499, 352 [#allocation3]
        %v1656 = vld [vmem:[%s1655] sm:$0x3f]
        %v1657 = vld [vmem:[%s1655 + $0x8] sm:$0x3f]
        %v1658 = vld [vmem:[%s1655 + $0x10] sm:$0x3f]
        %v1659 = vld [vmem:[%s1655 + $0x18] sm:$0x3f]
        %v1660 = vmul.f32 %v1651, %v1656
        %v1661 = vmul.f32 %v1652, %v1657
        %v1662 = vmul.f32 %v1653, %v1658
        %v1663 = vmul.f32 %v1654, %v1659
        %s1664 = sld [smem:[#allocation4 + $0x63]]
        %v1665 = vstv %s1664
        %v1666 = vmul.f32 %v1665, %v1660
        %v1667 = vmul.f32 %v1665, %v1661
        %v1668 = vmul.f32 %v1665, %v1662
        %v1669 = vmul.f32 %v1665, %v1663
        %v1670 = vadd.f32 %v1566, %v1666
        %v1671 = vadd.f32 %v1567, %v1667
        %v1672 = vadd.f32 %v1568, %v1668
        %v1673 = vadd.f32 %v1569, %v1669
        %s1674 = sld [smem:[#allocation4 + $0x64]]
        %v1675 = vstv %s1674
        %v1676 = vmul.f32 %v1675, %v1660
        %v1677 = vmul.f32 %v1675, %v1661
        %v1678 = vmul.f32 %v1675, %v1662
        %v1679 = vmul.f32 %v1675, %v1663
        %v1680 = vadd.f32 %v1576, %v1676
        %v1681 = vadd.f32 %v1577, %v1677
        %v1682 = vadd.f32 %v1578, %v1678
        %v1683 = vadd.f32 %v1579, %v1679
        %s1684 = sld [smem:[#allocation4 + $0x65]]
        %v1685 = vstv %s1684
        %v1686 = vmul.f32 %v1685, %v1660
        %v1687 = vmul.f32 %v1685, %v1661
        %v1688 = vmul.f32 %v1685, %v1662
        %v1689 = vmul.f32 %v1685, %v1663
        %v1690 = vadd.f32 %v1586, %v1686
        %v1691 = vadd.f32 %v1587, %v1687
        %v1692 = vadd.f32 %v1588, %v1688
        %v1693 = vadd.f32 %v1589, %v1689
        %s1694 = sld [smem:[#allocation4 + $0x66]]
        %v1695 = vstv %s1694
        %v1696 = vmul.f32 %v1695, %v1660
        %v1697 = vmul.f32 %v1695, %v1661
        %v1698 = vmul.f32 %v1695, %v1662
        %v1699 = vmul.f32 %v1695, %v1663
        %v1700 = vadd.f32 %v1596, %v1696
        %v1701 = vadd.f32 %v1597, %v1697
        %v1702 = vadd.f32 %v1598, %v1698
        %v1703 = vadd.f32 %v1599, %v1699
        %s1704 = sld [smem:[#allocation4 + $0x67]]
        %v1705 = vstv %s1704
        %v1706 = vmul.f32 %v1705, %v1660
        %v1707 = vmul.f32 %v1705, %v1661
        %v1708 = vmul.f32 %v1705, %v1662
        %v1709 = vmul.f32 %v1705, %v1663
        %v1710 = vadd.f32 %v1606, %v1706
        %v1711 = vadd.f32 %v1607, %v1707
        %v1712 = vadd.f32 %v1608, %v1708
        %v1713 = vadd.f32 %v1609, %v1709
        %s1714 = sld [smem:[#allocation4 + $0x68]]
        %v1715 = vstv %s1714
        %v1716 = vmul.f32 %v1715, %v1660
        %v1717 = vmul.f32 %v1715, %v1661
        %v1718 = vmul.f32 %v1715, %v1662
        %v1719 = vmul.f32 %v1715, %v1663
        %v1720 = vadd.f32 %v1616, %v1716
        %v1721 = vadd.f32 %v1617, %v1717
        %v1722 = vadd.f32 %v1618, %v1718
        %v1723 = vadd.f32 %v1619, %v1719
        %s1724 = sld [smem:[#allocation4 + $0x69]]
        %v1725 = vstv %s1724
        %v1726 = vmul.f32 %v1725, %v1660
        %v1727 = vmul.f32 %v1725, %v1661
        %v1728 = vmul.f32 %v1725, %v1662
        %v1729 = vmul.f32 %v1725, %v1663
        %v1730 = vadd.f32 %v1626, %v1726
        %v1731 = vadd.f32 %v1627, %v1727
        %v1732 = vadd.f32 %v1628, %v1728
        %v1733 = vadd.f32 %v1629, %v1729
        %s1734 = sld [smem:[#allocation4 + $0x6a]]
        %v1735 = vstv %s1734
        %v1736 = vmul.f32 %v1735, %v1660
        %v1737 = vmul.f32 %v1735, %v1661
        %v1738 = vmul.f32 %v1735, %v1662
        %v1739 = vmul.f32 %v1735, %v1663
        %v1740 = vadd.f32 %v1636, %v1736
        %v1741 = vadd.f32 %v1637, %v1737
        %v1742 = vadd.f32 %v1638, %v1738
        %v1743 = vadd.f32 %v1639, %v1739
        %s1744 = sld [smem:[#allocation4 + $0x6b]]
        %v1745 = vstv %s1744
        %v1746 = vmul.f32 %v1745, %v1660
        %v1747 = vmul.f32 %v1745, %v1661
        %v1748 = vmul.f32 %v1745, %v1662
        %v1749 = vmul.f32 %v1745, %v1663
        %v1750 = vadd.f32 %v1646, %v1746
        %v1751 = vadd.f32 %v1647, %v1747
        %v1752 = vadd.f32 %v1648, %v1748
        %v1753 = vadd.f32 %v1649, %v1749
        %s1754 = scalar_lea.vmem %s492, 384 [#allocation2]
        %v1755 = vld [vmem:[%s1754] sm:$0x3f]
        %v1756 = vld [vmem:[%s1754 + $0x8] sm:$0x3f]
        %v1757 = vld [vmem:[%s1754 + $0x10] sm:$0x3f]
        %v1758 = vld [vmem:[%s1754 + $0x18] sm:$0x3f]
        %s1759 = scalar_lea.vmem %s499, 384 [#allocation3]
        %v1760 = vld [vmem:[%s1759] sm:$0x3f]
        %v1761 = vld [vmem:[%s1759 + $0x8] sm:$0x3f]
        %v1762 = vld [vmem:[%s1759 + $0x10] sm:$0x3f]
        %v1763 = vld [vmem:[%s1759 + $0x18] sm:$0x3f]
        %v1764 = vmul.f32 %v1755, %v1760
        %v1765 = vmul.f32 %v1756, %v1761
        %v1766 = vmul.f32 %v1757, %v1762
        %v1767 = vmul.f32 %v1758, %v1763
        %s1768 = sld [smem:[#allocation4 + $0x6c]]
        %v1769 = vstv %s1768
        %v1770 = vmul.f32 %v1769, %v1764
        %v1771 = vmul.f32 %v1769, %v1765
        %v1772 = vmul.f32 %v1769, %v1766
        %v1773 = vmul.f32 %v1769, %v1767
        %v1774 = vadd.f32 %v1670, %v1770
        %v1775 = vadd.f32 %v1671, %v1771
        %v1776 = vadd.f32 %v1672, %v1772
        %v1777 = vadd.f32 %v1673, %v1773
        %s1778 = sld [smem:[#allocation4 + $0x6d]]
        %v1779 = vstv %s1778
        %v1780 = vmul.f32 %v1779, %v1764
        %v1781 = vmul.f32 %v1779, %v1765
        %v1782 = vmul.f32 %v1779, %v1766
        %v1783 = vmul.f32 %v1779, %v1767
        %v1784 = vadd.f32 %v1680, %v1780
        %v1785 = vadd.f32 %v1681, %v1781
        %v1786 = vadd.f32 %v1682, %v1782
        %v1787 = vadd.f32 %v1683, %v1783
        %s1788 = sld [smem:[#allocation4 + $0x6e]]
        %v1789 = vstv %s1788
        %v1790 = vmul.f32 %v1789, %v1764
        %v1791 = vmul.f32 %v1789, %v1765
        %v1792 = vmul.f32 %v1789, %v1766
        %v1793 = vmul.f32 %v1789, %v1767
        %v1794 = vadd.f32 %v1690, %v1790
        %v1795 = vadd.f32 %v1691, %v1791
        %v1796 = vadd.f32 %v1692, %v1792
        %v1797 = vadd.f32 %v1693, %v1793
        %s1798 = sld [smem:[#allocation4 + $0x6f]]
        %v1799 = vstv %s1798
        %v1800 = vmul.f32 %v1799, %v1764
        %v1801 = vmul.f32 %v1799, %v1765
        %v1802 = vmul.f32 %v1799, %v1766
        %v1803 = vmul.f32 %v1799, %v1767
        %v1804 = vadd.f32 %v1700, %v1800
        %v1805 = vadd.f32 %v1701, %v1801
        %v1806 = vadd.f32 %v1702, %v1802
        %v1807 = vadd.f32 %v1703, %v1803
        %s1808 = sld [smem:[#allocation4 + $0x70]]
        %v1809 = vstv %s1808
        %v1810 = vmul.f32 %v1809, %v1764
        %v1811 = vmul.f32 %v1809, %v1765
        %v1812 = vmul.f32 %v1809, %v1766
        %v1813 = vmul.f32 %v1809, %v1767
        %v1814 = vadd.f32 %v1710, %v1810
        %v1815 = vadd.f32 %v1711, %v1811
        %v1816 = vadd.f32 %v1712, %v1812
        %v1817 = vadd.f32 %v1713, %v1813
        %s1818 = sld [smem:[#allocation4 + $0x71]]
        %v1819 = vstv %s1818
        %v1820 = vmul.f32 %v1819, %v1764
        %v1821 = vmul.f32 %v1819, %v1765
        %v1822 = vmul.f32 %v1819, %v1766
        %v1823 = vmul.f32 %v1819, %v1767
        %v1824 = vadd.f32 %v1720, %v1820
        %v1825 = vadd.f32 %v1721, %v1821
        %v1826 = vadd.f32 %v1722, %v1822
        %v1827 = vadd.f32 %v1723, %v1823
        %s1828 = sld [smem:[#allocation4 + $0x72]]
        %v1829 = vstv %s1828
        %v1830 = vmul.f32 %v1829, %v1764
        %v1831 = vmul.f32 %v1829, %v1765
        %v1832 = vmul.f32 %v1829, %v1766
        %v1833 = vmul.f32 %v1829, %v1767
        %v1834 = vadd.f32 %v1730, %v1830
        %v1835 = vadd.f32 %v1731, %v1831
        %v1836 = vadd.f32 %v1732, %v1832
        %v1837 = vadd.f32 %v1733, %v1833
        %s1838 = sld [smem:[#allocation4 + $0x73]]
        %v1839 = vstv %s1838
        %v1840 = vmul.f32 %v1839, %v1764
        %v1841 = vmul.f32 %v1839, %v1765
        %v1842 = vmul.f32 %v1839, %v1766
        %v1843 = vmul.f32 %v1839, %v1767
        %v1844 = vadd.f32 %v1740, %v1840
        %v1845 = vadd.f32 %v1741, %v1841
        %v1846 = vadd.f32 %v1742, %v1842
        %v1847 = vadd.f32 %v1743, %v1843
        %s1848 = sld [smem:[#allocation4 + $0x74]]
        %v1849 = vstv %s1848
        %v1850 = vmul.f32 %v1849, %v1764
        %v1851 = vmul.f32 %v1849, %v1765
        %v1852 = vmul.f32 %v1849, %v1766
        %v1853 = vmul.f32 %v1849, %v1767
        %v1854 = vadd.f32 %v1750, %v1850
        %v1855 = vadd.f32 %v1751, %v1851
        %v1856 = vadd.f32 %v1752, %v1852
        %v1857 = vadd.f32 %v1753, %v1853
        %s1858 = scalar_lea.vmem %s492, 416 [#allocation2]
        %v1859 = vld [vmem:[%s1858] sm:$0x3f]
        %v1860 = vld [vmem:[%s1858 + $0x8] sm:$0x3f]
        %v1861 = vld [vmem:[%s1858 + $0x10] sm:$0x3f]
        %v1862 = vld [vmem:[%s1858 + $0x18] sm:$0x3f]
        %s1863 = scalar_lea.vmem %s499, 416 [#allocation3]
        %v1864 = vld [vmem:[%s1863] sm:$0x3f]
        %v1865 = vld [vmem:[%s1863 + $0x8] sm:$0x3f]
        %v1866 = vld [vmem:[%s1863 + $0x10] sm:$0x3f]
        %v1867 = vld [vmem:[%s1863 + $0x18] sm:$0x3f]
        %v1868 = vmul.f32 %v1859, %v1864
        %v1869 = vmul.f32 %v1860, %v1865
        %v1870 = vmul.f32 %v1861, %v1866
        %v1871 = vmul.f32 %v1862, %v1867
        %s1872 = sld [smem:[#allocation4 + $0x75]]
        %v1873 = vstv %s1872
        %v1874 = vmul.f32 %v1873, %v1868
        %v1875 = vmul.f32 %v1873, %v1869
        %v1876 = vmul.f32 %v1873, %v1870
        %v1877 = vmul.f32 %v1873, %v1871
        %v1878 = vadd.f32 %v1774, %v1874
        %v1879 = vadd.f32 %v1775, %v1875
        %v1880 = vadd.f32 %v1776, %v1876
        %v1881 = vadd.f32 %v1777, %v1877
        %s1882 = sld [smem:[#allocation4 + $0x76]]
        %v1883 = vstv %s1882
        %v1884 = vmul.f32 %v1883, %v1868
        %v1885 = vmul.f32 %v1883, %v1869
        %v1886 = vmul.f32 %v1883, %v1870
        %v1887 = vmul.f32 %v1883, %v1871
        %v1888 = vadd.f32 %v1784, %v1884
        %v1889 = vadd.f32 %v1785, %v1885
        %v1890 = vadd.f32 %v1786, %v1886
        %v1891 = vadd.f32 %v1787, %v1887
        %s1892 = sld [smem:[#allocation4 + $0x77]]
        %v1893 = vstv %s1892
        %v1894 = vmul.f32 %v1893, %v1868
        %v1895 = vmul.f32 %v1893, %v1869
        %v1896 = vmul.f32 %v1893, %v1870
        %v1897 = vmul.f32 %v1893, %v1871
        %v1898 = vadd.f32 %v1794, %v1894
        %v1899 = vadd.f32 %v1795, %v1895
        %v1900 = vadd.f32 %v1796, %v1896
        %v1901 = vadd.f32 %v1797, %v1897
        %s1902 = sld [smem:[#allocation4 + $0x78]]
        %v1903 = vstv %s1902
        %v1904 = vmul.f32 %v1903, %v1868
        %v1905 = vmul.f32 %v1903, %v1869
        %v1906 = vmul.f32 %v1903, %v1870
        %v1907 = vmul.f32 %v1903, %v1871
        %v1908 = vadd.f32 %v1804, %v1904
        %v1909 = vadd.f32 %v1805, %v1905
        %v1910 = vadd.f32 %v1806, %v1906
        %v1911 = vadd.f32 %v1807, %v1907
        %s1912 = sld [smem:[#allocation4 + $0x79]]
        %v1913 = vstv %s1912
        %v1914 = vmul.f32 %v1913, %v1868
        %v1915 = vmul.f32 %v1913, %v1869
        %v1916 = vmul.f32 %v1913, %v1870
        %v1917 = vmul.f32 %v1913, %v1871
        %v1918 = vadd.f32 %v1814, %v1914
        %v1919 = vadd.f32 %v1815, %v1915
        %v1920 = vadd.f32 %v1816, %v1916
        %v1921 = vadd.f32 %v1817, %v1917
        %s1922 = sld [smem:[#allocation4 + $0x7a]]
        %v1923 = vstv %s1922
        %v1924 = vmul.f32 %v1923, %v1868
        %v1925 = vmul.f32 %v1923, %v1869
        %v1926 = vmul.f32 %v1923, %v1870
        %v1927 = vmul.f32 %v1923, %v1871
        %v1928 = vadd.f32 %v1824, %v1924
        %v1929 = vadd.f32 %v1825, %v1925
        %v1930 = vadd.f32 %v1826, %v1926
        %v1931 = vadd.f32 %v1827, %v1927
        %s1932 = sld [smem:[#allocation4 + $0x7b]]
        %v1933 = vstv %s1932
        %v1934 = vmul.f32 %v1933, %v1868
        %v1935 = vmul.f32 %v1933, %v1869
        %v1936 = vmul.f32 %v1933, %v1870
        %v1937 = vmul.f32 %v1933, %v1871
        %v1938 = vadd.f32 %v1834, %v1934
        %v1939 = vadd.f32 %v1835, %v1935
        %v1940 = vadd.f32 %v1836, %v1936
        %v1941 = vadd.f32 %v1837, %v1937
        %s1942 = sld [smem:[#allocation4 + $0x7c]]
        %v1943 = vstv %s1942
        %v1944 = vmul.f32 %v1943, %v1868
        %v1945 = vmul.f32 %v1943, %v1869
        %v1946 = vmul.f32 %v1943, %v1870
        %v1947 = vmul.f32 %v1943, %v1871
        %v1948 = vadd.f32 %v1844, %v1944
        %v1949 = vadd.f32 %v1845, %v1945
        %v1950 = vadd.f32 %v1846, %v1946
        %v1951 = vadd.f32 %v1847, %v1947
        %s1952 = sld [smem:[#allocation4 + $0x7d]]
        %v1953 = vstv %s1952
        %v1954 = vmul.f32 %v1953, %v1868
        %v1955 = vmul.f32 %v1953, %v1869
        %v1956 = vmul.f32 %v1953, %v1870
        %v1957 = vmul.f32 %v1953, %v1871
        %v1958 = vadd.f32 %v1854, %v1954
        %v1959 = vadd.f32 %v1855, %v1955
        %v1960 = vadd.f32 %v1856, %v1956
        %v1961 = vadd.f32 %v1857, %v1957
        %s1962 = scalar_lea.vmem %s492, 448 [#allocation2]
        %v1963 = vld [vmem:[%s1962] sm:$0x3f]
        %v1964 = vld [vmem:[%s1962 + $0x8] sm:$0x3f]
        %v1965 = vld [vmem:[%s1962 + $0x10] sm:$0x3f]
        %v1966 = vld [vmem:[%s1962 + $0x18] sm:$0x3f]
        %s1967 = scalar_lea.vmem %s499, 448 [#allocation3]
        %v1968 = vld [vmem:[%s1967] sm:$0x3f]
        %v1969 = vld [vmem:[%s1967 + $0x8] sm:$0x3f]
        %v1970 = vld [vmem:[%s1967 + $0x10] sm:$0x3f]
        %v1971 = vld [vmem:[%s1967 + $0x18] sm:$0x3f]
        %v1972 = vmul.f32 %v1963, %v1968
        %v1973 = vmul.f32 %v1964, %v1969
        %v1974 = vmul.f32 %v1965, %v1970
        %v1975 = vmul.f32 %v1966, %v1971
        %s1976 = sld [smem:[#allocation4 + $0x7e]]
        %v1977 = vstv %s1976
        %v1978 = vmul.f32 %v1977, %v1972
        %v1979 = vmul.f32 %v1977, %v1973
        %v1980 = vmul.f32 %v1977, %v1974
        %v1981 = vmul.f32 %v1977, %v1975
        %v1982 = vadd.f32 %v1878, %v1978
        %v1983 = vadd.f32 %v1879, %v1979
        %v1984 = vadd.f32 %v1880, %v1980
        %v1985 = vadd.f32 %v1881, %v1981
        %s1986 = sld [smem:[#allocation4 + $0x7f]]
        %v1987 = vstv %s1986
        %v1988 = vmul.f32 %v1987, %v1972
        %v1989 = vmul.f32 %v1987, %v1973
        %v1990 = vmul.f32 %v1987, %v1974
        %v1991 = vmul.f32 %v1987, %v1975
        %v1992 = vadd.f32 %v1888, %v1988
        %v1993 = vadd.f32 %v1889, %v1989
        %v1994 = vadd.f32 %v1890, %v1990
        %v1995 = vadd.f32 %v1891, %v1991
        %s1996 = sld [smem:[#allocation4 + $0x80]]
        %v1997 = vstv %s1996
        %v1998 = vmul.f32 %v1997, %v1972
        %v1999 = vmul.f32 %v1997, %v1973
        %v2000 = vmul.f32 %v1997, %v1974
        %v2001 = vmul.f32 %v1997, %v1975
        %v2002 = vadd.f32 %v1898, %v1998
        %v2003 = vadd.f32 %v1899, %v1999
        %v2004 = vadd.f32 %v1900, %v2000
        %v2005 = vadd.f32 %v1901, %v2001
        %s2006 = sld [smem:[#allocation4 + $0x81]]
        %v2007 = vstv %s2006
        %v2008 = vmul.f32 %v2007, %v1972
        %v2009 = vmul.f32 %v2007, %v1973
        %v2010 = vmul.f32 %v2007, %v1974
        %v2011 = vmul.f32 %v2007, %v1975
        %v2012 = vadd.f32 %v1908, %v2008
        %v2013 = vadd.f32 %v1909, %v2009
        %v2014 = vadd.f32 %v1910, %v2010
        %v2015 = vadd.f32 %v1911, %v2011
        %s2016 = sld [smem:[#allocation4 + $0x82]]
        %v2017 = vstv %s2016
        %v2018 = vmul.f32 %v2017, %v1972
        %v2019 = vmul.f32 %v2017, %v1973
        %v2020 = vmul.f32 %v2017, %v1974
        %v2021 = vmul.f32 %v2017, %v1975
        %v2022 = vadd.f32 %v1918, %v2018
        %v2023 = vadd.f32 %v1919, %v2019
        %v2024 = vadd.f32 %v1920, %v2020
        %v2025 = vadd.f32 %v1921, %v2021
        %s2026 = sld [smem:[#allocation4 + $0x83]]
        %v2027 = vstv %s2026
        %v2028 = vmul.f32 %v2027, %v1972
        %v2029 = vmul.f32 %v2027, %v1973
        %v2030 = vmul.f32 %v2027, %v1974
        %v2031 = vmul.f32 %v2027, %v1975
        %v2032 = vadd.f32 %v1928, %v2028
        %v2033 = vadd.f32 %v1929, %v2029
        %v2034 = vadd.f32 %v1930, %v2030
        %v2035 = vadd.f32 %v1931, %v2031
        %s2036 = sld [smem:[#allocation4 + $0x84]]
        %v2037 = vstv %s2036
        %v2038 = vmul.f32 %v2037, %v1972
        %v2039 = vmul.f32 %v2037, %v1973
        %v2040 = vmul.f32 %v2037, %v1974
        %v2041 = vmul.f32 %v2037, %v1975
        %v2042 = vadd.f32 %v1938, %v2038
        %v2043 = vadd.f32 %v1939, %v2039
        %v2044 = vadd.f32 %v1940, %v2040
        %v2045 = vadd.f32 %v1941, %v2041
        %s2046 = sld [smem:[#allocation4 + $0x85]]
        %v2047 = vstv %s2046
        %v2048 = vmul.f32 %v2047, %v1972
        %v2049 = vmul.f32 %v2047, %v1973
        %v2050 = vmul.f32 %v2047, %v1974
        %v2051 = vmul.f32 %v2047, %v1975
        %v2052 = vadd.f32 %v1948, %v2048
        %v2053 = vadd.f32 %v1949, %v2049
        %v2054 = vadd.f32 %v1950, %v2050
        %v2055 = vadd.f32 %v1951, %v2051
        %s2056 = sld [smem:[#allocation4 + $0x86]]
        %v2057 = vstv %s2056
        %v2058 = vmul.f32 %v2057, %v1972
        %v2059 = vmul.f32 %v2057, %v1973
        %v2060 = vmul.f32 %v2057, %v1974
        %v2061 = vmul.f32 %v2057, %v1975
        %v2062 = vadd.f32 %v1958, %v2058
        %v2063 = vadd.f32 %v1959, %v2059
        %v2064 = vadd.f32 %v1960, %v2060
        %v2065 = vadd.f32 %v1961, %v2061
        %s2066 = scalar_lea.vmem %s492, 480 [#allocation2]
        %v2067 = vld [vmem:[%s2066] sm:$0x3f]
        %v2068 = vld [vmem:[%s2066 + $0x8] sm:$0x3f]
        %v2069 = vld [vmem:[%s2066 + $0x10] sm:$0x3f]
        %v2070 = vld [vmem:[%s2066 + $0x18] sm:$0x3f]
        %s2071 = scalar_lea.vmem %s499, 480 [#allocation3]
        %v2072 = vld [vmem:[%s2071] sm:$0x3f]
        %v2073 = vld [vmem:[%s2071 + $0x8] sm:$0x3f]
        %v2074 = vld [vmem:[%s2071 + $0x10] sm:$0x3f]
        %v2075 = vld [vmem:[%s2071 + $0x18] sm:$0x3f]
        %v2076 = vmul.f32 %v2067, %v2072
        %v2077 = vmul.f32 %v2068, %v2073
        %v2078 = vmul.f32 %v2069, %v2074
        %v2079 = vmul.f32 %v2070, %v2075
        %s2080 = sld [smem:[#allocation4 + $0x87]]
        %v2081 = vstv %s2080
        %v2082 = vmul.f32 %v2081, %v2076
        %v2083 = vmul.f32 %v2081, %v2077
        %v2084 = vmul.f32 %v2081, %v2078
        %v2085 = vmul.f32 %v2081, %v2079
        %v2086 = vadd.f32 %v1982, %v2082
        %v2087 = vadd.f32 %v1983, %v2083
        %v2088 = vadd.f32 %v1984, %v2084
        %v2089 = vadd.f32 %v1985, %v2085
        %s2090 = sld [smem:[#allocation4 + $0x88]]
        %v2091 = vstv %s2090
        %v2092 = vmul.f32 %v2091, %v2076
        %v2093 = vmul.f32 %v2091, %v2077
        %v2094 = vmul.f32 %v2091, %v2078
        %v2095 = vmul.f32 %v2091, %v2079
        %v2096 = vadd.f32 %v1992, %v2092
        %v2097 = vadd.f32 %v1993, %v2093
        %v2098 = vadd.f32 %v1994, %v2094
        %v2099 = vadd.f32 %v1995, %v2095
        %s2100 = sld [smem:[#allocation4 + $0x89]]
        %v2101 = vstv %s2100
        %v2102 = vmul.f32 %v2101, %v2076
        %v2103 = vmul.f32 %v2101, %v2077
        %v2104 = vmul.f32 %v2101, %v2078
        %v2105 = vmul.f32 %v2101, %v2079
        %v2106 = vadd.f32 %v2002, %v2102
        %v2107 = vadd.f32 %v2003, %v2103
        %v2108 = vadd.f32 %v2004, %v2104
        %v2109 = vadd.f32 %v2005, %v2105
        %s2110 = sld [smem:[#allocation4 + $0x8a]]
        %v2111 = vstv %s2110
        %v2112 = vmul.f32 %v2111, %v2076
        %v2113 = vmul.f32 %v2111, %v2077
        %v2114 = vmul.f32 %v2111, %v2078
        %v2115 = vmul.f32 %v2111, %v2079
        %v2116 = vadd.f32 %v2012, %v2112
        %v2117 = vadd.f32 %v2013, %v2113
        %v2118 = vadd.f32 %v2014, %v2114
        %v2119 = vadd.f32 %v2015, %v2115
        %s2120 = sld [smem:[#allocation4 + $0x8b]]
        %v2121 = vstv %s2120
        %v2122 = vmul.f32 %v2121, %v2076
        %v2123 = vmul.f32 %v2121, %v2077
        %v2124 = vmul.f32 %v2121, %v2078
        %v2125 = vmul.f32 %v2121, %v2079
        %v2126 = vadd.f32 %v2022, %v2122
        %v2127 = vadd.f32 %v2023, %v2123
        %v2128 = vadd.f32 %v2024, %v2124
        %v2129 = vadd.f32 %v2025, %v2125
        %s2130 = sld [smem:[#allocation4 + $0x8c]]
        %v2131 = vstv %s2130
        %v2132 = vmul.f32 %v2131, %v2076
        %v2133 = vmul.f32 %v2131, %v2077
        %v2134 = vmul.f32 %v2131, %v2078
        %v2135 = vmul.f32 %v2131, %v2079
        %v2136 = vadd.f32 %v2032, %v2132
        %v2137 = vadd.f32 %v2033, %v2133
        %v2138 = vadd.f32 %v2034, %v2134
        %v2139 = vadd.f32 %v2035, %v2135
        %s2140 = sld [smem:[#allocation4 + $0x8d]]
        %v2141 = vstv %s2140
        %v2142 = vmul.f32 %v2141, %v2076
        %v2143 = vmul.f32 %v2141, %v2077
        %v2144 = vmul.f32 %v2141, %v2078
        %v2145 = vmul.f32 %v2141, %v2079
        %v2146 = vadd.f32 %v2042, %v2142
        %v2147 = vadd.f32 %v2043, %v2143
        %v2148 = vadd.f32 %v2044, %v2144
        %v2149 = vadd.f32 %v2045, %v2145
        %s2150 = sld [smem:[#allocation4 + $0x8e]]
        %v2151 = vstv %s2150
        %v2152 = vmul.f32 %v2151, %v2076
        %v2153 = vmul.f32 %v2151, %v2077
        %v2154 = vmul.f32 %v2151, %v2078
        %v2155 = vmul.f32 %v2151, %v2079
        %v2156 = vadd.f32 %v2052, %v2152
        %v2157 = vadd.f32 %v2053, %v2153
        %v2158 = vadd.f32 %v2054, %v2154
        %v2159 = vadd.f32 %v2055, %v2155
        %s2160 = sld [smem:[#allocation4 + $0x8f]]
        %v2161 = vstv %s2160
        %v2162 = vmul.f32 %v2161, %v2076
        %v2163 = vmul.f32 %v2161, %v2077
        %v2164 = vmul.f32 %v2161, %v2078
        %v2165 = vmul.f32 %v2161, %v2079
        %v2166 = vadd.f32 %v2062, %v2162
        %v2167 = vadd.f32 %v2063, %v2163
        %v2168 = vadd.f32 %v2064, %v2164
        %v2169 = vadd.f32 %v2065, %v2165
        %s2170 = sld [smem:[#allocation4 + $0x90]]
        %v2171 = vstv %s2170
        %v2172 = vadd.f32 %v2086, %v2171
        %v2173 = vadd.f32 %v2087, %v2171
        %v2174 = vadd.f32 %v2088, %v2171
        %v2175 = vadd.f32 %v2089, %v2171
        %v2176 = vmax.f32 %v2172, 0.0
        %v2177 = vmax.f32 %v2173, 0.0
        %v2178 = vmax.f32 %v2174, 0.0
        %v2179 = vmax.f32 %v2175, 0.0
        %s2180 = sld [smem:[#allocation4 + $0x98]]
        %v2181 = vstv %s2180
        %v2182 = vmul.f32 %v2181, %v2176
        %v2183 = vmul.f32 %v2181, %v2177
        %v2184 = vmul.f32 %v2181, %v2178
        %v2185 = vmul.f32 %v2181, %v2179
        %s2186 = sld [smem:[#allocation4 + $0x91]]
        %v2187 = vstv %s2186
        %v2188 = vadd.f32 %v2096, %v2187
        %v2189 = vadd.f32 %v2097, %v2187
        %v2190 = vadd.f32 %v2098, %v2187
        %v2191 = vadd.f32 %v2099, %v2187
        %v2192 = vmax.f32 %v2188, 0.0
        %v2193 = vmax.f32 %v2189, 0.0
        %v2194 = vmax.f32 %v2190, 0.0
        %v2195 = vmax.f32 %v2191, 0.0
        %s2196 = sld [smem:[#allocation4 + $0x99]]
        %v2197 = vstv %s2196
        %v2198 = vmul.f32 %v2197, %v2192
        %v2199 = vmul.f32 %v2197, %v2193
        %v2200 = vmul.f32 %v2197, %v2194
        %v2201 = vmul.f32 %v2197, %v2195
        %v2202 = vadd.f32 %v2182, %v2198
        %v2203 = vadd.f32 %v2183, %v2199
        %v2204 = vadd.f32 %v2184, %v2200
        %v2205 = vadd.f32 %v2185, %v2201
        %s2206 = sld [smem:[#allocation4 + $0x92]]
        %v2207 = vstv %s2206
        %v2208 = vadd.f32 %v2106, %v2207
        %v2209 = vadd.f32 %v2107, %v2207
        %v2210 = vadd.f32 %v2108, %v2207
        %v2211 = vadd.f32 %v2109, %v2207
        %v2212 = vmax.f32 %v2208, 0.0
        %v2213 = vmax.f32 %v2209, 0.0
        %v2214 = vmax.f32 %v2210, 0.0
        %v2215 = vmax.f32 %v2211, 0.0
        %s2216 = sld [smem:[#allocation4 + $0x9a]]
        %v2217 = vstv %s2216
        %v2218 = vmul.f32 %v2217, %v2212
        %v2219 = vmul.f32 %v2217, %v2213
        %v2220 = vmul.f32 %v2217, %v2214
        %v2221 = vmul.f32 %v2217, %v2215
        %v2222 = vadd.f32 %v2202, %v2218
        %v2223 = vadd.f32 %v2203, %v2219
        %v2224 = vadd.f32 %v2204, %v2220
        %v2225 = vadd.f32 %v2205, %v2221
        %s2226 = sld [smem:[#allocation4 + $0x93]]
        %v2227 = vstv %s2226
        %v2228 = vadd.f32 %v2116, %v2227
        %v2229 = vadd.f32 %v2117, %v2227
        %v2230 = vadd.f32 %v2118, %v2227
        %v2231 = vadd.f32 %v2119, %v2227
        %v2232 = vmax.f32 %v2228, 0.0
        %v2233 = vmax.f32 %v2229, 0.0
        %v2234 = vmax.f32 %v2230, 0.0
        %v2235 = vmax.f32 %v2231, 0.0
        %s2236 = sld [smem:[#allocation4 + $0x9b]]
        %v2237 = vstv %s2236
        %v2238 = vmul.f32 %v2237, %v2232
        %v2239 = vmul.f32 %v2237, %v2233
        %v2240 = vmul.f32 %v2237, %v2234
        %v2241 = vmul.f32 %v2237, %v2235
        %v2242 = vadd.f32 %v2222, %v2238
        %v2243 = vadd.f32 %v2223, %v2239
        %v2244 = vadd.f32 %v2224, %v2240
        %v2245 = vadd.f32 %v2225, %v2241
        %s2246 = sld [smem:[#allocation4 + $0x94]]
        %v2247 = vstv %s2246
        %v2248 = vadd.f32 %v2126, %v2247
        %v2249 = vadd.f32 %v2127, %v2247
        %v2250 = vadd.f32 %v2128, %v2247
        %v2251 = vadd.f32 %v2129, %v2247
        %v2252 = vmax.f32 %v2248, 0.0
        %v2253 = vmax.f32 %v2249, 0.0
        %v2254 = vmax.f32 %v2250, 0.0
        %v2255 = vmax.f32 %v2251, 0.0
        %s2256 = sld [smem:[#allocation4 + $0x9c]]
        %v2257 = vstv %s2256
        %v2258 = vmul.f32 %v2257, %v2252
        %v2259 = vmul.f32 %v2257, %v2253
        %v2260 = vmul.f32 %v2257, %v2254
        %v2261 = vmul.f32 %v2257, %v2255
        %v2262 = vadd.f32 %v2242, %v2258
        %v2263 = vadd.f32 %v2243, %v2259
        %v2264 = vadd.f32 %v2244, %v2260
        %v2265 = vadd.f32 %v2245, %v2261
        %s2266 = sld [smem:[#allocation4 + $0x95]]
        %v2267 = vstv %s2266
        %v2268 = vadd.f32 %v2136, %v2267
        %v2269 = vadd.f32 %v2137, %v2267
        %v2270 = vadd.f32 %v2138, %v2267
        %v2271 = vadd.f32 %v2139, %v2267
        %v2272 = vmax.f32 %v2268, 0.0
        %v2273 = vmax.f32 %v2269, 0.0
        %v2274 = vmax.f32 %v2270, 0.0
        %v2275 = vmax.f32 %v2271, 0.0
        %s2276 = sld [smem:[#allocation4 + $0x9d]]
        %v2277 = vstv %s2276
        %v2278 = vmul.f32 %v2277, %v2272
        %v2279 = vmul.f32 %v2277, %v2273
        %v2280 = vmul.f32 %v2277, %v2274
        %v2281 = vmul.f32 %v2277, %v2275
        %v2282 = vadd.f32 %v2262, %v2278
        %v2283 = vadd.f32 %v2263, %v2279
        %v2284 = vadd.f32 %v2264, %v2280
        %v2285 = vadd.f32 %v2265, %v2281
        %s2286 = sld [smem:[#allocation4 + $0x96]]
        %v2287 = vstv %s2286
        %v2288 = vadd.f32 %v2146, %v2287
        %v2289 = vadd.f32 %v2147, %v2287
        %v2290 = vadd.f32 %v2148, %v2287
        %v2291 = vadd.f32 %v2149, %v2287
        %v2292 = vmax.f32 %v2288, 0.0
        %v2293 = vmax.f32 %v2289, 0.0
        %v2294 = vmax.f32 %v2290, 0.0
        %v2295 = vmax.f32 %v2291, 0.0
        %s2296 = sld [smem:[#allocation4 + $0x9e]]
        %v2297 = vstv %s2296
        %v2298 = vmul.f32 %v2297, %v2292
        %v2299 = vmul.f32 %v2297, %v2293
        %v2300 = vmul.f32 %v2297, %v2294
        %v2301 = vmul.f32 %v2297, %v2295
        %v2302 = vadd.f32 %v2282, %v2298
        %v2303 = vadd.f32 %v2283, %v2299
        %v2304 = vadd.f32 %v2284, %v2300
        %v2305 = vadd.f32 %v2285, %v2301
        %s2306 = sld [smem:[#allocation4 + $0x97]]
        %v2307 = vstv %s2306
        %v2308 = vadd.f32 %v2156, %v2307
        %v2309 = vadd.f32 %v2157, %v2307
        %v2310 = vadd.f32 %v2158, %v2307
        %v2311 = vadd.f32 %v2159, %v2307
        %v2312 = vmax.f32 %v2308, 0.0
        %v2313 = vmax.f32 %v2309, 0.0
        %v2314 = vmax.f32 %v2310, 0.0
        %v2315 = vmax.f32 %v2311, 0.0
        %s2316 = sld [smem:[#allocation4 + $0x9f]]
        %v2317 = vstv %s2316
        %v2318 = vmul.f32 %v2317, %v2312
        %v2319 = vmul.f32 %v2317, %v2313
        %v2320 = vmul.f32 %v2317, %v2314
        %v2321 = vmul.f32 %v2317, %v2315
        %v2322 = vadd.f32 %v2302, %v2318
        %v2323 = vadd.f32 %v2303, %v2319
        %v2324 = vadd.f32 %v2304, %v2320
        %v2325 = vadd.f32 %v2305, %v2321
        %s2326 = sld [smem:[#allocation4 + $0xa0]]
        %v2327 = vstv %s2326
        %v2328 = vadd.f32 %v2322, %v2327
        %v2329 = vadd.f32 %v2323, %v2327
        %v2330 = vadd.f32 %v2324, %v2327
        %v2331 = vadd.f32 %v2325, %v2327
        %vm2332 = vcmask 1045504
        %v2333 = vsel %vm2332, %v2328, -inf
        %v2334 = vrot.slane %v2333, 4
        %v2335 = vmax.f32 %v2333, %v2334
        %v2336 = vrot.slane %v2335, 2
        %v2337 = vmax.f32 %v2335, %v2336
        %v2338 = vrot.slane %v2337, 1
        %v2339 = vmax.f32 %v2337, %v2338
        %v2340 = vsel %vm2332, %v2329, -inf
        %v2341 = vrot.slane %v2340, 4
        %v2342 = vmax.f32 %v2340, %v2341
        %v2343 = vrot.slane %v2342, 2
        %v2344 = vmax.f32 %v2342, %v2343
        %v2345 = vrot.slane %v2344, 1
        %v2346 = vmax.f32 %v2344, %v2345
        %v2347 = vsel %vm2332, %v2330, -inf
        %v2348 = vrot.slane %v2347, 4
        %v2349 = vmax.f32 %v2347, %v2348
        %v2350 = vrot.slane %v2349, 2
        %v2351 = vmax.f32 %v2349, %v2350
        %v2352 = vrot.slane %v2351, 1
        %v2353 = vmax.f32 %v2351, %v2352
        %v2354 = vsel %vm2332, %v2331, -inf
        %v2355 = vrot.slane %v2354, 4
        %v2356 = vmax.f32 %v2354, %v2355
        %v2357 = vrot.slane %v2356, 2
        %v2358 = vmax.f32 %v2356, %v2357
        %v2359 = vrot.slane %v2358, 1
        %v2360 = vmax.f32 %v2358, %v2359
        %v2361 = vsub.f32 %v2328, %v2339
        %v2362 = vsub.f32 %v2329, %v2346
        %v2363 = vsub.f32 %v2330, %v2353
        %v2364 = vsub.f32 %v2331, %v2360
        %v2365 = vmul.f32 %v2361, 1.442695
        %v2366 = vpow.pop %v2365
        %v2367 = vmul.f32 %v2362, 1.442695
        %v2368 = vpow.pop %v2367
        %v2369 = vmul.f32 %v2363, 1.442695
        %v2370 = vpow.pop %v2369
        %v2371 = vmul.f32 %v2364, 1.442695
        %v2372 = vpow.pop %v2371
        %v2373 = vsel %vm2332, %v2366, 0.0
        %v2374 = vrot.slane %v2373, 4
        %v2375 = vadd.f32 %v2373, %v2374
        %v2376 = vrot.slane %v2375, 2
        %v2377 = vadd.f32 %v2375, %v2376
        %v2378 = vrot.slane %v2377, 1
        %v2379 = vadd.f32 %v2377, %v2378
        %v2380 = vsel %vm2332, %v2368, 0.0
        %v2381 = vrot.slane %v2380, 4
        %v2382 = vadd.f32 %v2380, %v2381
        %v2383 = vrot.slane %v2382, 2
        %v2384 = vadd.f32 %v2382, %v2383
        %v2385 = vrot.slane %v2384, 1
        %v2386 = vadd.f32 %v2384, %v2385
        %v2387 = vsel %vm2332, %v2370, 0.0
        %v2388 = vrot.slane %v2387, 4
        %v2389 = vadd.f32 %v2387, %v2388
        %v2390 = vrot.slane %v2389, 2
        %v2391 = vadd.f32 %v2389, %v2390
        %v2392 = vrot.slane %v2391, 1
        %v2393 = vadd.f32 %v2391, %v2392
        %v2394 = vsel %vm2332, %v2372, 0.0
        %v2395 = vrot.slane %v2394, 4
        %v2396 = vadd.f32 %v2394, %v2395
        %v2397 = vrot.slane %v2396, 2
        %v2398 = vadd.f32 %v2396, %v2397
        %v2399 = vrot.slane %v2398, 1
        %v2400 = vadd.f32 %v2398, %v2399
        %v2401 = vmul.f32 %v2366, %v2166
        %v2402 = vmul.f32 %v2368, %v2167
        %v2403 = vmul.f32 %v2370, %v2168
        %v2404 = vmul.f32 %v2372, %v2169
        %v2405 = vsel %vm2332, %v2401, 0.0
        %v2406 = vrot.slane %v2405, 4
        %v2407 = vadd.f32 %v2405, %v2406
        %v2408 = vrot.slane %v2407, 2
        %v2409 = vadd.f32 %v2407, %v2408
        %v2410 = vrot.slane %v2409, 1
        %v2411 = vadd.f32 %v2409, %v2410
        %v2412 = vsel %vm2332, %v2402, 0.0
        %v2413 = vrot.slane %v2412, 4
        %v2414 = vadd.f32 %v2412, %v2413
        %v2415 = vrot.slane %v2414, 2
        %v2416 = vadd.f32 %v2414, %v2415
        %v2417 = vrot.slane %v2416, 1
        %v2418 = vadd.f32 %v2416, %v2417
        %v2419 = vsel %vm2332, %v2403, 0.0
        %v2420 = vrot.slane %v2419, 4
        %v2421 = vadd.f32 %v2419, %v2420
        %v2422 = vrot.slane %v2421, 2
        %v2423 = vadd.f32 %v2421, %v2422
        %v2424 = vrot.slane %v2423, 1
        %v2425 = vadd.f32 %v2423, %v2424
        %v2426 = vsel %vm2332, %v2404, 0.0
        %v2427 = vrot.slane %v2426, 4
        %v2428 = vadd.f32 %v2426, %v2427
        %v2429 = vrot.slane %v2428, 2
        %v2430 = vadd.f32 %v2428, %v2429
        %v2431 = vrot.slane %v2430, 1
        %v2432 = vadd.f32 %v2430, %v2431
        %v2433 = vrcp.pop %v2379
        %v2434 = vmul.f32 %v2379, %v2433
        %v2435 = vsub.f32 1.0, %v2434
        %v2436 = vmul.f32 %v2433, %v2435
        %v2437 = vadd.f32 %v2433, %v2436
        %vm2438 = vweird.f32 %v2379
        %vm2439 = vweird.f32 %v2433
        %vm2440 = vmor %vm2438, %vm2439
        %v2441 = vsel %vm2440, %v2433, %v2437
        %v2442 = vand.u32 2147483647, %v2379
        %vm2443 = vcmp.eq.f32.partialorder %v2442, 8.507059e+37
        %v2444 = vand.u32 %v2379, 2147483648
        %v2445 = vor.u32 1.1754944e-38, %v2444
        %v2446 = vsel %vm2443, %v2445, %v2441
        %v2447 = vmul.f32 %v2411, %v2446
        %v2448 = vrcp.pop %v2386
        %v2449 = vmul.f32 %v2386, %v2448
        %v2450 = vsub.f32 1.0, %v2449
        %v2451 = vmul.f32 %v2448, %v2450
        %v2452 = vadd.f32 %v2448, %v2451
        %vm2453 = vweird.f32 %v2386
        %vm2454 = vweird.f32 %v2448
        %vm2455 = vmor %vm2453, %vm2454
        %v2456 = vsel %vm2455, %v2448, %v2452
        %v2457 = vand.u32 2147483647, %v2386
        %vm2458 = vcmp.eq.f32.partialorder %v2457, 8.507059e+37
        %v2459 = vand.u32 %v2386, 2147483648
        %v2460 = vor.u32 1.1754944e-38, %v2459
        %v2461 = vsel %vm2458, %v2460, %v2456
        %v2462 = vmul.f32 %v2418, %v2461
        %v2463 = vrcp.pop %v2393
        %v2464 = vmul.f32 %v2393, %v2463
        %v2465 = vsub.f32 1.0, %v2464
        %v2466 = vmul.f32 %v2463, %v2465
        %v2467 = vadd.f32 %v2463, %v2466
        %vm2468 = vweird.f32 %v2393
        %vm2469 = vweird.f32 %v2463
        %vm2470 = vmor %vm2468, %vm2469
        %v2471 = vsel %vm2470, %v2463, %v2467
        %v2472 = vand.u32 2147483647, %v2393
        %vm2473 = vcmp.eq.f32.partialorder %v2472, 8.507059e+37
        %v2474 = vand.u32 %v2393, 2147483648
        %v2475 = vor.u32 1.1754944e-38, %v2474
        %v2476 = vsel %vm2473, %v2475, %v2471
        %v2477 = vmul.f32 %v2425, %v2476
        %v2478 = vrcp.pop %v2400
        %v2479 = vmul.f32 %v2400, %v2478
        %v2480 = vsub.f32 1.0, %v2479
        %v2481 = vmul.f32 %v2478, %v2480
        %v2482 = vadd.f32 %v2478, %v2481
        %vm2483 = vweird.f32 %v2400
        %vm2484 = vweird.f32 %v2478
        %vm2485 = vmor %vm2483, %vm2484
        %v2486 = vsel %vm2485, %v2478, %v2482
        %v2487 = vand.u32 2147483647, %v2400
        %vm2488 = vcmp.eq.f32.partialorder %v2487, 8.507059e+37
        %v2489 = vand.u32 %v2400, 2147483648
        %v2490 = vor.u32 1.1754944e-38, %v2489
        %v2491 = vsel %vm2488, %v2490, %v2486
        %v2492 = vmul.f32 %v2432, %v2491
        %v2493 = vld [vmem:[%s541] sm:$0xf]
        %v2498 = vrot.slane %v2462, 7
        %v2499 = vrot.slane %v2477, 6
        %v2500 = vrot.slane %v2492, 5
        %vm2501 = vcmask 1040384
        %v2502 = vsel %vm2501, %v2447, %v2498
        %vm2503 = vcmask 1042434
        %v2504 = vsel %vm2503, %v2499, %v2500
        %vm2505 = vcmask 1041408
        %v2506 = vsel %vm2505, %v2502, %v2504
        %v2508 = vadd.f32 %v2493, %v2506
        %v2509 = vxor.u32 %v2508, 2147483648
        %v2510 = vmul.f32 %v2509, 1.442695
        %v2511 = vpow.pop %v2510
        %v2512 = vadd.f32 %v2511, 1.0
        %v2513 = vrcp.pop %v2512
        %v2514 = vmul.f32 %v2512, %v2513
        %v2515 = vsub.f32 1.0, %v2514
        %v2516 = vmul.f32 %v2513, %v2515
        %v2517 = vadd.f32 %v2513, %v2516
        %vm2518 = vweird.f32 %v2512
        %vm2519 = vweird.f32 %v2513
        %vm2520 = vmor %vm2518, %vm2519
        %v2521 = vsel %vm2520, %v2513, %v2517
        %v2522 = vand.u32 2147483647, %v2512
        %vm2523 = vcmp.eq.f32.partialorder %v2522, 8.507059e+37
        %v2524 = vand.u32 %v2512, 2147483648
        %v2525 = vor.u32 1.1754944e-38, %v2524
        %v2526 = vsel %vm2523, %v2525, %v2521
        %v2527 = vmul.f32 1.0, %v2526
        %v2528 = vlaneseq
        %vm2529 = vcmp.ge.s32.totalorder %v2528, 0
        %vm2530 = vcmp.lt.s32.totalorder %v2528, 512
        %vm2531 = vmand %vm2529, %vm2530
        %2532 = vst.msk [vmem:[%s535] sm:$0xf] %vm2531, %v2527
        %s2533 = sand.u32 %s126, 1
        %s2534 = scalar_lea.sflag [#allocation5], %s2533
        %s2535 = sand.u32 %s126, 1
        %s2536 = smul.addr %s2535, 4
        %s2537 = scalar_lea.vmem [#allocation7], %s2536
        // Predicated region
        $region87: #{tpu_custom_call.1} parent=73 // pred_check
          %p2538 = pneg %p136
        $region88: #{tpu_custom_call.1} parent=73 // pred_check_branch
          %2540 = sbr.rel (%p2538) target = $region90
        $region89: #{tpu_custom_call.1} parent=73 // pred_region
          %s2541 = smul.u32 4, %s19
          %2543 = vsyncadd %s2534, 0
          %s2544 = scalar_lea.hbm %s4, %s2541
          %s2546 = sshll.u32 %s2537, 4
          %s2547 = int_to_ptr.vmem [resolvable:$true] %s2546
          %s2548 = sshll.u32 %s2544, 4
          %s2549 = int_to_ptr.hbm [resolvable:$true] %s2548
          %2551 = dma.vmem_to_hbm [thread:$0]  %s2547, 64, %s2549, %s2534
        $region90: #{tpu_custom_call.1} parent=73 // pred_fallthru
          _
      $region74: #{tpu_custom_call.1} parent=5 // pred_fallthru
        _
      %p2552 = scmp.le.s32.totalorder 2, %s14
      // Predicated region
      $region91: #{tpu_custom_call.1} parent=5 // pred_check
        %p2553 = pneg %p2552
      $region92: #{tpu_custom_call.1} parent=5 // pred_check_branch
        %2555 = sbr.rel (%p2553) target = $region94
      $region93: #{tpu_custom_call.1} parent=5 // pred_region
        %s2556 = ssub.s32 %s14, 2
        // Predicated region
        $region95: #{tpu_custom_call.1} parent=93 // pred_check
          %p2557 = pneg %p142
        $region96: #{tpu_custom_call.1} parent=93 // pred_check_branch
          %2559 = sbr.rel (%p2557) target = $region98
        $region97: #{tpu_custom_call.1} parent=93 // pred_region
          %s2560 = sand.u32 %s127, 1
          %s2561 = scalar_lea.sflag [#allocation5], %s2560
          %s2562 = sand.u32 %s127, 1
          %s2563 = smul.addr %s2562, 4
          %s2564 = scalar_lea.vmem [#allocation7], %s2563
          %2566 = dma.done %s2561, 64
        $region98: #{tpu_custom_call.1} parent=93 // pred_fallthru
          _
      $region94: #{tpu_custom_call.1} parent=5 // pred_fallthru
        _
    $region6: #{tpu_custom_call.1} parent=1 // loop_footer
      %s18 = sadd.s32 1, %s14
    $region7: #{tpu_custom_call.1} parent=1 // loop_footer_branch
      %13 = sbr.rel target = $region3
    $region8: #{tpu_custom_call.1} parent=1 // loop_exit
      _
    %2567 = vsyncpa [#allocation5], 1
    %s2568 = scalar_lea.sflag [#allocation5], 1
    %2569 = vsyncpa %s2568, 1
    %2570 = vsyncpa [#allocation6], 1
    %s2571 = scalar_lea.sflag [#allocation6], 1
    %2572 = vsyncpa %s2571, 1

</llo_original>
